<compile_context>
chip_gen: v7x
topology: tpu7x:2x2x1
jax: 0.10.0
libtpu: 0.0.40
codegen_flags: <defaults>
</compile_context>

<pallas_src>
import functools
import math

import jax
import jax.numpy as jnp
from jax.experimental import pallas as pl
from jax.experimental.pallas import tpu as pltpu


# ----------------------------- kernel helpers -----------------------------

def _erf(x):
    # Abramowitz & Stegun 7.1.26 (|err| < 1.5e-7) — avoids relying on an erf
    # lowering inside Mosaic.  Exact division (review correctness note).
    a1, a2, a3, a4, a5 = (0.254829592, -0.284496736, 1.421413741,
                          -1.453152027, 1.061405429)
    p = 0.3275911
    sgn = jnp.where(x < 0.0, -1.0, 1.0)
    ax = jnp.abs(x)
    t = 1.0 / (1.0 + p * ax)
    poly = ((((a5 * t + a4) * t + a3) * t + a2) * t + a1) * t
    return sgn * (1.0 - poly * jnp.exp(-ax * ax))


def _gelu_exact(x):
    # matches nn.GELU() (erf-based, approximate='none')
    return 0.5 * x * (1.0 + _erf(x * (1.0 / math.sqrt(2.0))))


# -------------------------------- wrapper ---------------------------------

def global_attention_repvit_block(x_nchw, params, *, kernel_size=3, stride=2,
                                  block_b=8, matmul_dtype=jnp.bfloat16):
    B, C, H, W = x_nchw.shape
    K, S = kernel_size, stride
    pad = (K - 1) // 2
    Hp, Wp = H + 2 * pad, W + 2 * pad
    assert Hp % S == 0 and Wp % S == 0, "padded spatial dims must divide stride"
    Ho, Wo = (Hp - K) // S + 1, (Wp - K) // S + 1
    # stride-phase tap-slicing validity (generalization guard, review item)
    assert Hp // S >= Ho + (K - 1) // S and Wp // S >= Wo + (K - 1) // S
    N, KK = Ho * Wo, K * K

    rd = params["sew1"].shape[1]
    hidden = params["wc1"].shape[1]
    oup = params["wc2"].shape[1]

    Bblk = max(1, min(block_b, B))
    Bpad = -(-B // Bblk) * Bblk
    mxd = matmul_dtype

    # --- input: NCHW -> NHWC, pad batch + spatial once, then a *free*
    # contiguous reshape into stride phases:
    #   xq[b, h2, hp, w2, wp*C + c] == x_padded[b, S*h2 + hp, S*w2 + wp, c]
    x_nhwc = jnp.transpose(x_nchw, (0, 2, 3, 1)).astype(jnp.float32)
    xp = jnp.pad(x_nhwc, ((0, Bpad - B), (pad, pad), (pad, pad), (0, 0)))
    xq = xp.reshape(Bpad, Hp // S, S, Wp // S, S * C)

    # --- wrapper-side algebraic folding (tiny XLA ops, fused under jit) ---
    # GlobalAttention: softmax(q k^T, dim=-1) is invariant to per-row
    # constants, so
    #   scores = (y wq + bq)(y wk + bk)^T  ==softmax==  (y (wq wk^T) + bq wk^T) y^T
    # This lifts the contraction depth from cq=C//8 to C and removes the q/k
    # columns from the projection matmul entirely (review item).
    wqk = params["wq"] @ params["wk"].T                              # (C, C)
    bqk = params["bq"] @ params["wk"].T                              # (1, C)
    wav = jnp.concatenate([wqk, params["wv"]], axis=1).astype(mxd)   # (C, 2C)
    bav = jnp.concatenate([bqk, params["bv"]], axis=1)               # (1, 2C)
    # token_mixer[3] (1x1 Conv2d_BN inp->oup) folded into channel-mixer conv 1
    wc1f = (params["wpw"] @ params["wc1"]).astype(mxd)               # (C, hidden)
    bc1f = params["bpw"] @ params["wc1"] + params["bc1"]             # (1, hidden)
    wc2 = params["wc2"].astype(mxd)
    sew1 = params["sew1"].astype(mxd)
    sew2 = params["sew2"].astype(mxd)
    dww = params["dww"]            # (KK, C); element-wise conv path stays f32
    dwb = params["dwb"]
    seb1, seb2, bc2 = params["seb1"], params["seb2"], params["bc2"]

    def kernel(x_ref, dww_ref, dwb_ref, sew1_ref, seb1_ref, sew2_ref,
               seb2_ref, wav_ref, bav_ref, wc1f_ref, bc1f_ref, wc2_ref,
               bc2_ref, out_ref):
        f32 = jnp.float32
        M = Bblk * N

        # --- token_mixer[0]: depthwise KxK stride-S conv + folded BN (VPU) ---
        # Taps are static contiguous slices of the stride-phase block; the
        # per-tap weight table is loaded once (hoisted out of the loop).
        dw_all = dww_ref[...]                                      # (KK, C)
        acc = jnp.zeros((Bblk, Ho, Wo, C), f32)
        for dy in range(K):
            for dx in range(K):
                tap = x_ref[:,
                            dy // S: dy // S + Ho,
                            dy % S,
                            dx // S: dx // S + Wo,
                            (dx % S) * C: (dx % S) * C + C]        # (Bblk,Ho,Wo,C)
                t = dy * K + dx
                w_t = dw_all[t:t + 1, :].reshape(1, 1, 1, C)
                acc = acc + tap * w_t
        y = acc + dwb_ref[...].reshape(1, 1, 1, C)
        # (Bblk,Ho,Wo,C) -> (Bblk,N,C): Wo == 8 is a full f32 sublane tile, so
        # this collapse is layout-friendly.
        yb = y.reshape(Bblk, N, C)

        # --- token_mixer[1]: SqueezeExcite (per image, gate broadcast over N)
        s = jnp.mean(yb, axis=1)                                   # (Bblk, C)
        r = jnp.maximum(
            jnp.dot(s.astype(mxd), sew1_ref[...],
                    preferred_element_type=f32) + seb1_ref[...], 0.0)
        g = jax.nn.sigmoid(
            jnp.dot(r.astype(mxd), sew2_ref[...],
                    preferred_element_type=f32) + seb2_ref[...])
        yb = yb * g.reshape(Bblk, 1, C)

        # --- token_mixer[2]: GlobalAttention (folded Wqk) + residual ---
        # Projections run with M = Bblk*N rows; only the (N,N) mixing is
        # per-image (batched einsum).
        y2 = yb.reshape(M, C)
        proj = jnp.dot(y2.astype(mxd), wav_ref[...],
                       preferred_element_type=f32) + bav_ref[...]  # (M, 2C)
        tb = proj[:, 0:C].reshape(Bblk, N, C)
        vb = proj[:, C:2 * C].reshape(Bblk, N, C)
        scores = jnp.einsum('bnc,bmc->bnm', tb.astype(mxd), yb.astype(mxd),
                            preferred_element_type=f32)            # (Bblk,N,N)
        smax = jnp.max(scores, axis=-1, keepdims=True)
        e = jnp.exp(scores - smax)
        att = e / jnp.sum(e, axis=-1, keepdims=True)
        ab = jnp.einsum('bnm,bmc->bnc', att.astype(mxd), vb.astype(mxd),
                        preferred_element_type=f32)
        yb = ab + yb

        # --- token_mixer[3] (folded) + channel_mixer: 1x1 -> GELU -> 1x1 ---
        y2 = yb.reshape(M, C)
        h = _gelu_exact(
            jnp.dot(y2.astype(mxd), wc1f_ref[...],
                    preferred_element_type=f32) + bc1f_ref[...])   # (M, hidden)
        o = jnp.dot(h.astype(mxd), wc2_ref[...],
                    preferred_element_type=f32) + bc2_ref[...]     # (M, oup)
        out_ref[...] = o.reshape(Bblk, N, oup)

    def _wspec(arr):
        nd = arr.ndim
        return pl.BlockSpec(arr.shape, lambda b: (0,) * nd)

    weight_ops = [dww, dwb, sew1, seb1, sew2, seb2, wav, bav, wc1f, bc1f,
                  wc2, bc2]
    in_specs = ([pl.BlockSpec((Bblk, Hp // S, S, Wp // S, S * C),
                              lambda b: (b, 0, 0, 0, 0))]
                + [_wspec(w) for w in weight_ops])

    flops = int(2 * Bpad * N * (KK * C          # depthwise conv
                                + 2 * C * C     # fused (wqk|wv) projection
                                + 2 * N * C     # scores + att@v
                                + C * hidden    # channel-mixer 1 (wpw folded)
                                + hidden * oup) # channel-mixer 2
                + 4 * Bpad * C * rd)            # squeeze-excite
    transcend = int(Bpad * N * (N + hidden) + Bpad * (C + rd))
    bytes_acc = int(4 * (xq.size + Bpad * N * oup)
                    + sum(int(w.size) * w.dtype.itemsize for w in weight_ops))
    cost = pl.CostEstimate(flops=flops, transcendentals=transcend,
                           bytes_accessed=bytes_acc)

    out = pl.pallas_call(
        kernel,
        out_shape=jax.ShapeDtypeStruct((Bpad, N, oup), jnp.float32),
        grid=(Bpad // Bblk,),
        in_specs=in_specs,
        out_specs=pl.BlockSpec((Bblk, N, oup), lambda b: (b, 0, 0)),
        compiler_params=pltpu.CompilerParams(
            dimension_semantics=("parallel",)),
        cost_estimate=cost,
    )(xq, *weight_ops)

    out = out[:B].reshape(B, Ho, Wo, oup)
    return jnp.transpose(out, (0, 3, 1, 2))          # back to NCHW


# ----------------------------- parameter init -----------------------------

def _make_divisible(v, divisor=8, min_value=None, round_limit=0.9):
    min_value = min_value or divisor
    new_v = max(min_value, int(v + divisor / 2) // divisor * divisor)
    if new_v < round_limit * v:
        new_v += divisor
    return new_v


def _bn_fold(key, c, eps=1e-5):
    k1, k2, k3, k4 = jax.random.split(key, 4)
    gamma = jax.random.uniform(k1, (c,), jnp.float32, 0.5, 1.5)
    beta = 0.1 * jax.random.normal(k2, (c,), jnp.float32)
    mean = 0.1 * jax.random.normal(k3, (c,), jnp.float32)
    var = jax.random.uniform(k4, (c,), jnp.float32, 0.5, 1.5)
    scale = gamma / jnp.sqrt(var + eps)
    bias = beta - mean * scale
    return scale, bias


def init_params(key, inp, oup, hidden_dim, kernel_size=3):
    KK = kernel_size * kernel_size
    ks = jax.random.split(key, 16)
    p = {}
    # token_mixer[0]: Conv2d_BN(inp, inp, k, stride, groups=inp)
    dw = jax.random.normal(ks[0], (KK, inp), jnp.float32) / math.sqrt(KK)
    s, b = _bn_fold(ks[1], inp)
    p["dww"], p["dwb"] = dw * s[None, :], b[None, :]
    # token_mixer[1]: SqueezeExcite(inp, 0.25)
    rd = _make_divisible(inp * 0.25, divisor=8, round_limit=0.0)
    p["sew1"] = jax.random.normal(ks[2], (inp, rd), jnp.float32) / math.sqrt(inp)
    p["seb1"] = 0.1 * jax.random.normal(ks[3], (1, rd), jnp.float32)
    p["sew2"] = jax.random.normal(ks[4], (rd, inp), jnp.float32) / math.sqrt(rd)
    p["seb2"] = 0.1 * jax.random.normal(ks[5], (1, inp), jnp.float32)
    # token_mixer[2]: GlobalAttention(inp) — 1x1 convs with bias
    cq = inp // 8
    p["wq"] = jax.random.normal(ks[6], (inp, cq), jnp.float32) / math.sqrt(inp)
    p["bq"] = 0.1 * jax.random.normal(ks[7], (1, cq), jnp.float32)
    p["wk"] = jax.random.normal(ks[8], (inp, cq), jnp.float32) / math.sqrt(inp)
    p["bk"] = 0.1 * jax.random.normal(ks[9], (1, cq), jnp.float32)
    p["wv"] = jax.random.normal(ks[10], (inp, inp), jnp.float32) / math.sqrt(inp)
    p["bv"] = 0.1 * jax.random.normal(ks[11], (1, inp), jnp.float32)
    # token_mixer[3]: Conv2d_BN(inp, oup, 1)
    w = jax.random.normal(ks[12], (inp, oup), jnp.float32) / math.sqrt(inp)
    s, b = _bn_fold(ks[13], oup)
    p["wpw"], p["bpw"] = w * s[None, :], b[None, :]
    # channel_mixer: Conv2d_BN(oup, hidden) -> GELU -> Conv2d_BN(hidden, oup)
    ks2 = jax.random.split(ks[14], 4)
    w = jax.random.normal(ks2[0], (oup, hidden_dim), jnp.float32) / math.sqrt(oup)
    s, b = _bn_fold(ks2[1], hidden_dim)
    p["wc1"], p["bc1"] = w * s[None, :], b[None, :]
    w = jax.random.normal(ks2[2], (hidden_dim, oup), jnp.float32) / math.sqrt(hidden_dim)
    s, b = _bn_fold(ks2[3], oup)   # (PyTorch would init this BN's gamma to 0)
    p["wc2"], p["bc2"] = w * s[None, :], b[None, :]
    return p


# ---------------------------- pure-JAX reference ---------------------------

def _extract_taps(x_nhwc, kernel_size, stride, pad):
    """Reference-only im2col (NOT used by the Pallas path)."""
    B, H, W, C = x_nhwc.shape
    Ho = (H + 2 * pad - kernel_size) // stride + 1
    Wo = (W + 2 * pad - kernel_size) // stride + 1
    xp = jnp.pad(x_nhwc, ((0, 0), (pad, pad), (pad, pad), (0, 0)))
    taps = []
    for dy in range(kernel_size):
        for dx in range(kernel_size):
            taps.append(xp[:, dy:dy + stride * (Ho - 1) + 1:stride,
                            dx:dx + stride * (Wo - 1) + 1:stride, :])
    taps = jnp.stack(taps, axis=1).reshape(B, kernel_size * kernel_size,
                                           Ho * Wo, C)
    return taps.astype(jnp.float32), Ho, Wo


def reference_forward(x_nchw, params, *, kernel_size=3, stride=2):
    B, C, H, W = x_nchw.shape
    pad = (kernel_size - 1) // 2
    x_nhwc = jnp.transpose(x_nchw, (0, 2, 3, 1)).astype(jnp.float32)
    taps, Ho, Wo = _extract_taps(x_nhwc, kernel_size, stride, pad)
    y = jnp.einsum("btnc,tc->bnc", taps, params["dww"]) + params["dwb"]
    s = jnp.mean(y, axis=1, keepdims=True)
    r = jnp.maximum(jnp.matmul(s, params["sew1"]) + params["seb1"], 0.0)
    g = jax.nn.sigmoid(jnp.matmul(r, params["sew2"]) + params["seb2"])
    y = y * g
    q = jnp.matmul(y, params["wq"]) + params["bq"]
    k = jnp.matmul(y, params["wk"]) + params["bk"]
    v = jnp.matmul(y, params["wv"]) + params["bv"]
    att = jax.nn.softmax(jnp.einsum("bnd,bmd->bnm", q, k), axis=-1)
    y = jnp.einsum("bnm,bmc->bnc", att, v) + y
    z = jnp.matmul(y, params["wpw"]) + params["bpw"]
    h = jnp.matmul(z, params["wc1"]) + params["bc1"]
    h = jax.nn.gelu(h, approximate=False)
    o = jnp.matmul(h, params["wc2"]) + params["bc2"]
    return jnp.transpose(o.reshape(B, Ho, Wo, -1), (0, 3, 1, 2))


# ----------------------------------- main ----------------------------------

if __name__ == "__main__":
    # inp >= 8 required (query channels = inp // 8).  B=8 with Bblk=4 gives a
    # 2-step grid so the batch-blocked pipeline is actually exercised.
    B, INP, OUP, H, W = 8, 16, 32, 16, 16
    HIDDEN, KSIZE, STRIDE, BBLK = 32, 3, 2, 4

    key = jax.random.PRNGKey(0)
    kx, kp = jax.random.split(key)
    x = jax.random.normal(kx, (B, INP, H, W), jnp.float32)
    params = init_params(kp, INP, OUP, HIDDEN, kernel_size=KSIZE)

    ref = jax.block_until_ready(
        reference_forward(x, params, kernel_size=KSIZE, stride=STRIDE))

    # 1) exact-math path (f32 MXU operands): tight check of the kernel logic.
    fwd_f32 = jax.jit(functools.partial(
        global_attention_repvit_block, kernel_size=KSIZE, stride=STRIDE,
        block_b=BBLK, matmul_dtype=jnp.float32))
    out_f32 = jax.block_until_ready(fwd_f32(x, params))
    assert out_f32.shape == (B, OUP, H // STRIDE, W // STRIDE), out_f32.shape
    err_f32 = float(jnp.max(jnp.abs(out_f32 - ref)))
    assert err_f32 < 1e-2, f"f32 path max abs err too large: {err_f32}"

    # 2) production path (bf16 MXU operands, f32 accumulation / element-wise):
    #    looser tolerance vs the f32 reference, per the review.
    fwd_bf16 = jax.jit(functools.partial(
        global_attention_repvit_block, kernel_size=KSIZE, stride=STRIDE,
        block_b=BBLK, matmul_dtype=jnp.bfloat16))
    out_bf16 = jax.block_until_ready(fwd_bf16(x, params))
    assert out_bf16.shape == (B, OUP, H // STRIDE, W // STRIDE), out_bf16.shape
    err_bf16 = float(jnp.max(jnp.abs(out_bf16 - ref)))
    assert err_bf16 < 2.5e-1, f"bf16 path max abs err too large: {err_bf16}"

    print("KERNEL_OK")
</pallas_src>

<mosaic_0001>
module attributes {stable_mosaic.version = 11 : i64} {
  func.func @kernel(%arg0: i32, %arg1: memref<4x9x2x9x32xf32, #tpu.memory_space<vmem>>, %arg2: memref<9x16xf32, #tpu.memory_space<vmem>>, %arg3: memref<1x16xf32, #tpu.memory_space<vmem>>, %arg4: memref<16x8xf32, #tpu.memory_space<vmem>>, %arg5: memref<1x8xf32, #tpu.memory_space<vmem>>, %arg6: memref<8x16xf32, #tpu.memory_space<vmem>>, %arg7: memref<1x16xf32, #tpu.memory_space<vmem>>, %arg8: memref<16x32xf32, #tpu.memory_space<vmem>>, %arg9: memref<1x32xf32, #tpu.memory_space<vmem>>, %arg10: memref<16x32xf32, #tpu.memory_space<vmem>>, %arg11: memref<1x32xf32, #tpu.memory_space<vmem>>, %arg12: memref<32x32xf32, #tpu.memory_space<vmem>>, %arg13: memref<1x32xf32, #tpu.memory_space<vmem>>, %arg14: memref<4x64x32xf32, #tpu.memory_space<vmem>>) attributes {dimension_semantics = [#tpu.dimension_semantics<parallel>], iteration_bounds = array<i64: 2>, scalar_prefetch = 0 : i64, scratch_operands = 0 : i64, tpu.core_type = #tpu.core_type<tc>, window_params = [{transform_indices = @transform_0, window_bounds = array<i64: 4, 9, 2, 9, 32>}, {pipeline_mode = #tpu.pipeline_mode<synchronous>, transform_indices = @transform_1, window_bounds = array<i64: 9, 16>}, {pipeline_mode = #tpu.pipeline_mode<synchronous>, transform_indices = @transform_2, window_bounds = array<i64: 1, 16>}, {pipeline_mode = #tpu.pipeline_mode<synchronous>, transform_indices = @transform_3, window_bounds = array<i64: 16, 8>}, {pipeline_mode = #tpu.pipeline_mode<synchronous>, transform_indices = @transform_4, window_bounds = array<i64: 1, 8>}, {pipeline_mode = #tpu.pipeline_mode<synchronous>, transform_indices = @transform_5, window_bounds = array<i64: 8, 16>}, {pipeline_mode = #tpu.pipeline_mode<synchronous>, transform_indices = @transform_6, window_bounds = array<i64: 1, 16>}, {pipeline_mode = #tpu.pipeline_mode<synchronous>, transform_indices = @transform_7, window_bounds = array<i64: 16, 32>}, {pipeline_mode = #tpu.pipeline_mode<synchronous>, transform_indices = @transform_8, window_bounds = array<i64: 1, 32>}, {pipeline_mode = #tpu.pipeline_mode<synchronous>, transform_indices = @transform_9, window_bounds = array<i64: 16, 32>}, {pipeline_mode = #tpu.pipeline_mode<synchronous>, transform_indices = @transform_10, window_bounds = array<i64: 1, 32>}, {pipeline_mode = #tpu.pipeline_mode<synchronous>, transform_indices = @transform_11, window_bounds = array<i64: 32, 32>}, {pipeline_mode = #tpu.pipeline_mode<synchronous>, transform_indices = @transform_12, window_bounds = array<i64: 1, 32>}, {transform_indices = @transform_13, window_bounds = array<i64: 4, 64, 32>}]} {
    %c0 = arith.constant 0 : index
    %c0_0 = arith.constant 0 : index
    %0 = vector.load %arg2[%c0, %c0_0] : memref<9x16xf32, #tpu.memory_space<vmem>>, vector<9x16xf32>
    %cst = arith.constant 0.000000e+00 : f32
    %1 = vector.broadcast %cst : f32 to vector<4x8x8x16xf32>
    %c0_1 = arith.constant 0 : index
    %c0_2 = arith.constant 0 : index
    %c0_3 = arith.constant 0 : index
    %c0_4 = arith.constant 0 : index
    %c0_5 = arith.constant 0 : index
    %2 = vector.load %arg1[%c0_1, %c0_2, %c0_3, %c0_4, %c0_5] : memref<4x9x2x9x32xf32, #tpu.memory_space<vmem>>, vector<4x8x1x8x16xf32>
    %3 = vector.shape_cast %2 : vector<4x8x1x8x16xf32> to vector<4x8x8x16xf32>
    %4 = vector.extract_strided_slice %0 {offsets = [0, 0], sizes = [1, 16], strides = [1, 1]} : vector<9x16xf32> to vector<1x16xf32>
    %5 = vector.shape_cast %4 : vector<1x16xf32> to vector<1x1x1x16xf32>
    %6 = vector.broadcast %5 : vector<1x1x1x16xf32> to vector<4x8x8x16xf32>
    %7 = arith.mulf %3, %6 : vector<4x8x8x16xf32>
    %8 = arith.addf %1, %7 : vector<4x8x8x16xf32>
    %c0_6 = arith.constant 0 : index
    %c0_7 = arith.constant 0 : index
    %c0_8 = arith.constant 0 : index
    %c0_9 = arith.constant 0 : index
    %c16 = arith.constant 16 : index
    %9 = vector.load %arg1[%c0_6, %c0_7, %c0_8, %c0_9, %c16] : memref<4x9x2x9x32xf32, #tpu.memory_space<vmem>>, vector<4x8x1x8x16xf32>
    %10 = vector.shape_cast %9 : vector<4x8x1x8x16xf32> to vector<4x8x8x16xf32>
    %11 = vector.extract_strided_slice %0 {offsets = [1, 0], sizes = [1, 16], strides = [1, 1]} : vector<9x16xf32> to vector<1x16xf32>
    %12 = vector.shape_cast %11 : vector<1x16xf32> to vector<1x1x1x16xf32>
    %13 = vector.broadcast %12 : vector<1x1x1x16xf32> to vector<4x8x8x16xf32>
    %14 = arith.mulf %10, %13 : vector<4x8x8x16xf32>
    %15 = arith.addf %8, %14 : vector<4x8x8x16xf32>
    %c0_10 = arith.constant 0 : index
    %c0_11 = arith.constant 0 : index
    %c0_12 = arith.constant 0 : index
    %c1 = arith.constant 1 : index
    %c0_13 = arith.constant 0 : index
    %16 = vector.load %arg1[%c0_10, %c0_11, %c0_12, %c1, %c0_13] : memref<4x9x2x9x32xf32, #tpu.memory_space<vmem>>, vector<4x8x1x8x16xf32>
    %17 = vector.shape_cast %16 : vector<4x8x1x8x16xf32> to vector<4x8x8x16xf32>
    %18 = vector.extract_strided_slice %0 {offsets = [2, 0], sizes = [1, 16], strides = [1, 1]} : vector<9x16xf32> to vector<1x16xf32>
    %19 = vector.shape_cast %18 : vector<1x16xf32> to vector<1x1x1x16xf32>
    %20 = vector.broadcast %19 : vector<1x1x1x16xf32> to vector<4x8x8x16xf32>
    %21 = arith.mulf %17, %20 : vector<4x8x8x16xf32>
    %22 = arith.addf %15, %21 : vector<4x8x8x16xf32>
    %c0_14 = arith.constant 0 : index
    %c0_15 = arith.constant 0 : index
    %c1_16 = arith.constant 1 : index
    %c0_17 = arith.constant 0 : index
    %c0_18 = arith.constant 0 : index
    %23 = vector.load %arg1[%c0_14, %c0_15, %c1_16, %c0_17, %c0_18] : memref<4x9x2x9x32xf32, #tpu.memory_space<vmem>>, vector<4x8x1x8x16xf32>
    %24 = vector.shape_cast %23 : vector<4x8x1x8x16xf32> to vector<4x8x8x16xf32>
    %25 = vector.extract_strided_slice %0 {offsets = [3, 0], sizes = [1, 16], strides = [1, 1]} : vector<9x16xf32> to vector<1x16xf32>
    %26 = vector.shape_cast %25 : vector<1x16xf32> to vector<1x1x1x16xf32>
    %27 = vector.broadcast %26 : vector<1x1x1x16xf32> to vector<4x8x8x16xf32>
    %28 = arith.mulf %24, %27 : vector<4x8x8x16xf32>
    %29 = arith.addf %22, %28 : vector<4x8x8x16xf32>
    %c0_19 = arith.constant 0 : index
    %c0_20 = arith.constant 0 : index
    %c1_21 = arith.constant 1 : index
    %c0_22 = arith.constant 0 : index
    %c16_23 = arith.constant 16 : index
    %30 = vector.load %arg1[%c0_19, %c0_20, %c1_21, %c0_22, %c16_23] : memref<4x9x2x9x32xf32, #tpu.memory_space<vmem>>, vector<4x8x1x8x16xf32>
    %31 = vector.shape_cast %30 : vector<4x8x1x8x16xf32> to vector<4x8x8x16xf32>
    %32 = vector.extract_strided_slice %0 {offsets = [4, 0], sizes = [1, 16], strides = [1, 1]} : vector<9x16xf32> to vector<1x16xf32>
    %33 = vector.shape_cast %32 : vector<1x16xf32> to vector<1x1x1x16xf32>
    %34 = vector.broadcast %33 : vector<1x1x1x16xf32> to vector<4x8x8x16xf32>
    %35 = arith.mulf %31, %34 : vector<4x8x8x16xf32>
    %36 = arith.addf %29, %35 : vector<4x8x8x16xf32>
    %c0_24 = arith.constant 0 : index
    %c0_25 = arith.constant 0 : index
    %c1_26 = arith.constant 1 : index
    %c1_27 = arith.constant 1 : index
    %c0_28 = arith.constant 0 : index
    %37 = vector.load %arg1[%c0_24, %c0_25, %c1_26, %c1_27, %c0_28] : memref<4x9x2x9x32xf32, #tpu.memory_space<vmem>>, vector<4x8x1x8x16xf32>
    %38 = vector.shape_cast %37 : vector<4x8x1x8x16xf32> to vector<4x8x8x16xf32>
    %39 = vector.extract_strided_slice %0 {offsets = [5, 0], sizes = [1, 16], strides = [1, 1]} : vector<9x16xf32> to vector<1x16xf32>
    %40 = vector.shape_cast %39 : vector<1x16xf32> to vector<1x1x1x16xf32>
    %41 = vector.broadcast %40 : vector<1x1x1x16xf32> to vector<4x8x8x16xf32>
    %42 = arith.mulf %38, %41 : vector<4x8x8x16xf32>
    %43 = arith.addf %36, %42 : vector<4x8x8x16xf32>
    %c0_29 = arith.constant 0 : index
    %c1_30 = arith.constant 1 : index
    %c0_31 = arith.constant 0 : index
    %c0_32 = arith.constant 0 : index
    %c0_33 = arith.constant 0 : index
    %44 = vector.load %arg1[%c0_29, %c1_30, %c0_31, %c0_32, %c0_33] : memref<4x9x2x9x32xf32, #tpu.memory_space<vmem>>, vector<4x8x1x8x16xf32>
    %45 = vector.shape_cast %44 : vector<4x8x1x8x16xf32> to vector<4x8x8x16xf32>
    %46 = vector.extract_strided_slice %0 {offsets = [6, 0], sizes = [1, 16], strides = [1, 1]} : vector<9x16xf32> to vector<1x16xf32>
    %47 = vector.shape_cast %46 : vector<1x16xf32> to vector<1x1x1x16xf32>
    %48 = vector.broadcast %47 : vector<1x1x1x16xf32> to vector<4x8x8x16xf32>
    %49 = arith.mulf %45, %48 : vector<4x8x8x16xf32>
    %50 = arith.addf %43, %49 : vector<4x8x8x16xf32>
    %c0_34 = arith.constant 0 : index
    %c1_35 = arith.constant 1 : index
    %c0_36 = arith.constant 0 : index
    %c0_37 = arith.constant 0 : index
    %c16_38 = arith.constant 16 : index
    %51 = vector.load %arg1[%c0_34, %c1_35, %c0_36, %c0_37, %c16_38] : memref<4x9x2x9x32xf32, #tpu.memory_space<vmem>>, vector<4x8x1x8x16xf32>
    %52 = vector.shape_cast %51 : vector<4x8x1x8x16xf32> to vector<4x8x8x16xf32>
    %53 = vector.extract_strided_slice %0 {offsets = [7, 0], sizes = [1, 16], strides = [1, 1]} : vector<9x16xf32> to vector<1x16xf32>
    %54 = vector.shape_cast %53 : vector<1x16xf32> to vector<1x1x1x16xf32>
    %55 = vector.broadcast %54 : vector<1x1x1x16xf32> to vector<4x8x8x16xf32>
    %56 = arith.mulf %52, %55 : vector<4x8x8x16xf32>
    %57 = arith.addf %50, %56 : vector<4x8x8x16xf32>
    %c0_39 = arith.constant 0 : index
    %c1_40 = arith.constant 1 : index
    %c0_41 = arith.constant 0 : index
    %c1_42 = arith.constant 1 : index
    %c0_43 = arith.constant 0 : index
    %58 = vector.load %arg1[%c0_39, %c1_40, %c0_41, %c1_42, %c0_43] : memref<4x9x2x9x32xf32, #tpu.memory_space<vmem>>, vector<4x8x1x8x16xf32>
    %59 = vector.shape_cast %58 : vector<4x8x1x8x16xf32> to vector<4x8x8x16xf32>
    %60 = vector.extract_strided_slice %0 {offsets = [8, 0], sizes = [1, 16], strides = [1, 1]} : vector<9x16xf32> to vector<1x16xf32>
    %61 = vector.shape_cast %60 : vector<1x16xf32> to vector<1x1x1x16xf32>
    %62 = vector.broadcast %61 : vector<1x1x1x16xf32> to vector<4x8x8x16xf32>
    %63 = arith.mulf %59, %62 : vector<4x8x8x16xf32>
    %64 = arith.addf %57, %63 : vector<4x8x8x16xf32>
    %c0_44 = arith.constant 0 : index
    %c0_45 = arith.constant 0 : index
    %65 = vector.load %arg3[%c0_44, %c0_45] : memref<1x16xf32, #tpu.memory_space<vmem>>, vector<1x16xf32>
    %66 = vector.shape_cast %65 : vector<1x16xf32> to vector<1x1x1x16xf32>
    %67 = vector.broadcast %66 : vector<1x1x1x16xf32> to vector<4x8x8x16xf32>
    %68 = arith.addf %64, %67 : vector<4x8x8x16xf32>
    %69 = vector.shape_cast %68 : vector<4x8x8x16xf32> to vector<4x64x16xf32>
    %cst_46 = arith.constant dense<0.000000e+00> : vector<4x16xf32>
    %70 = vector.multi_reduction <add>, %69, %cst_46 [1] : vector<4x64x16xf32> to vector<4x16xf32>
    %cst_47 = arith.constant 6.400000e+01 : f32
    %71 = vector.broadcast %cst_47 : f32 to vector<4x16xf32>
    %72 = arith.divf %70, %71 : vector<4x16xf32>
    %c0_48 = arith.constant 0 : index
    %c0_49 = arith.constant 0 : index
    %73 = vector.load %arg4[%c0_48, %c0_49] : memref<16x8xf32, #tpu.memory_space<vmem>>, vector<16x8xf32>
    %cst_50 = arith.constant dense<0.000000e+00> : vector<4x8xf32>
    %74 = tpu.matmul %72, %73, %cst_50 {dimension_numbers = #tpu.dot_dimension_numbers<[1], [0], [0], [1], [0, 0, 1, 1], [], []>} : vector<4x16xf32>, vector<16x8xf32>, vector<4x8xf32> -> vector<4x8xf32>
    %c0_51 = arith.constant 0 : index
    %c0_52 = arith.constant 0 : index
    %75 = vector.load %arg5[%c0_51, %c0_52] : memref<1x8xf32, #tpu.memory_space<vmem>>, vector<1x8xf32>
    %76 = vector.broadcast %75 : vector<1x8xf32> to vector<4x8xf32>
    %77 = arith.addf %74, %76 : vector<4x8xf32>
    %cst_53 = arith.constant 0.000000e+00 : f32
    %78 = vector.broadcast %cst_53 : f32 to vector<4x8xf32>
    %79 = arith.maximumf %77, %78 : vector<4x8xf32>
    %c0_54 = arith.constant 0 : index
    %c0_55 = arith.constant 0 : index
    %80 = vector.load %arg6[%c0_54, %c0_55] : memref<8x16xf32, #tpu.memory_space<vmem>>, vector<8x16xf32>
    %cst_56 = arith.constant dense<0.000000e+00> : vector<4x16xf32>
    %81 = tpu.matmul %79, %80, %cst_56 {dimension_numbers = #tpu.dot_dimension_numbers<[1], [0], [0], [1], [0, 0, 1, 1], [], []>} : vector<4x8xf32>, vector<8x16xf32>, vector<4x16xf32> -> vector<4x16xf32>
    %c0_57 = arith.constant 0 : index
    %c0_58 = arith.constant 0 : index
    %82 = vector.load %arg7[%c0_57, %c0_58] : memref<1x16xf32, #tpu.memory_space<vmem>>, vector<1x16xf32>
    %83 = vector.broadcast %82 : vector<1x16xf32> to vector<4x16xf32>
    %84 = arith.addf %81, %83 : vector<4x16xf32>
    %85 = arith.negf %84 : vector<4x16xf32>
    %86 = math.exp %85 : vector<4x16xf32>
    %cst_59 = arith.constant 1.000000e+00 : f32
    %87 = vector.broadcast %cst_59 : f32 to vector<4x16xf32>
    %88 = arith.addf %87, %86 : vector<4x16xf32>
    %89 = arith.divf %87, %88 : vector<4x16xf32>
    %90 = vector.shape_cast %89 : vector<4x16xf32> to vector<4x1x16xf32>
    %91 = vector.broadcast %90 : vector<4x1x16xf32> to vector<4x64x16xf32>
    %92 = arith.mulf %69, %91 : vector<4x64x16xf32>
    %93 = vector.shape_cast %92 : vector<4x64x16xf32> to vector<256x16xf32>
    %c0_60 = arith.constant 0 : index
    %c0_61 = arith.constant 0 : index
    %94 = vector.load %arg8[%c0_60, %c0_61] : memref<16x32xf32, #tpu.memory_space<vmem>>, vector<16x32xf32>
    %cst_62 = arith.constant dense<0.000000e+00> : vector<256x32xf32>
    %95 = tpu.matmul %93, %94, %cst_62 {dimension_numbers = #tpu.dot_dimension_numbers<[1], [0], [0], [1], [0, 0, 1, 1], [], []>} : vector<256x16xf32>, vector<16x32xf32>, vector<256x32xf32> -> vector<256x32xf32>
    %c0_63 = arith.constant 0 : index
    %c0_64 = arith.constant 0 : index
    %96 = vector.load %arg9[%c0_63, %c0_64] : memref<1x32xf32, #tpu.memory_space<vmem>>, vector<1x32xf32>
    %97 = vector.broadcast %96 : vector<1x32xf32> to vector<256x32xf32>
    %98 = arith.addf %95, %97 : vector<256x32xf32>
    %99 = vector.extract_strided_slice %98 {offsets = [0, 0], sizes = [256, 16], strides = [1, 1]} : vector<256x32xf32> to vector<256x16xf32>
    %100 = vector.shape_cast %99 : vector<256x16xf32> to vector<4x64x16xf32>
    %101 = vector.extract_strided_slice %98 {offsets = [0, 16], sizes = [256, 16], strides = [1, 1]} : vector<256x32xf32> to vector<256x16xf32>
    %102 = vector.shape_cast %101 : vector<256x16xf32> to vector<4x64x16xf32>
    "tpu.trace_start"() <{level = 10 : i32, message = "bnc,bmc->bnm"}> : () -> ()
    %cst_65 = arith.constant dense<0.000000e+00> : vector<4x64x64xf32>
    %103 = tpu.matmul %100, %92, %cst_65 {dimension_numbers = #tpu.dot_dimension_numbers<[2], [2], [1], [1], [0, 0, 0, 1, 1, 1], [0], [0]>} : vector<4x64x16xf32>, vector<4x64x16xf32>, vector<4x64x64xf32> -> vector<4x64x64xf32>
    "tpu.trace_stop"() : () -> ()
    %cst_66 = arith.constant dense<0xFF800000> : vector<4x64xf32>
    %104 = vector.multi_reduction <maximumf>, %103, %cst_66 [2] : vector<4x64x64xf32> to vector<4x64xf32>
    %105 = vector.shape_cast %104 : vector<4x64xf32> to vector<4x64x1xf32>
    %106 = vector.broadcast %105 : vector<4x64x1xf32> to vector<4x64x64xf32>
    %107 = arith.subf %103, %106 : vector<4x64x64xf32>
    %108 = math.exp %107 : vector<4x64x64xf32>
    %cst_67 = arith.constant dense<0.000000e+00> : vector<4x64xf32>
    %109 = vector.multi_reduction <add>, %108, %cst_67 [2] : vector<4x64x64xf32> to vector<4x64xf32>
    %110 = vector.shape_cast %109 : vector<4x64xf32> to vector<4x64x1xf32>
    %111 = vector.broadcast %110 : vector<4x64x1xf32> to vector<4x64x64xf32>
    %112 = arith.divf %108, %111 : vector<4x64x64xf32>
    "tpu.trace_start"() <{level = 10 : i32, message = "bnm,bmc->bnc"}> : () -> ()
    %cst_68 = arith.constant dense<0.000000e+00> : vector<4x64x16xf32>
    %113 = tpu.matmul %112, %102, %cst_68 {dimension_numbers = #tpu.dot_dimension_numbers<[2], [1], [1], [2], [0, 0, 0, 1, 1, 2], [0], [0]>} : vector<4x64x64xf32>, vector<4x64x16xf32>, vector<4x64x16xf32> -> vector<4x64x16xf32>
    "tpu.trace_stop"() : () -> ()
    %114 = arith.addf %113, %92 : vector<4x64x16xf32>
    %115 = vector.shape_cast %114 : vector<4x64x16xf32> to vector<256x16xf32>
    %c0_69 = arith.constant 0 : index
    %c0_70 = arith.constant 0 : index
    %116 = vector.load %arg10[%c0_69, %c0_70] : memref<16x32xf32, #tpu.memory_space<vmem>>, vector<16x32xf32>
    %cst_71 = arith.constant dense<0.000000e+00> : vector<256x32xf32>
    %117 = tpu.matmul %115, %116, %cst_71 {dimension_numbers = #tpu.dot_dimension_numbers<[1], [0], [0], [1], [0, 0, 1, 1], [], []>} : vector<256x16xf32>, vector<16x32xf32>, vector<256x32xf32> -> vector<256x32xf32>
    %c0_72 = arith.constant 0 : index
    %c0_73 = arith.constant 0 : index
    %118 = vector.load %arg11[%c0_72, %c0_73] : memref<1x32xf32, #tpu.memory_space<vmem>>, vector<1x32xf32>
    %119 = vector.broadcast %118 : vector<1x32xf32> to vector<256x32xf32>
    %120 = arith.addf %117, %119 : vector<256x32xf32>
    %cst_74 = arith.constant 5.000000e-01 : f32
    %121 = vector.broadcast %cst_74 : f32 to vector<256x32xf32>
    %122 = arith.mulf %121, %120 : vector<256x32xf32>
    %cst_75 = arith.constant 0.707106769 : f32
    %123 = vector.broadcast %cst_75 : f32 to vector<256x32xf32>
    %124 = arith.mulf %120, %123 : vector<256x32xf32>
    %cst_76 = arith.constant 0.000000e+00 : f32
    %125 = vector.broadcast %cst_76 : f32 to vector<256x32xf32>
    %126 = arith.cmpf olt, %124, %125 : vector<256x32xf32>
    %cst_77 = arith.constant -1.000000e+00 : f32
    %cst_78 = arith.constant 1.000000e+00 : f32
    %127 = vector.broadcast %cst_77 : f32 to vector<256x32xf32>
    %128 = vector.broadcast %cst_78 : f32 to vector<256x32xf32>
    %129 = arith.select %126, %127, %128 : vector<256x32xi1>, vector<256x32xf32>
    %130 = math.absf %124 : vector<256x32xf32>
    %cst_79 = arith.constant 0.327591091 : f32
    %131 = vector.broadcast %cst_79 : f32 to vector<256x32xf32>
    %132 = arith.mulf %131, %130 : vector<256x32xf32>
    %cst_80 = arith.constant 1.000000e+00 : f32
    %133 = vector.broadcast %cst_80 : f32 to vector<256x32xf32>
    %134 = arith.addf %133, %132 : vector<256x32xf32>
    %cst_81 = arith.constant 1.000000e+00 : f32
    %135 = vector.broadcast %cst_81 : f32 to vector<256x32xf32>
    %136 = arith.divf %135, %134 : vector<256x32xf32>
    %cst_82 = arith.constant 1.06140542 : f32
    %137 = vector.broadcast %cst_82 : f32 to vector<256x32xf32>
    %138 = arith.mulf %137, %136 : vector<256x32xf32>
    %cst_83 = arith.constant -1.45315206 : f32
    %139 = vector.broadcast %cst_83 : f32 to vector<256x32xf32>
    %140 = arith.addf %138, %139 : vector<256x32xf32>
    %141 = arith.mulf %140, %136 : vector<256x32xf32>
    %cst_84 = arith.constant 1.42141378 : f32
    %142 = vector.broadcast %cst_84 : f32 to vector<256x32xf32>
    %143 = arith.addf %141, %142 : vector<256x32xf32>
    %144 = arith.mulf %143, %136 : vector<256x32xf32>
    %cst_85 = arith.constant -0.284496725 : f32
    %145 = vector.broadcast %cst_85 : f32 to vector<256x32xf32>
    %146 = arith.addf %144, %145 : vector<256x32xf32>
    %147 = arith.mulf %146, %136 : vector<256x32xf32>
    %cst_86 = arith.constant 0.254829586 : f32
    %148 = vector.broadcast %cst_86 : f32 to vector<256x32xf32>
    %149 = arith.addf %147, %148 : vector<256x32xf32>
    %150 = arith.mulf %149, %136 : vector<256x32xf32>
    %cst_87 = arith.constant 0.000000e+00 : f32
    %151 = vector.broadcast %cst_87 : f32 to vector<256x32xf32>
    %152 = arith.subf %151, %130 : vector<256x32xf32>
    %153 = arith.mulf %152, %130 : vector<256x32xf32>
    %154 = math.exp %153 : vector<256x32xf32>
    %155 = arith.mulf %150, %154 : vector<256x32xf32>
    %cst_88 = arith.constant 1.000000e+00 : f32
    %156 = vector.broadcast %cst_88 : f32 to vector<256x32xf32>
    %157 = arith.subf %156, %155 : vector<256x32xf32>
    %158 = arith.mulf %129, %157 : vector<256x32xf32>
    %cst_89 = arith.constant 1.000000e+00 : f32
    %159 = vector.broadcast %cst_89 : f32 to vector<256x32xf32>
    %160 = arith.addf %159, %158 : vector<256x32xf32>
    %161 = arith.mulf %122, %160 : vector<256x32xf32>
    %c0_90 = arith.constant 0 : index
    %c0_91 = arith.constant 0 : index
    %162 = vector.load %arg12[%c0_90, %c0_91] : memref<32x32xf32, #tpu.memory_space<vmem>>, vector<32x32xf32>
    %cst_92 = arith.constant dense<0.000000e+00> : vector<256x32xf32>
    %163 = tpu.matmul %161, %162, %cst_92 {dimension_numbers = #tpu.dot_dimension_numbers<[1], [0], [0], [1], [0, 0, 1, 1], [], []>} : vector<256x32xf32>, vector<32x32xf32>, vector<256x32xf32> -> vector<256x32xf32>
    %c0_93 = arith.constant 0 : index
    %c0_94 = arith.constant 0 : index
    %164 = vector.load %arg13[%c0_93, %c0_94] : memref<1x32xf32, #tpu.memory_space<vmem>>, vector<1x32xf32>
    %165 = vector.broadcast %164 : vector<1x32xf32> to vector<256x32xf32>
    %166 = arith.addf %163, %165 : vector<256x32xf32>
    %167 = vector.shape_cast %166 : vector<256x32xf32> to vector<4x64x32xf32>
    %c0_95 = arith.constant 0 : index
    %c0_96 = arith.constant 0 : index
    %c0_97 = arith.constant 0 : index
    %168 = vector.load %arg14[%c0_95, %c0_96, %c0_97] : memref<4x64x32xf32, #tpu.memory_space<vmem>>, vector<4x64x32xf32>
    tpu.vector_store %arg14[%c0_95, %c0_96, %c0_97], %167 {strides = array<i32>} : memref<4x64x32xf32, #tpu.memory_space<vmem>>, vector<4x64x32xf32>,
    return
  }
  func.func @transform_0(%arg0: i32) -> (i32, i32, i32, i32, i32) {
    %c0_i32 = arith.constant 0 : i32
    %c0_i32_0 = arith.constant 0 : i32
    %c0_i32_1 = arith.constant 0 : i32
    %c0_i32_2 = arith.constant 0 : i32
    %c0_i32_3 = arith.constant 0 : i32
    return %arg0, %c0_i32, %c0_i32_0, %c0_i32_1, %c0_i32_2 : i32, i32, i32, i32, i32
  }
  func.func @transform_1(%arg0: i32) -> (i32, i32) {
    %c0_i32 = arith.constant 0 : i32
    %c0_i32_0 = arith.constant 0 : i32
    %c0_i32_1 = arith.constant 0 : i32
    return %c0_i32, %c0_i32_0 : i32, i32
  }
  func.func @transform_2(%arg0: i32) -> (i32, i32) {
    %c0_i32 = arith.constant 0 : i32
    %c0_i32_0 = arith.constant 0 : i32
    %c0_i32_1 = arith.constant 0 : i32
    return %c0_i32, %c0_i32_0 : i32, i32
  }
  func.func @transform_3(%arg0: i32) -> (i32, i32) {
    %c0_i32 = arith.constant 0 : i32
    %c0_i32_0 = arith.constant 0 : i32
    %c0_i32_1 = arith.constant 0 : i32
    return %c0_i32, %c0_i32_0 : i32, i32
  }
  func.func @transform_4(%arg0: i32) -> (i32, i32) {
    %c0_i32 = arith.constant 0 : i32
    %c0_i32_0 = arith.constant 0 : i32
    %c0_i32_1 = arith.constant 0 : i32
    return %c0_i32, %c0_i32_0 : i32, i32
  }
  func.func @transform_5(%arg0: i32) -> (i32, i32) {
    %c0_i32 = arith.constant 0 : i32
    %c0_i32_0 = arith.constant 0 : i32
    %c0_i32_1 = arith.constant 0 : i32
    return %c0_i32, %c0_i32_0 : i32, i32
  }
  func.func @transform_6(%arg0: i32) -> (i32, i32) {
    %c0_i32 = arith.constant 0 : i32
    %c0_i32_0 = arith.constant 0 : i32
    %c0_i32_1 = arith.constant 0 : i32
    return %c0_i32, %c0_i32_0 : i32, i32
  }
  func.func @transform_7(%arg0: i32) -> (i32, i32) {
    %c0_i32 = arith.constant 0 : i32
    %c0_i32_0 = arith.constant 0 : i32
    %c0_i32_1 = arith.constant 0 : i32
    return %c0_i32, %c0_i32_0 : i32, i32
  }
  func.func @transform_8(%arg0: i32) -> (i32, i32) {
    %c0_i32 = arith.constant 0 : i32
    %c0_i32_0 = arith.constant 0 : i32
    %c0_i32_1 = arith.constant 0 : i32
    return %c0_i32, %c0_i32_0 : i32, i32
  }
  func.func @transform_9(%arg0: i32) -> (i32, i32) {
    %c0_i32 = arith.constant 0 : i32
    %c0_i32_0 = arith.constant 0 : i32
    %c0_i32_1 = arith.constant 0 : i32
    return %c0_i32, %c0_i32_0 : i32, i32
  }
  func.func @transform_10(%arg0: i32) -> (i32, i32) {
    %c0_i32 = arith.constant 0 : i32
    %c0_i32_0 = arith.constant 0 : i32
    %c0_i32_1 = arith.constant 0 : i32
    return %c0_i32, %c0_i32_0 : i32, i32
  }
  func.func @transform_11(%arg0: i32) -> (i32, i32) {
    %c0_i32 = arith.constant 0 : i32
    %c0_i32_0 = arith.constant 0 : i32
    %c0_i32_1 = arith.constant 0 : i32
    return %c0_i32, %c0_i32_0 : i32, i32
  }
  func.func @transform_12(%arg0: i32) -> (i32, i32) {
    %c0_i32 = arith.constant 0 : i32
    %c0_i32_0 = arith.constant 0 : i32
    %c0_i32_1 = arith.constant 0 : i32
    return %c0_i32, %c0_i32_0 : i32, i32
  }
  func.func @transform_13(%arg0: i32) -> (i32, i32, i32) {
    %c0_i32 = arith.constant 0 : i32
    %c0_i32_0 = arith.constant 0 : i32
    %c0_i32_1 = arith.constant 0 : i32
    return %arg0, %c0_i32, %c0_i32_0 : i32, i32, i32
  }
}

</mosaic_0001>

<llo_original>
// kernel: global_attention_repvit_block.1
$region0: #{global_attention_repvit_block.1}
  #allocation0 [shape = 'u32[]', space=smem, size = 0x4, offset = 0x4, fixed_abs, tag = 'smem constant byte address 0x4 - core index']
  #allocation1 [shape = 'u32[144,128]{1,0:T(1,128)}', space=vmem, size = 0x12000, scoped, tag = 'internal scratch']
  %s0 = inlined_call_operand.vmem [shape: f32[8,9,2,9,32], index: 0, kind: input, shape index: {}]
  %s1 = inlined_call_operand.vmem [shape: f32[9,16], index: 1, kind: input, shape index: {}]
  %s2 = inlined_call_operand.vmem [shape: f32[1,16], index: 2, kind: input, shape index: {}]
  %s3 = inlined_call_operand.vmem [shape: f32[16,8], index: 3, kind: input, shape index: {}]
  %s4 = inlined_call_operand.vmem [shape: f32[1,8], index: 4, kind: input, shape index: {}]
  %s5 = inlined_call_operand.vmem [shape: f32[8,16], index: 5, kind: input, shape index: {}]
  %s6 = inlined_call_operand.vmem [shape: f32[1,16], index: 6, kind: input, shape index: {}]
  %s7 = inlined_call_operand.vmem [shape: f32[16,32], index: 7, kind: input, shape index: {}]
  %s8 = inlined_call_operand.vmem [shape: f32[1,32], index: 8, kind: input, shape index: {}]
  %s9 = inlined_call_operand.vmem [shape: f32[16,32], index: 9, kind: input, shape index: {}]
  %s10 = inlined_call_operand.vmem [shape: f32[1,32], index: 10, kind: input, shape index: {}]
  %s11 = inlined_call_operand.vmem [shape: f32[32,32], index: 11, kind: input, shape index: {}]
  %s12 = inlined_call_operand.vmem [shape: f32[1,32], index: 12, kind: input, shape index: {}]
  %s13 = inlined_call_operand.hbm [shape: f32[8,64,32], index: 13, kind: output, shape index: {}]
  %s14 = sld [smem:[#allocation0]]
  $region85: #{global_attention_repvit_block.1} parent=0
    _
  %s16 = ssub.s32 1, %s14
  %s17 = scalar_select 0, %s16, %s14
  $region1: #{global_attention_repvit_block.1} parent=0
    #allocation2 [shape = 'u8[262144]{0}', space=vmem, size = 0x40000, scoped, tag = 'output window, operand 0']
    #allocation3 [shape = 's32[2]{0}', space=sflag, size = 0x8, scoped, tag = 'scoped memory for global_attention_repvit_block.1']
    %18 = vsyncpa [#allocation3], 0
    %s19 = scalar_lea.sflag [#allocation3], 1
    %20 = vsyncpa %s19, 0
    loop: start=0, step=1, limit=4
    $region2: #{global_attention_repvit_block.1} parent=1 // loop_pre_header
      _
    $region3: #{global_attention_repvit_block.1} parent=1 // loop_header
      %s22 = sphi 0, %s26
      %p23 = scmp.ge.s32.totalorder %s22, 4
      %s32 = sphi 0, %s34
      %s35 = sphi 0, %s32
      %s36 = sphi 0, %s35
      %s52 = sphi 0, %s36
      %s56 = sphi 0, %s56
      %s58 = sphi 0, %s56
      %s59 = sphi 0, %s58
      %s73 = sphi 0, %s59
      %s77 = sphi 0, %s77
      %s79 = sphi 0, %s77
      %s80 = sphi 0, %s79
      %s94 = sphi 0, %s80
      %s98 = sphi 0, %s98
      %s100 = sphi 0, %s98
      %s101 = sphi 0, %s100
      %s115 = sphi 0, %s101
      %s119 = sphi 0, %s119
      %s121 = sphi 0, %s119
      %s122 = sphi 0, %s121
      %s136 = sphi 0, %s122
      %s140 = sphi 0, %s140
      %s142 = sphi 0, %s140
      %s143 = sphi 0, %s142
      %s157 = sphi 0, %s143
      %s161 = sphi 0, %s161
      %s163 = sphi 0, %s161
      %s164 = sphi 0, %s163
      %s178 = sphi 0, %s164
      %s182 = sphi 0, %s182
      %s184 = sphi 0, %s182
      %s185 = sphi 0, %s184
      %s199 = sphi 0, %s185
      %s203 = sphi 0, %s203
      %s205 = sphi 0, %s203
      %s206 = sphi 0, %s205
      %s220 = sphi 0, %s206
      %s224 = sphi 0, %s224
      %s226 = sphi 0, %s224
      %s227 = sphi 0, %s226
      %s241 = sphi 0, %s227
      %s245 = sphi 0, %s245
      %s247 = sphi 0, %s245
      %s248 = sphi 0, %s247
      %s262 = sphi 0, %s248
      %s266 = sphi 0, %s266
      %s268 = sphi 0, %s266
      %s269 = sphi 0, %s268
      %s283 = sphi 0, %s269
      %s287 = sphi 0, %s287
      %s289 = sphi 0, %s287
      %s290 = sphi 0, %s289
      %s304 = sphi 0, %s290
      %s310 = sphi 0, %s312
      %s313 = sphi 0, %s310
      %s314 = sphi 0, %s313
      %s330 = sphi 0, %s314
    $region4: #{global_attention_repvit_block.1} parent=1 // loop_header_branch
      %25 = sbr.rel (%p23) target = $region8
    $region5: #{global_attention_repvit_block.1} parent=1 // loop_body
      %s27 = ssub.s32 %s22, 1
      %s28 = ssub.s32 %s22, 2
      %s29 = sadd.s32 %s22, 1
      %s30 = ssub.s32 %s22, %s29
      %p31 = scmp.eq.s32.totalorder %s30, 0
      %s33 = sadd.s32 %s32, 1
      %s34 = scalar_select %p31, %s32, %s33
      %p37 = pneg %p31
      %p38 = scmp.eq.s32.totalorder %s22, 1
      %p39 = por %p37, %p38
      %p40 = scmp.ne.s32.totalorder %s32, %s35
      %p41 = scmp.eq.s32.totalorder %s22, 0
      %p42 = por %p40, %p41
      %p43 = scmp.ne.s32.totalorder %s32, %s35
      %p44 = scmp.eq.s32.totalorder %s27, 1
      %p45 = por %p43, %p44
      %p46 = scmp.ne.s32.totalorder %s35, %s36
      %p47 = scmp.eq.s32.totalorder %s27, 0
      %p48 = por %p46, %p47
      %p49 = scmp.ne.s32.totalorder %s35, %s36
      %p50 = scmp.eq.s32.totalorder %s28, 1
      %p51 = por %p49, %p50
      %p53 = scmp.ne.s32.totalorder %s36, %s52
      %p54 = scmp.eq.s32.totalorder %s28, 0
      %p55 = por %p53, %p54
      %s57 = sadd.s32 %s56, 1
      %p60 = scmp.eq.s32.totalorder %s22, 1
      %p61 = scmp.ne.s32.totalorder %s56, %s58
      %p62 = scmp.eq.s32.totalorder %s22, 0
      %p63 = por %p61, %p62
      %p64 = scmp.ne.s32.totalorder %s56, %s58
      %p65 = scmp.eq.s32.totalorder %s27, 1
      %p66 = por %p64, %p65
      %p67 = scmp.ne.s32.totalorder %s58, %s59
      %p68 = scmp.eq.s32.totalorder %s27, 0
      %p69 = por %p67, %p68
      %p70 = scmp.ne.s32.totalorder %s58, %s59
      %p71 = scmp.eq.s32.totalorder %s28, 1
      %p72 = por %p70, %p71
      %p74 = scmp.ne.s32.totalorder %s59, %s73
      %p75 = scmp.eq.s32.totalorder %s28, 0
      %p76 = por %p74, %p75
      %s78 = sadd.s32 %s77, 1
      %p81 = scmp.eq.s32.totalorder %s22, 1
      %p82 = scmp.ne.s32.totalorder %s77, %s79
      %p83 = scmp.eq.s32.totalorder %s22, 0
      %p84 = por %p82, %p83
      %p85 = scmp.ne.s32.totalorder %s77, %s79
      %p86 = scmp.eq.s32.totalorder %s27, 1
      %p87 = por %p85, %p86
      %p88 = scmp.ne.s32.totalorder %s79, %s80
      %p89 = scmp.eq.s32.totalorder %s27, 0
      %p90 = por %p88, %p89
      %p91 = scmp.ne.s32.totalorder %s79, %s80
      %p92 = scmp.eq.s32.totalorder %s28, 1
      %p93 = por %p91, %p92
      %p95 = scmp.ne.s32.totalorder %s80, %s94
      %p96 = scmp.eq.s32.totalorder %s28, 0
      %p97 = por %p95, %p96
      %s99 = sadd.s32 %s98, 1
      %p102 = scmp.eq.s32.totalorder %s22, 1
      %p103 = scmp.ne.s32.totalorder %s98, %s100
      %p104 = scmp.eq.s32.totalorder %s22, 0
      %p105 = por %p103, %p104
      %p106 = scmp.ne.s32.totalorder %s98, %s100
      %p107 = scmp.eq.s32.totalorder %s27, 1
      %p108 = por %p106, %p107
      %p109 = scmp.ne.s32.totalorder %s100, %s101
      %p110 = scmp.eq.s32.totalorder %s27, 0
      %p111 = por %p109, %p110
      %p112 = scmp.ne.s32.totalorder %s100, %s101
      %p113 = scmp.eq.s32.totalorder %s28, 1
      %p114 = por %p112, %p113
      %p116 = scmp.ne.s32.totalorder %s101, %s115
      %p117 = scmp.eq.s32.totalorder %s28, 0
      %p118 = por %p116, %p117
      %s120 = sadd.s32 %s119, 1
      %p123 = scmp.eq.s32.totalorder %s22, 1
      %p124 = scmp.ne.s32.totalorder %s119, %s121
      %p125 = scmp.eq.s32.totalorder %s22, 0
      %p126 = por %p124, %p125
      %p127 = scmp.ne.s32.totalorder %s119, %s121
      %p128 = scmp.eq.s32.totalorder %s27, 1
      %p129 = por %p127, %p128
      %p130 = scmp.ne.s32.totalorder %s121, %s122
      %p131 = scmp.eq.s32.totalorder %s27, 0
      %p132 = por %p130, %p131
      %p133 = scmp.ne.s32.totalorder %s121, %s122
      %p134 = scmp.eq.s32.totalorder %s28, 1
      %p135 = por %p133, %p134
      %p137 = scmp.ne.s32.totalorder %s122, %s136
      %p138 = scmp.eq.s32.totalorder %s28, 0
      %p139 = por %p137, %p138
      %s141 = sadd.s32 %s140, 1
      %p144 = scmp.eq.s32.totalorder %s22, 1
      %p145 = scmp.ne.s32.totalorder %s140, %s142
      %p146 = scmp.eq.s32.totalorder %s22, 0
      %p147 = por %p145, %p146
      %p148 = scmp.ne.s32.totalorder %s140, %s142
      %p149 = scmp.eq.s32.totalorder %s27, 1
      %p150 = por %p148, %p149
      %p151 = scmp.ne.s32.totalorder %s142, %s143
      %p152 = scmp.eq.s32.totalorder %s27, 0
      %p153 = por %p151, %p152
      %p154 = scmp.ne.s32.totalorder %s142, %s143
      %p155 = scmp.eq.s32.totalorder %s28, 1
      %p156 = por %p154, %p155
      %p158 = scmp.ne.s32.totalorder %s143, %s157
      %p159 = scmp.eq.s32.totalorder %s28, 0
      %p160 = por %p158, %p159
      %s162 = sadd.s32 %s161, 1
      %p165 = scmp.eq.s32.totalorder %s22, 1
      %p166 = scmp.ne.s32.totalorder %s161, %s163
      %p167 = scmp.eq.s32.totalorder %s22, 0
      %p168 = por %p166, %p167
      %p169 = scmp.ne.s32.totalorder %s161, %s163
      %p170 = scmp.eq.s32.totalorder %s27, 1
      %p171 = por %p169, %p170
      %p172 = scmp.ne.s32.totalorder %s163, %s164
      %p173 = scmp.eq.s32.totalorder %s27, 0
      %p174 = por %p172, %p173
      %p175 = scmp.ne.s32.totalorder %s163, %s164
      %p176 = scmp.eq.s32.totalorder %s28, 1
      %p177 = por %p175, %p176
      %p179 = scmp.ne.s32.totalorder %s164, %s178
      %p180 = scmp.eq.s32.totalorder %s28, 0
      %p181 = por %p179, %p180
      %s183 = sadd.s32 %s182, 1
      %p186 = scmp.eq.s32.totalorder %s22, 1
      %p187 = scmp.ne.s32.totalorder %s182, %s184
      %p188 = scmp.eq.s32.totalorder %s22, 0
      %p189 = por %p187, %p188
      %p190 = scmp.ne.s32.totalorder %s182, %s184
      %p191 = scmp.eq.s32.totalorder %s27, 1
      %p192 = por %p190, %p191
      %p193 = scmp.ne.s32.totalorder %s184, %s185
      %p194 = scmp.eq.s32.totalorder %s27, 0
      %p195 = por %p193, %p194
      %p196 = scmp.ne.s32.totalorder %s184, %s185
      %p197 = scmp.eq.s32.totalorder %s28, 1
      %p198 = por %p196, %p197
      %p200 = scmp.ne.s32.totalorder %s185, %s199
      %p201 = scmp.eq.s32.totalorder %s28, 0
      %p202 = por %p200, %p201
      %s204 = sadd.s32 %s203, 1
      %p207 = scmp.eq.s32.totalorder %s22, 1
      %p208 = scmp.ne.s32.totalorder %s203, %s205
      %p209 = scmp.eq.s32.totalorder %s22, 0
      %p210 = por %p208, %p209
      %p211 = scmp.ne.s32.totalorder %s203, %s205
      %p212 = scmp.eq.s32.totalorder %s27, 1
      %p213 = por %p211, %p212
      %p214 = scmp.ne.s32.totalorder %s205, %s206
      %p215 = scmp.eq.s32.totalorder %s27, 0
      %p216 = por %p214, %p215
      %p217 = scmp.ne.s32.totalorder %s205, %s206
      %p218 = scmp.eq.s32.totalorder %s28, 1
      %p219 = por %p217, %p218
      %p221 = scmp.ne.s32.totalorder %s206, %s220
      %p222 = scmp.eq.s32.totalorder %s28, 0
      %p223 = por %p221, %p222
      %s225 = sadd.s32 %s224, 1
      %p228 = scmp.eq.s32.totalorder %s22, 1
      %p229 = scmp.ne.s32.totalorder %s224, %s226
      %p230 = scmp.eq.s32.totalorder %s22, 0
      %p231 = por %p229, %p230
      %p232 = scmp.ne.s32.totalorder %s224, %s226
      %p233 = scmp.eq.s32.totalorder %s27, 1
      %p234 = por %p232, %p233
      %p235 = scmp.ne.s32.totalorder %s226, %s227
      %p236 = scmp.eq.s32.totalorder %s27, 0
      %p237 = por %p235, %p236
      %p238 = scmp.ne.s32.totalorder %s226, %s227
      %p239 = scmp.eq.s32.totalorder %s28, 1
      %p240 = por %p238, %p239
      %p242 = scmp.ne.s32.totalorder %s227, %s241
      %p243 = scmp.eq.s32.totalorder %s28, 0
      %p244 = por %p242, %p243
      %s246 = sadd.s32 %s245, 1
      %p249 = scmp.eq.s32.totalorder %s22, 1
      %p250 = scmp.ne.s32.totalorder %s245, %s247
      %p251 = scmp.eq.s32.totalorder %s22, 0
      %p252 = por %p250, %p251
      %p253 = scmp.ne.s32.totalorder %s245, %s247
      %p254 = scmp.eq.s32.totalorder %s27, 1
      %p255 = por %p253, %p254
      %p256 = scmp.ne.s32.totalorder %s247, %s248
      %p257 = scmp.eq.s32.totalorder %s27, 0
      %p258 = por %p256, %p257
      %p259 = scmp.ne.s32.totalorder %s247, %s248
      %p260 = scmp.eq.s32.totalorder %s28, 1
      %p261 = por %p259, %p260
      %p263 = scmp.ne.s32.totalorder %s248, %s262
      %p264 = scmp.eq.s32.totalorder %s28, 0
      %p265 = por %p263, %p264
      %s267 = sadd.s32 %s266, 1
      %p270 = scmp.eq.s32.totalorder %s22, 1
      %p271 = scmp.ne.s32.totalorder %s266, %s268
      %p272 = scmp.eq.s32.totalorder %s22, 0
      %p273 = por %p271, %p272
      %p274 = scmp.ne.s32.totalorder %s266, %s268
      %p275 = scmp.eq.s32.totalorder %s27, 1
      %p276 = por %p274, %p275
      %p277 = scmp.ne.s32.totalorder %s268, %s269
      %p278 = scmp.eq.s32.totalorder %s27, 0
      %p279 = por %p277, %p278
      %p280 = scmp.ne.s32.totalorder %s268, %s269
      %p281 = scmp.eq.s32.totalorder %s28, 1
      %p282 = por %p280, %p281
      %p284 = scmp.ne.s32.totalorder %s269, %s283
      %p285 = scmp.eq.s32.totalorder %s28, 0
      %p286 = por %p284, %p285
      %s288 = sadd.s32 %s287, 1
      %p291 = scmp.eq.s32.totalorder %s22, 1
      %p292 = scmp.ne.s32.totalorder %s287, %s289
      %p293 = scmp.eq.s32.totalorder %s22, 0
      %p294 = por %p292, %p293
      %p295 = scmp.ne.s32.totalorder %s287, %s289
      %p296 = scmp.eq.s32.totalorder %s27, 1
      %p297 = por %p295, %p296
      %p298 = scmp.ne.s32.totalorder %s289, %s290
      %p299 = scmp.eq.s32.totalorder %s27, 0
      %p300 = por %p298, %p299
      %p301 = scmp.ne.s32.totalorder %s289, %s290
      %p302 = scmp.eq.s32.totalorder %s28, 1
      %p303 = por %p301, %p302
      %p305 = scmp.ne.s32.totalorder %s290, %s304
      %p306 = scmp.eq.s32.totalorder %s28, 0
      %p307 = por %p305, %p306
      %s308 = ssub.s32 %s22, %s29
      %p309 = scmp.eq.s32.totalorder %s308, 0
      %s311 = sadd.s32 %s310, 1
      %s312 = scalar_select %p309, %s310, %s311
      %p315 = pneg %p309
      %p316 = scmp.eq.s32.totalorder %s22, 1
      %p317 = por %p315, %p316
      %p318 = scmp.ne.s32.totalorder %s310, %s313
      %p319 = scmp.eq.s32.totalorder %s22, 0
      %p320 = por %p318, %p319
      %p321 = scmp.ne.s32.totalorder %s310, %s313
      %p322 = scmp.eq.s32.totalorder %s27, 1
      %p323 = por %p321, %p322
      %p324 = scmp.ne.s32.totalorder %s313, %s314
      %p325 = scmp.eq.s32.totalorder %s27, 0
      %p326 = por %p324, %p325
      %p327 = scmp.ne.s32.totalorder %s313, %s314
      %p328 = scmp.eq.s32.totalorder %s28, 1
      %p329 = por %p327, %p328
      %p331 = scmp.ne.s32.totalorder %s314, %s330
      %p332 = scmp.eq.s32.totalorder %s28, 0
      %p333 = por %p331, %p332
      %p334 = scmp.le.s32.totalorder 1, %s22
      %p335 = scmp.lt.s32.totalorder %s22, 3
      %p336 = pnand %p334, %p335
      %p337 = pneg %p336
      // Predicated region
      $region9: #{global_attention_repvit_block.1} parent=5 // pred_check
        _
      $region10: #{global_attention_repvit_block.1} parent=5 // pred_check_branch
        %339 = sbr.rel (%p336) target = $region12
      $region11: #{global_attention_repvit_block.1} parent=5 // pred_region
        %s340 = ssub.s32 %s22, 1
        // Predicated region
        $region13: #{global_attention_repvit_block.1} parent=11 // pred_check
          %p341 = pneg %p69
        $region14: #{global_attention_repvit_block.1} parent=11 // pred_check_branch
          %343 = sbr.rel (%p341) target = $region16
        $region15: #{global_attention_repvit_block.1} parent=11 // pred_region
          _
        $region16: #{global_attention_repvit_block.1} parent=11 // pred_fallthru
          _
        // Predicated region
        $region17: #{global_attention_repvit_block.1} parent=11 // pred_check
          %p344 = pneg %p90
        $region18: #{global_attention_repvit_block.1} parent=11 // pred_check_branch
          %346 = sbr.rel (%p344) target = $region20
        $region19: #{global_attention_repvit_block.1} parent=11 // pred_region
          _
        $region20: #{global_attention_repvit_block.1} parent=11 // pred_fallthru
          _
        // Predicated region
        $region21: #{global_attention_repvit_block.1} parent=11 // pred_check
          %p347 = pneg %p111
        $region22: #{global_attention_repvit_block.1} parent=11 // pred_check_branch
          %349 = sbr.rel (%p347) target = $region24
        $region23: #{global_attention_repvit_block.1} parent=11 // pred_region
          _
        $region24: #{global_attention_repvit_block.1} parent=11 // pred_fallthru
          _
        // Predicated region
        $region25: #{global_attention_repvit_block.1} parent=11 // pred_check
          %p350 = pneg %p132
        $region26: #{global_attention_repvit_block.1} parent=11 // pred_check_branch
          %352 = sbr.rel (%p350) target = $region28
        $region27: #{global_attention_repvit_block.1} parent=11 // pred_region
          _
        $region28: #{global_attention_repvit_block.1} parent=11 // pred_fallthru
          _
        // Predicated region
        $region29: #{global_attention_repvit_block.1} parent=11 // pred_check
          %p353 = pneg %p153
        $region30: #{global_attention_repvit_block.1} parent=11 // pred_check_branch
          %355 = sbr.rel (%p353) target = $region32
        $region31: #{global_attention_repvit_block.1} parent=11 // pred_region
          _
        $region32: #{global_attention_repvit_block.1} parent=11 // pred_fallthru
          _
        // Predicated region
        $region33: #{global_attention_repvit_block.1} parent=11 // pred_check
          %p356 = pneg %p174
        $region34: #{global_attention_repvit_block.1} parent=11 // pred_check_branch
          %358 = sbr.rel (%p356) target = $region36
        $region35: #{global_attention_repvit_block.1} parent=11 // pred_region
          _
        $region36: #{global_attention_repvit_block.1} parent=11 // pred_fallthru
          _
        // Predicated region
        $region37: #{global_attention_repvit_block.1} parent=11 // pred_check
          %p359 = pneg %p195
        $region38: #{global_attention_repvit_block.1} parent=11 // pred_check_branch
          %361 = sbr.rel (%p359) target = $region40
        $region39: #{global_attention_repvit_block.1} parent=11 // pred_region
          _
        $region40: #{global_attention_repvit_block.1} parent=11 // pred_fallthru
          _
        // Predicated region
        $region41: #{global_attention_repvit_block.1} parent=11 // pred_check
          %p362 = pneg %p216
        $region42: #{global_attention_repvit_block.1} parent=11 // pred_check_branch
          %364 = sbr.rel (%p362) target = $region44
        $region43: #{global_attention_repvit_block.1} parent=11 // pred_region
          _
        $region44: #{global_attention_repvit_block.1} parent=11 // pred_fallthru
          _
        // Predicated region
        $region45: #{global_attention_repvit_block.1} parent=11 // pred_check
          %p365 = pneg %p237
        $region46: #{global_attention_repvit_block.1} parent=11 // pred_check_branch
          %367 = sbr.rel (%p365) target = $region48
        $region47: #{global_attention_repvit_block.1} parent=11 // pred_region
          _
        $region48: #{global_attention_repvit_block.1} parent=11 // pred_fallthru
          _
        // Predicated region
        $region49: #{global_attention_repvit_block.1} parent=11 // pred_check
          %p368 = pneg %p258
        $region50: #{global_attention_repvit_block.1} parent=11 // pred_check_branch
          %370 = sbr.rel (%p368) target = $region52
        $region51: #{global_attention_repvit_block.1} parent=11 // pred_region
          _
        $region52: #{global_attention_repvit_block.1} parent=11 // pred_fallthru
          _
        // Predicated region
        $region53: #{global_attention_repvit_block.1} parent=11 // pred_check
          %p371 = pneg %p279
        $region54: #{global_attention_repvit_block.1} parent=11 // pred_check_branch
          %373 = sbr.rel (%p371) target = $region56
        $region55: #{global_attention_repvit_block.1} parent=11 // pred_region
          _
        $region56: #{global_attention_repvit_block.1} parent=11 // pred_fallthru
          _
        // Predicated region
        $region57: #{global_attention_repvit_block.1} parent=11 // pred_check
          %p374 = pneg %p300
        $region58: #{global_attention_repvit_block.1} parent=11 // pred_check_branch
          %376 = sbr.rel (%p374) target = $region60
        $region59: #{global_attention_repvit_block.1} parent=11 // pred_region
          _
        $region60: #{global_attention_repvit_block.1} parent=11 // pred_fallthru
          _
      $region12: #{global_attention_repvit_block.1} parent=5 // pred_fallthru
        _
      %p377 = scmp.lt.s32.totalorder %s22, 2
      // Predicated region
      $region61: #{global_attention_repvit_block.1} parent=5 // pred_check
        %p378 = pneg %p377
      $region62: #{global_attention_repvit_block.1} parent=5 // pred_check_branch
        %380 = sbr.rel (%p378) target = $region64
      $region63: #{global_attention_repvit_block.1} parent=5 // pred_region
        // Predicated region
        $region65: #{global_attention_repvit_block.1} parent=63 // pred_check
          %p381 = pneg %p42
        $region66: #{global_attention_repvit_block.1} parent=63 // pred_check_branch
          %383 = sbr.rel (%p381) target = $region68
        $region67: #{global_attention_repvit_block.1} parent=63 // pred_region
          %s384 = smul.u32 4, %s22
          %p385 = scmp.lt.s32.totalorder %s384, 7
          %s386 = scalar_select %p385, %s384, 7
          %s387 = smul.addr %s386, 36
          %s388 = smul.addr %s387, 8
          %s389 = scalar_lea.vmem %s0, %s388
          %s390 = smul.u32 4, %s22
        $region68: #{global_attention_repvit_block.1} parent=63 // pred_fallthru
          _
      $region64: #{global_attention_repvit_block.1} parent=5 // pred_fallthru
        _
      %p391 = scmp.le.s32.totalorder 1, %s22
      %p392 = scmp.lt.s32.totalorder %s22, 3
      %p393 = pnand %p391, %p392
      %p394 = pneg %p393
      // Predicated region
      $region69: #{global_attention_repvit_block.1} parent=5 // pred_check
        _
      $region70: #{global_attention_repvit_block.1} parent=5 // pred_check_branch
        %396 = sbr.rel (%p393) target = $region72
      $region71: #{global_attention_repvit_block.1} parent=5 // pred_region
        %s397 = ssub.s32 %s22, 1
        %s398 = smul.u32 4, %s27
        %p399 = scmp.lt.s32.totalorder %s398, 7
        %s400 = scalar_select %p399, %s398, 7
        %s401 = smul.addr %s400, 36
        %s402 = smul.addr %s401, 8
        %s403 = scalar_lea.vmem %s0, %s402
        %p404 = pneg %p48
        %p405 = pneg %p45
        %p406 = pneg %p69
        %p407 = pneg %p66
        %p408 = pneg %p90
        %p409 = pneg %p87
        %p410 = pneg %p111
        %p411 = pneg %p108
        %p412 = pneg %p132
        %p413 = pneg %p129
        %p414 = pneg %p153
        %p415 = pneg %p150
        %p416 = pneg %p174
        %p417 = pneg %p171
        %p418 = pneg %p195
        %p419 = pneg %p192
        %p420 = pneg %p216
        %p421 = pneg %p213
        %p422 = pneg %p237
        %p423 = pneg %p234
        %p424 = pneg %p258
        %p425 = pneg %p255
        %p426 = pneg %p279
        %p427 = pneg %p276
        %p428 = pneg %p300
        %p429 = pneg %p297
        %p430 = pneg %p326
        %p431 = pneg %p323
        %s432 = sand.u32 %s313, 1
        %s433 = scalar_lea.sflag [#allocation3], %s432
        %s434 = sand.u32 %s313, 1
        %s435 = smul.addr %s434, 256
        %s436 = scalar_lea.vmem [#allocation2], %s435
        %s437 = smul.u32 4, %s27
        %p438 = scmp.lt.s32.totalorder %s437, 7
        %s439 = scalar_select %p438, %s437, 7
        %s440 = smul.addr %s439, 36
        %s441 = smul.addr %s440, 8
        %s442 = scalar_lea.vmem %s0, %s441
        %s443 = smul.u32 4, %s27
        %s444 = smul.u32 4, %s27
        %v445 = vld [vmem:[%s1] sm:$0xff]
        %v446 = vld [vmem:[%s1 + $0x8] sm:$0x1]
        %v447 = vld [vmem:[%s442] sm:$0xff]
        %v448 = vld [vmem:[%s442 + $0x20] sm:$0xff]
        %v449 = vld [vmem:[%s442 + $0x40] sm:$0xff]
        %v450 = vld [vmem:[%s442 + $0x60] sm:$0xff]
        %v451 = vld [vmem:[%s442 + $0x80] sm:$0xff]
        %v452 = vld [vmem:[%s442 + $0xa0] sm:$0xff]
        %v453 = vld [vmem:[%s442 + $0xc0] sm:$0xff]
        %v454 = vld [vmem:[%s442 + $0xe0] sm:$0xff]
        %v455 = vld [vmem:[%s442 + $0x120] sm:$0xff]
        %v456 = vld [vmem:[%s442 + $0x140] sm:$0xff]
        %v457 = vld [vmem:[%s442 + $0x160] sm:$0xff]
        %v458 = vld [vmem:[%s442 + $0x180] sm:$0xff]
        %v459 = vld [vmem:[%s442 + $0x1a0] sm:$0xff]
        %v460 = vld [vmem:[%s442 + $0x1c0] sm:$0xff]
        %v461 = vld [vmem:[%s442 + $0x1e0] sm:$0xff]
        %v462 = vld [vmem:[%s442 + $0x200] sm:$0xff]
        %v463 = vld [vmem:[%s442 + $0x240] sm:$0xff]
        %v464 = vld [vmem:[%s442 + $0x260] sm:$0xff]
        %v465 = vld [vmem:[%s442 + $0x280] sm:$0xff]
        %v466 = vld [vmem:[%s442 + $0x2a0] sm:$0xff]
        %v467 = vld [vmem:[%s442 + $0x2c0] sm:$0xff]
        %v468 = vld [vmem:[%s442 + $0x2e0] sm:$0xff]
        %v469 = vld [vmem:[%s442 + $0x300] sm:$0xff]
        %v470 = vld [vmem:[%s442 + $0x320] sm:$0xff]
        %v471 = vld [vmem:[%s442 + $0x360] sm:$0xff]
        %v472 = vld [vmem:[%s442 + $0x380] sm:$0xff]
        %v473 = vld [vmem:[%s442 + $0x3a0] sm:$0xff]
        %v474 = vld [vmem:[%s442 + $0x3c0] sm:$0xff]
        %v475 = vld [vmem:[%s442 + $0x3e0] sm:$0xff]
        %v476 = vld [vmem:[%s442 + $0x400] sm:$0xff]
        %v477 = vld [vmem:[%s442 + $0x420] sm:$0xff]
        %v478 = vld [vmem:[%s442 + $0x440] sm:$0xff]
        %v479 = vlaneseq
        %v480 = vshrl.u32 %v479, 7
        %v481 = vsub.s32 0, %v480
        %v482 = vrot.slane %v445, %v481
        %v483 = vmul.f32 %v447, %v482
        %v484 = vmul.f32 %v448, %v482
        %v485 = vmul.f32 %v449, %v482
        %v486 = vmul.f32 %v450, %v482
        %v487 = vmul.f32 %v451, %v482
        %v488 = vmul.f32 %v452, %v482
        %v489 = vmul.f32 %v453, %v482
        %v490 = vmul.f32 %v454, %v482
        %v491 = vmul.f32 %v455, %v482
        %v492 = vmul.f32 %v456, %v482
        %v493 = vmul.f32 %v457, %v482
        %v494 = vmul.f32 %v458, %v482
        %v495 = vmul.f32 %v459, %v482
        %v496 = vmul.f32 %v460, %v482
        %v497 = vmul.f32 %v461, %v482
        %v498 = vmul.f32 %v462, %v482
        %v499 = vmul.f32 %v463, %v482
        %v500 = vmul.f32 %v464, %v482
        %v501 = vmul.f32 %v465, %v482
        %v502 = vmul.f32 %v466, %v482
        %v503 = vmul.f32 %v467, %v482
        %v504 = vmul.f32 %v468, %v482
        %v505 = vmul.f32 %v469, %v482
        %v506 = vmul.f32 %v470, %v482
        %v507 = vmul.f32 %v471, %v482
        %v508 = vmul.f32 %v472, %v482
        %v509 = vmul.f32 %v473, %v482
        %v510 = vmul.f32 %v474, %v482
        %v511 = vmul.f32 %v475, %v482
        %v512 = vmul.f32 %v476, %v482
        %v513 = vmul.f32 %v477, %v482
        %v514 = vmul.f32 %v478, %v482
        %v515 = vadd.f32 %v483, 0.0
        %v516 = vadd.f32 %v484, 0.0
        %v517 = vadd.f32 %v485, 0.0
        %v518 = vadd.f32 %v486, 0.0
        %v519 = vadd.f32 %v487, 0.0
        %v520 = vadd.f32 %v488, 0.0
        %v521 = vadd.f32 %v489, 0.0
        %v522 = vadd.f32 %v490, 0.0
        %v523 = vadd.f32 %v491, 0.0
        %v524 = vadd.f32 %v492, 0.0
        %v525 = vadd.f32 %v493, 0.0
        %v526 = vadd.f32 %v494, 0.0
        %v527 = vadd.f32 %v495, 0.0
        %v528 = vadd.f32 %v496, 0.0
        %v529 = vadd.f32 %v497, 0.0
        %v530 = vadd.f32 %v498, 0.0
        %v531 = vadd.f32 %v499, 0.0
        %v532 = vadd.f32 %v500, 0.0
        %v533 = vadd.f32 %v501, 0.0
        %v534 = vadd.f32 %v502, 0.0
        %v535 = vadd.f32 %v503, 0.0
        %v536 = vadd.f32 %v504, 0.0
        %v537 = vadd.f32 %v505, 0.0
        %v538 = vadd.f32 %v506, 0.0
        %v539 = vadd.f32 %v507, 0.0
        %v540 = vadd.f32 %v508, 0.0
        %v541 = vadd.f32 %v509, 0.0
        %v542 = vadd.f32 %v510, 0.0
        %v543 = vadd.f32 %v511, 0.0
        %v544 = vadd.f32 %v512, 0.0
        %v545 = vadd.f32 %v513, 0.0
        %v546 = vadd.f32 %v514, 0.0
        %v547 = vlaneseq
        %v548 = vshrl.u32 %v547, 7
        %v549 = vsub.s32 1, %v548
        %v550 = vrot.slane %v445, %v549
        %552 = vrot.lane.b32.xlu0 %v550, 16
        %v553 = vpop.permute.xlu0 %552
        %v555 = vmul.f32 %v447, %v553
        %v556 = vmul.f32 %v448, %v553
        %v557 = vmul.f32 %v449, %v553
        %v558 = vmul.f32 %v450, %v553
        %v559 = vmul.f32 %v451, %v553
        %v560 = vmul.f32 %v452, %v553
        %v561 = vmul.f32 %v453, %v553
        %v562 = vmul.f32 %v454, %v553
        %v563 = vmul.f32 %v455, %v553
        %v564 = vmul.f32 %v456, %v553
        %v565 = vmul.f32 %v457, %v553
        %v566 = vmul.f32 %v458, %v553
        %v567 = vmul.f32 %v459, %v553
        %v568 = vmul.f32 %v460, %v553
        %v569 = vmul.f32 %v461, %v553
        %v570 = vmul.f32 %v462, %v553
        %v571 = vmul.f32 %v463, %v553
        %v572 = vmul.f32 %v464, %v553
        %v573 = vmul.f32 %v465, %v553
        %v574 = vmul.f32 %v466, %v553
        %v575 = vmul.f32 %v467, %v553
        %v576 = vmul.f32 %v468, %v553
        %v577 = vmul.f32 %v469, %v553
        %v578 = vmul.f32 %v470, %v553
        %v579 = vmul.f32 %v471, %v553
        %v580 = vmul.f32 %v472, %v553
        %v581 = vmul.f32 %v473, %v553
        %v582 = vmul.f32 %v474, %v553
        %v583 = vmul.f32 %v475, %v553
        %v584 = vmul.f32 %v476, %v553
        %v585 = vmul.f32 %v477, %v553
        %v586 = vmul.f32 %v478, %v553
        %619 = vrot.lane.b32.xlu0 %v555, 112
        %v620 = vpop.permute.xlu0 %619
        %621 = vrot.lane.b32.xlu0 %v556, 112
        %v622 = vpop.permute.xlu0 %621
        %623 = vrot.lane.b32.xlu0 %v557, 112
        %v624 = vpop.permute.xlu0 %623
        %625 = vrot.lane.b32.xlu0 %v558, 112
        %v626 = vpop.permute.xlu0 %625
        %627 = vrot.lane.b32.xlu0 %v559, 112
        %v628 = vpop.permute.xlu0 %627
        %629 = vrot.lane.b32.xlu0 %v560, 112
        %v630 = vpop.permute.xlu0 %629
        %631 = vrot.lane.b32.xlu0 %v561, 112
        %v632 = vpop.permute.xlu0 %631
        %633 = vrot.lane.b32.xlu0 %v562, 112
        %v634 = vpop.permute.xlu0 %633
        %635 = vrot.lane.b32.xlu0 %v563, 112
        %v636 = vpop.permute.xlu0 %635
        %637 = vrot.lane.b32.xlu0 %v564, 112
        %v638 = vpop.permute.xlu0 %637
        %639 = vrot.lane.b32.xlu0 %v565, 112
        %v640 = vpop.permute.xlu0 %639
        %641 = vrot.lane.b32.xlu0 %v566, 112
        %v642 = vpop.permute.xlu0 %641
        %643 = vrot.lane.b32.xlu0 %v567, 112
        %v644 = vpop.permute.xlu0 %643
        %645 = vrot.lane.b32.xlu0 %v568, 112
        %v646 = vpop.permute.xlu0 %645
        %647 = vrot.lane.b32.xlu0 %v569, 112
        %v648 = vpop.permute.xlu0 %647
        %649 = vrot.lane.b32.xlu0 %v570, 112
        %v650 = vpop.permute.xlu0 %649
        %651 = vrot.lane.b32.xlu0 %v571, 112
        %v652 = vpop.permute.xlu0 %651
        %653 = vrot.lane.b32.xlu0 %v572, 112
        %v654 = vpop.permute.xlu0 %653
        %655 = vrot.lane.b32.xlu0 %v573, 112
        %v656 = vpop.permute.xlu0 %655
        %657 = vrot.lane.b32.xlu0 %v574, 112
        %v658 = vpop.permute.xlu0 %657
        %659 = vrot.lane.b32.xlu0 %v575, 112
        %v660 = vpop.permute.xlu0 %659
        %661 = vrot.lane.b32.xlu0 %v576, 112
        %v662 = vpop.permute.xlu0 %661
        %663 = vrot.lane.b32.xlu0 %v577, 112
        %v664 = vpop.permute.xlu0 %663
        %665 = vrot.lane.b32.xlu0 %v578, 112
        %v666 = vpop.permute.xlu0 %665
        %667 = vrot.lane.b32.xlu0 %v579, 112
        %v668 = vpop.permute.xlu0 %667
        %669 = vrot.lane.b32.xlu0 %v580, 112
        %v670 = vpop.permute.xlu0 %669
        %671 = vrot.lane.b32.xlu0 %v581, 112
        %v672 = vpop.permute.xlu0 %671
        %673 = vrot.lane.b32.xlu0 %v582, 112
        %v674 = vpop.permute.xlu0 %673
        %675 = vrot.lane.b32.xlu0 %v583, 112
        %v676 = vpop.permute.xlu0 %675
        %677 = vrot.lane.b32.xlu0 %v584, 112
        %v678 = vpop.permute.xlu0 %677
        %679 = vrot.lane.b32.xlu0 %v585, 112
        %v680 = vpop.permute.xlu0 %679
        %681 = vrot.lane.b32.xlu0 %v586, 112
        %v682 = vpop.permute.xlu0 %681
        %v715 = vadd.f32 %v515, %v620
        %v716 = vadd.f32 %v516, %v622
        %v717 = vadd.f32 %v517, %v624
        %v718 = vadd.f32 %v518, %v626
        %v719 = vadd.f32 %v519, %v628
        %v720 = vadd.f32 %v520, %v630
        %v721 = vadd.f32 %v521, %v632
        %v722 = vadd.f32 %v522, %v634
        %v723 = vadd.f32 %v523, %v636
        %v724 = vadd.f32 %v524, %v638
        %v725 = vadd.f32 %v525, %v640
        %v726 = vadd.f32 %v526, %v642
        %v727 = vadd.f32 %v527, %v644
        %v728 = vadd.f32 %v528, %v646
        %v729 = vadd.f32 %v529, %v648
        %v730 = vadd.f32 %v530, %v650
        %v731 = vadd.f32 %v531, %v652
        %v732 = vadd.f32 %v532, %v654
        %v733 = vadd.f32 %v533, %v656
        %v734 = vadd.f32 %v534, %v658
        %v735 = vadd.f32 %v535, %v660
        %v736 = vadd.f32 %v536, %v662
        %v737 = vadd.f32 %v537, %v664
        %v738 = vadd.f32 %v538, %v666
        %v739 = vadd.f32 %v539, %v668
        %v740 = vadd.f32 %v540, %v670
        %v741 = vadd.f32 %v541, %v672
        %v742 = vadd.f32 %v542, %v674
        %v743 = vadd.f32 %v543, %v676
        %v744 = vadd.f32 %v544, %v678
        %v745 = vadd.f32 %v545, %v680
        %v746 = vadd.f32 %v546, %v682
        %v747 = vld [vmem:[%s442 + $0x1] sm:$0xff]
        %v748 = vld [vmem:[%s442 + $0x21] sm:$0xff]
        %v749 = vld [vmem:[%s442 + $0x41] sm:$0xff]
        %v750 = vld [vmem:[%s442 + $0x61] sm:$0xff]
        %v751 = vld [vmem:[%s442 + $0x81] sm:$0xff]
        %v752 = vld [vmem:[%s442 + $0xa1] sm:$0xff]
        %v753 = vld [vmem:[%s442 + $0xc1] sm:$0xff]
        %v754 = vld [vmem:[%s442 + $0xe1] sm:$0xff]
        %v755 = vld [vmem:[%s442 + $0x121] sm:$0xff]
        %v756 = vld [vmem:[%s442 + $0x141] sm:$0xff]
        %v757 = vld [vmem:[%s442 + $0x161] sm:$0xff]
        %v758 = vld [vmem:[%s442 + $0x181] sm:$0xff]
        %v759 = vld [vmem:[%s442 + $0x1a1] sm:$0xff]
        %v760 = vld [vmem:[%s442 + $0x1c1] sm:$0xff]
        %v761 = vld [vmem:[%s442 + $0x1e1] sm:$0xff]
        %v762 = vld [vmem:[%s442 + $0x201] sm:$0xff]
        %v763 = vld [vmem:[%s442 + $0x241] sm:$0xff]
        %v764 = vld [vmem:[%s442 + $0x261] sm:$0xff]
        %v765 = vld [vmem:[%s442 + $0x281] sm:$0xff]
        %v766 = vld [vmem:[%s442 + $0x2a1] sm:$0xff]
        %v767 = vld [vmem:[%s442 + $0x2c1] sm:$0xff]
        %v768 = vld [vmem:[%s442 + $0x2e1] sm:$0xff]
        %v769 = vld [vmem:[%s442 + $0x301] sm:$0xff]
        %v770 = vld [vmem:[%s442 + $0x321] sm:$0xff]
        %v771 = vld [vmem:[%s442 + $0x361] sm:$0xff]
        %v772 = vld [vmem:[%s442 + $0x381] sm:$0xff]
        %v773 = vld [vmem:[%s442 + $0x3a1] sm:$0xff]
        %v774 = vld [vmem:[%s442 + $0x3c1] sm:$0xff]
        %v775 = vld [vmem:[%s442 + $0x3e1] sm:$0xff]
        %v776 = vld [vmem:[%s442 + $0x401] sm:$0xff]
        %v777 = vld [vmem:[%s442 + $0x421] sm:$0xff]
        %v778 = vld [vmem:[%s442 + $0x441] sm:$0xff]
        %v779 = vlaneseq
        %v780 = vshrl.u32 %v779, 7
        %v781 = vsub.s32 2, %v780
        %v782 = vrot.slane %v445, %v781
        %v783 = vmul.f32 %v747, %v782
        %v784 = vmul.f32 %v748, %v782
        %v785 = vmul.f32 %v749, %v782
        %v786 = vmul.f32 %v750, %v782
        %v787 = vmul.f32 %v751, %v782
        %v788 = vmul.f32 %v752, %v782
        %v789 = vmul.f32 %v753, %v782
        %v790 = vmul.f32 %v754, %v782
        %v791 = vmul.f32 %v755, %v782
        %v792 = vmul.f32 %v756, %v782
        %v793 = vmul.f32 %v757, %v782
        %v794 = vmul.f32 %v758, %v782
        %v795 = vmul.f32 %v759, %v782
        %v796 = vmul.f32 %v760, %v782
        %v797 = vmul.f32 %v761, %v782
        %v798 = vmul.f32 %v762, %v782
        %v799 = vmul.f32 %v763, %v782
        %v800 = vmul.f32 %v764, %v782
        %v801 = vmul.f32 %v765, %v782
        %v802 = vmul.f32 %v766, %v782
        %v803 = vmul.f32 %v767, %v782
        %v804 = vmul.f32 %v768, %v782
        %v805 = vmul.f32 %v769, %v782
        %v806 = vmul.f32 %v770, %v782
        %v807 = vmul.f32 %v771, %v782
        %v808 = vmul.f32 %v772, %v782
        %v809 = vmul.f32 %v773, %v782
        %v810 = vmul.f32 %v774, %v782
        %v811 = vmul.f32 %v775, %v782
        %v812 = vmul.f32 %v776, %v782
        %v813 = vmul.f32 %v777, %v782
        %v814 = vmul.f32 %v778, %v782
        %v815 = vadd.f32 %v715, %v783
        %v816 = vadd.f32 %v716, %v784
        %v817 = vadd.f32 %v717, %v785
        %v818 = vadd.f32 %v718, %v786
        %v819 = vadd.f32 %v719, %v787
        %v820 = vadd.f32 %v720, %v788
        %v821 = vadd.f32 %v721, %v789
        %v822 = vadd.f32 %v722, %v790
        %v823 = vadd.f32 %v723, %v791
        %v824 = vadd.f32 %v724, %v792
        %v825 = vadd.f32 %v725, %v793
        %v826 = vadd.f32 %v726, %v794
        %v827 = vadd.f32 %v727, %v795
        %v828 = vadd.f32 %v728, %v796
        %v829 = vadd.f32 %v729, %v797
        %v830 = vadd.f32 %v730, %v798
        %v831 = vadd.f32 %v731, %v799
        %v832 = vadd.f32 %v732, %v800
        %v833 = vadd.f32 %v733, %v801
        %v834 = vadd.f32 %v734, %v802
        %v835 = vadd.f32 %v735, %v803
        %v836 = vadd.f32 %v736, %v804
        %v837 = vadd.f32 %v737, %v805
        %v838 = vadd.f32 %v738, %v806
        %v839 = vadd.f32 %v739, %v807
        %v840 = vadd.f32 %v740, %v808
        %v841 = vadd.f32 %v741, %v809
        %v842 = vadd.f32 %v742, %v810
        %v843 = vadd.f32 %v743, %v811
        %v844 = vadd.f32 %v744, %v812
        %v845 = vadd.f32 %v745, %v813
        %v846 = vadd.f32 %v746, %v814
        %s847 = scalar_lea.vmem %s442, 16
        %v848 = vld [vmem:[%s847] sm:$0xff]
        %v849 = vld [vmem:[%s847 + $0x20] sm:$0xff]
        %v850 = vld [vmem:[%s847 + $0x40] sm:$0xff]
        %v851 = vld [vmem:[%s847 + $0x60] sm:$0xff]
        %v852 = vld [vmem:[%s847 + $0x80] sm:$0xff]
        %v853 = vld [vmem:[%s847 + $0xa0] sm:$0xff]
        %v854 = vld [vmem:[%s847 + $0xc0] sm:$0xff]
        %v855 = vld [vmem:[%s847 + $0xe0] sm:$0xff]
        %v856 = vld [vmem:[%s847 + $0x120] sm:$0xff]
        %v857 = vld [vmem:[%s847 + $0x140] sm:$0xff]
        %v858 = vld [vmem:[%s847 + $0x160] sm:$0xff]
        %v859 = vld [vmem:[%s847 + $0x180] sm:$0xff]
        %v860 = vld [vmem:[%s847 + $0x1a0] sm:$0xff]
        %v861 = vld [vmem:[%s847 + $0x1c0] sm:$0xff]
        %v862 = vld [vmem:[%s847 + $0x1e0] sm:$0xff]
        %v863 = vld [vmem:[%s847 + $0x200] sm:$0xff]
        %v864 = vld [vmem:[%s847 + $0x240] sm:$0xff]
        %v865 = vld [vmem:[%s847 + $0x260] sm:$0xff]
        %v866 = vld [vmem:[%s847 + $0x280] sm:$0xff]
        %v867 = vld [vmem:[%s847 + $0x2a0] sm:$0xff]
        %v868 = vld [vmem:[%s847 + $0x2c0] sm:$0xff]
        %v869 = vld [vmem:[%s847 + $0x2e0] sm:$0xff]
        %v870 = vld [vmem:[%s847 + $0x300] sm:$0xff]
        %v871 = vld [vmem:[%s847 + $0x320] sm:$0xff]
        %v872 = vld [vmem:[%s847 + $0x360] sm:$0xff]
        %v873 = vld [vmem:[%s847 + $0x380] sm:$0xff]
        %v874 = vld [vmem:[%s847 + $0x3a0] sm:$0xff]
        %v875 = vld [vmem:[%s847 + $0x3c0] sm:$0xff]
        %v876 = vld [vmem:[%s847 + $0x3e0] sm:$0xff]
        %v877 = vld [vmem:[%s847 + $0x400] sm:$0xff]
        %v878 = vld [vmem:[%s847 + $0x420] sm:$0xff]
        %v879 = vld [vmem:[%s847 + $0x440] sm:$0xff]
        %v880 = vlaneseq
        %v881 = vshrl.u32 %v880, 7
        %v882 = vsub.s32 3, %v881
        %v883 = vrot.slane %v445, %v882
        %v884 = vmul.f32 %v848, %v883
        %v885 = vmul.f32 %v849, %v883
        %v886 = vmul.f32 %v850, %v883
        %v887 = vmul.f32 %v851, %v883
        %v888 = vmul.f32 %v852, %v883
        %v889 = vmul.f32 %v853, %v883
        %v890 = vmul.f32 %v854, %v883
        %v891 = vmul.f32 %v855, %v883
        %v892 = vmul.f32 %v856, %v883
        %v893 = vmul.f32 %v857, %v883
        %v894 = vmul.f32 %v858, %v883
        %v895 = vmul.f32 %v859, %v883
        %v896 = vmul.f32 %v860, %v883
        %v897 = vmul.f32 %v861, %v883
        %v898 = vmul.f32 %v862, %v883
        %v899 = vmul.f32 %v863, %v883
        %v900 = vmul.f32 %v864, %v883
        %v901 = vmul.f32 %v865, %v883
        %v902 = vmul.f32 %v866, %v883
        %v903 = vmul.f32 %v867, %v883
        %v904 = vmul.f32 %v868, %v883
        %v905 = vmul.f32 %v869, %v883
        %v906 = vmul.f32 %v870, %v883
        %v907 = vmul.f32 %v871, %v883
        %v908 = vmul.f32 %v872, %v883
        %v909 = vmul.f32 %v873, %v883
        %v910 = vmul.f32 %v874, %v883
        %v911 = vmul.f32 %v875, %v883
        %v912 = vmul.f32 %v876, %v883
        %v913 = vmul.f32 %v877, %v883
        %v914 = vmul.f32 %v878, %v883
        %v915 = vmul.f32 %v879, %v883
        %v916 = vadd.f32 %v815, %v884
        %v917 = vadd.f32 %v816, %v885
        %v918 = vadd.f32 %v817, %v886
        %v919 = vadd.f32 %v818, %v887
        %v920 = vadd.f32 %v819, %v888
        %v921 = vadd.f32 %v820, %v889
        %v922 = vadd.f32 %v821, %v890
        %v923 = vadd.f32 %v822, %v891
        %v924 = vadd.f32 %v823, %v892
        %v925 = vadd.f32 %v824, %v893
        %v926 = vadd.f32 %v825, %v894
        %v927 = vadd.f32 %v826, %v895
        %v928 = vadd.f32 %v827, %v896
        %v929 = vadd.f32 %v828, %v897
        %v930 = vadd.f32 %v829, %v898
        %v931 = vadd.f32 %v830, %v899
        %v932 = vadd.f32 %v831, %v900
        %v933 = vadd.f32 %v832, %v901
        %v934 = vadd.f32 %v833, %v902
        %v935 = vadd.f32 %v834, %v903
        %v936 = vadd.f32 %v835, %v904
        %v937 = vadd.f32 %v836, %v905
        %v938 = vadd.f32 %v837, %v906
        %v939 = vadd.f32 %v838, %v907
        %v940 = vadd.f32 %v839, %v908
        %v941 = vadd.f32 %v840, %v909
        %v942 = vadd.f32 %v841, %v910
        %v943 = vadd.f32 %v842, %v911
        %v944 = vadd.f32 %v843, %v912
        %v945 = vadd.f32 %v844, %v913
        %v946 = vadd.f32 %v845, %v914
        %v947 = vadd.f32 %v846, %v915
        %v948 = vlaneseq
        %v949 = vshrl.u32 %v948, 7
        %v950 = vsub.s32 4, %v949
        %v951 = vrot.slane %v445, %v950
        %953 = vrot.lane.b32.xlu0 %v951, 16
        %v954 = vpop.permute.xlu0 %953
        %v956 = vmul.f32 %v848, %v954
        %v957 = vmul.f32 %v849, %v954
        %v958 = vmul.f32 %v850, %v954
        %v959 = vmul.f32 %v851, %v954
        %v960 = vmul.f32 %v852, %v954
        %v961 = vmul.f32 %v853, %v954
        %v962 = vmul.f32 %v854, %v954
        %v963 = vmul.f32 %v855, %v954
        %v964 = vmul.f32 %v856, %v954
        %v965 = vmul.f32 %v857, %v954
        %v966 = vmul.f32 %v858, %v954
        %v967 = vmul.f32 %v859, %v954
        %v968 = vmul.f32 %v860, %v954
        %v969 = vmul.f32 %v861, %v954
        %v970 = vmul.f32 %v862, %v954
        %v971 = vmul.f32 %v863, %v954
        %v972 = vmul.f32 %v864, %v954
        %v973 = vmul.f32 %v865, %v954
        %v974 = vmul.f32 %v866, %v954
        %v975 = vmul.f32 %v867, %v954
        %v976 = vmul.f32 %v868, %v954
        %v977 = vmul.f32 %v869, %v954
        %v978 = vmul.f32 %v870, %v954
        %v979 = vmul.f32 %v871, %v954
        %v980 = vmul.f32 %v872, %v954
        %v981 = vmul.f32 %v873, %v954
        %v982 = vmul.f32 %v874, %v954
        %v983 = vmul.f32 %v875, %v954
        %v984 = vmul.f32 %v876, %v954
        %v985 = vmul.f32 %v877, %v954
        %v986 = vmul.f32 %v878, %v954
        %v987 = vmul.f32 %v879, %v954
        %1020 = vrot.lane.b32.xlu0 %v956, 112
        %v1021 = vpop.permute.xlu0 %1020
        %1022 = vrot.lane.b32.xlu0 %v957, 112
        %v1023 = vpop.permute.xlu0 %1022
        %1024 = vrot.lane.b32.xlu0 %v958, 112
        %v1025 = vpop.permute.xlu0 %1024
        %1026 = vrot.lane.b32.xlu0 %v959, 112
        %v1027 = vpop.permute.xlu0 %1026
        %1028 = vrot.lane.b32.xlu0 %v960, 112
        %v1029 = vpop.permute.xlu0 %1028
        %1030 = vrot.lane.b32.xlu0 %v961, 112
        %v1031 = vpop.permute.xlu0 %1030
        %1032 = vrot.lane.b32.xlu0 %v962, 112
        %v1033 = vpop.permute.xlu0 %1032
        %1034 = vrot.lane.b32.xlu0 %v963, 112
        %v1035 = vpop.permute.xlu0 %1034
        %1036 = vrot.lane.b32.xlu0 %v964, 112
        %v1037 = vpop.permute.xlu0 %1036
        %1038 = vrot.lane.b32.xlu0 %v965, 112
        %v1039 = vpop.permute.xlu0 %1038
        %1040 = vrot.lane.b32.xlu0 %v966, 112
        %v1041 = vpop.permute.xlu0 %1040
        %1042 = vrot.lane.b32.xlu0 %v967, 112
        %v1043 = vpop.permute.xlu0 %1042
        %1044 = vrot.lane.b32.xlu0 %v968, 112
        %v1045 = vpop.permute.xlu0 %1044
        %1046 = vrot.lane.b32.xlu0 %v969, 112
        %v1047 = vpop.permute.xlu0 %1046
        %1048 = vrot.lane.b32.xlu0 %v970, 112
        %v1049 = vpop.permute.xlu0 %1048
        %1050 = vrot.lane.b32.xlu0 %v971, 112
        %v1051 = vpop.permute.xlu0 %1050
        %1052 = vrot.lane.b32.xlu0 %v972, 112
        %v1053 = vpop.permute.xlu0 %1052
        %1054 = vrot.lane.b32.xlu0 %v973, 112
        %v1055 = vpop.permute.xlu0 %1054
        %1056 = vrot.lane.b32.xlu0 %v974, 112
        %v1057 = vpop.permute.xlu0 %1056
        %1058 = vrot.lane.b32.xlu0 %v975, 112
        %v1059 = vpop.permute.xlu0 %1058
        %1060 = vrot.lane.b32.xlu0 %v976, 112
        %v1061 = vpop.permute.xlu0 %1060
        %1062 = vrot.lane.b32.xlu0 %v977, 112
        %v1063 = vpop.permute.xlu0 %1062
        %1064 = vrot.lane.b32.xlu0 %v978, 112
        %v1065 = vpop.permute.xlu0 %1064
        %1066 = vrot.lane.b32.xlu0 %v979, 112
        %v1067 = vpop.permute.xlu0 %1066
        %1068 = vrot.lane.b32.xlu0 %v980, 112
        %v1069 = vpop.permute.xlu0 %1068
        %1070 = vrot.lane.b32.xlu0 %v981, 112
        %v1071 = vpop.permute.xlu0 %1070
        %1072 = vrot.lane.b32.xlu0 %v982, 112
        %v1073 = vpop.permute.xlu0 %1072
        %1074 = vrot.lane.b32.xlu0 %v983, 112
        %v1075 = vpop.permute.xlu0 %1074
        %1076 = vrot.lane.b32.xlu0 %v984, 112
        %v1077 = vpop.permute.xlu0 %1076
        %1078 = vrot.lane.b32.xlu0 %v985, 112
        %v1079 = vpop.permute.xlu0 %1078
        %1080 = vrot.lane.b32.xlu0 %v986, 112
        %v1081 = vpop.permute.xlu0 %1080
        %1082 = vrot.lane.b32.xlu0 %v987, 112
        %v1083 = vpop.permute.xlu0 %1082
        %v1116 = vadd.f32 %v916, %v1021
        %v1117 = vadd.f32 %v917, %v1023
        %v1118 = vadd.f32 %v918, %v1025
        %v1119 = vadd.f32 %v919, %v1027
        %v1120 = vadd.f32 %v920, %v1029
        %v1121 = vadd.f32 %v921, %v1031
        %v1122 = vadd.f32 %v922, %v1033
        %v1123 = vadd.f32 %v923, %v1035
        %v1124 = vadd.f32 %v924, %v1037
        %v1125 = vadd.f32 %v925, %v1039
        %v1126 = vadd.f32 %v926, %v1041
        %v1127 = vadd.f32 %v927, %v1043
        %v1128 = vadd.f32 %v928, %v1045
        %v1129 = vadd.f32 %v929, %v1047
        %v1130 = vadd.f32 %v930, %v1049
        %v1131 = vadd.f32 %v931, %v1051
        %v1132 = vadd.f32 %v932, %v1053
        %v1133 = vadd.f32 %v933, %v1055
        %v1134 = vadd.f32 %v934, %v1057
        %v1135 = vadd.f32 %v935, %v1059
        %v1136 = vadd.f32 %v936, %v1061
        %v1137 = vadd.f32 %v937, %v1063
        %v1138 = vadd.f32 %v938, %v1065
        %v1139 = vadd.f32 %v939, %v1067
        %v1140 = vadd.f32 %v940, %v1069
        %v1141 = vadd.f32 %v941, %v1071
        %v1142 = vadd.f32 %v942, %v1073
        %v1143 = vadd.f32 %v943, %v1075
        %v1144 = vadd.f32 %v944, %v1077
        %v1145 = vadd.f32 %v945, %v1079
        %v1146 = vadd.f32 %v946, %v1081
        %v1147 = vadd.f32 %v947, %v1083
        %v1148 = vld [vmem:[%s847 + $0x1] sm:$0xff]
        %v1149 = vld [vmem:[%s847 + $0x21] sm:$0xff]
        %v1150 = vld [vmem:[%s847 + $0x41] sm:$0xff]
        %v1151 = vld [vmem:[%s847 + $0x61] sm:$0xff]
        %v1152 = vld [vmem:[%s847 + $0x81] sm:$0xff]
        %v1153 = vld [vmem:[%s847 + $0xa1] sm:$0xff]
        %v1154 = vld [vmem:[%s847 + $0xc1] sm:$0xff]
        %v1155 = vld [vmem:[%s847 + $0xe1] sm:$0xff]
        %v1156 = vld [vmem:[%s847 + $0x121] sm:$0xff]
        %v1157 = vld [vmem:[%s847 + $0x141] sm:$0xff]
        %v1158 = vld [vmem:[%s847 + $0x161] sm:$0xff]
        %v1159 = vld [vmem:[%s847 + $0x181] sm:$0xff]
        %v1160 = vld [vmem:[%s847 + $0x1a1] sm:$0xff]
        %v1161 = vld [vmem:[%s847 + $0x1c1] sm:$0xff]
        %v1162 = vld [vmem:[%s847 + $0x1e1] sm:$0xff]
        %v1163 = vld [vmem:[%s847 + $0x201] sm:$0xff]
        %v1164 = vld [vmem:[%s847 + $0x241] sm:$0xff]
        %v1165 = vld [vmem:[%s847 + $0x261] sm:$0xff]
        %v1166 = vld [vmem:[%s847 + $0x281] sm:$0xff]
        %v1167 = vld [vmem:[%s847 + $0x2a1] sm:$0xff]
        %v1168 = vld [vmem:[%s847 + $0x2c1] sm:$0xff]
        %v1169 = vld [vmem:[%s847 + $0x2e1] sm:$0xff]
        %v1170 = vld [vmem:[%s847 + $0x301] sm:$0xff]
        %v1171 = vld [vmem:[%s847 + $0x321] sm:$0xff]
        %v1172 = vld [vmem:[%s847 + $0x361] sm:$0xff]
        %v1173 = vld [vmem:[%s847 + $0x381] sm:$0xff]
        %v1174 = vld [vmem:[%s847 + $0x3a1] sm:$0xff]
        %v1175 = vld [vmem:[%s847 + $0x3c1] sm:$0xff]
        %v1176 = vld [vmem:[%s847 + $0x3e1] sm:$0xff]
        %v1177 = vld [vmem:[%s847 + $0x401] sm:$0xff]
        %v1178 = vld [vmem:[%s847 + $0x421] sm:$0xff]
        %v1179 = vld [vmem:[%s847 + $0x441] sm:$0xff]
        %v1180 = vlaneseq
        %v1181 = vshrl.u32 %v1180, 7
        %v1182 = vsub.s32 5, %v1181
        %v1183 = vrot.slane %v445, %v1182
        %v1184 = vmul.f32 %v1148, %v1183
        %v1185 = vmul.f32 %v1149, %v1183
        %v1186 = vmul.f32 %v1150, %v1183
        %v1187 = vmul.f32 %v1151, %v1183
        %v1188 = vmul.f32 %v1152, %v1183
        %v1189 = vmul.f32 %v1153, %v1183
        %v1190 = vmul.f32 %v1154, %v1183
        %v1191 = vmul.f32 %v1155, %v1183
        %v1192 = vmul.f32 %v1156, %v1183
        %v1193 = vmul.f32 %v1157, %v1183
        %v1194 = vmul.f32 %v1158, %v1183
        %v1195 = vmul.f32 %v1159, %v1183
        %v1196 = vmul.f32 %v1160, %v1183
        %v1197 = vmul.f32 %v1161, %v1183
        %v1198 = vmul.f32 %v1162, %v1183
        %v1199 = vmul.f32 %v1163, %v1183
        %v1200 = vmul.f32 %v1164, %v1183
        %v1201 = vmul.f32 %v1165, %v1183
        %v1202 = vmul.f32 %v1166, %v1183
        %v1203 = vmul.f32 %v1167, %v1183
        %v1204 = vmul.f32 %v1168, %v1183
        %v1205 = vmul.f32 %v1169, %v1183
        %v1206 = vmul.f32 %v1170, %v1183
        %v1207 = vmul.f32 %v1171, %v1183
        %v1208 = vmul.f32 %v1172, %v1183
        %v1209 = vmul.f32 %v1173, %v1183
        %v1210 = vmul.f32 %v1174, %v1183
        %v1211 = vmul.f32 %v1175, %v1183
        %v1212 = vmul.f32 %v1176, %v1183
        %v1213 = vmul.f32 %v1177, %v1183
        %v1214 = vmul.f32 %v1178, %v1183
        %v1215 = vmul.f32 %v1179, %v1183
        %v1216 = vadd.f32 %v1116, %v1184
        %v1217 = vadd.f32 %v1117, %v1185
        %v1218 = vadd.f32 %v1118, %v1186
        %v1219 = vadd.f32 %v1119, %v1187
        %v1220 = vadd.f32 %v1120, %v1188
        %v1221 = vadd.f32 %v1121, %v1189
        %v1222 = vadd.f32 %v1122, %v1190
        %v1223 = vadd.f32 %v1123, %v1191
        %v1224 = vadd.f32 %v1124, %v1192
        %v1225 = vadd.f32 %v1125, %v1193
        %v1226 = vadd.f32 %v1126, %v1194
        %v1227 = vadd.f32 %v1127, %v1195
        %v1228 = vadd.f32 %v1128, %v1196
        %v1229 = vadd.f32 %v1129, %v1197
        %v1230 = vadd.f32 %v1130, %v1198
        %v1231 = vadd.f32 %v1131, %v1199
        %v1232 = vadd.f32 %v1132, %v1200
        %v1233 = vadd.f32 %v1133, %v1201
        %v1234 = vadd.f32 %v1134, %v1202
        %v1235 = vadd.f32 %v1135, %v1203
        %v1236 = vadd.f32 %v1136, %v1204
        %v1237 = vadd.f32 %v1137, %v1205
        %v1238 = vadd.f32 %v1138, %v1206
        %v1239 = vadd.f32 %v1139, %v1207
        %v1240 = vadd.f32 %v1140, %v1208
        %v1241 = vadd.f32 %v1141, %v1209
        %v1242 = vadd.f32 %v1142, %v1210
        %v1243 = vadd.f32 %v1143, %v1211
        %v1244 = vadd.f32 %v1144, %v1212
        %v1245 = vadd.f32 %v1145, %v1213
        %v1246 = vadd.f32 %v1146, %v1214
        %v1247 = vadd.f32 %v1147, %v1215
        %s1248 = scalar_lea.vmem %s442, 32
        %v1249 = vld [vmem:[%s1248] sm:$0xff]
        %v1250 = vld [vmem:[%s1248 + $0x20] sm:$0xff]
        %v1251 = vld [vmem:[%s1248 + $0x40] sm:$0xff]
        %v1252 = vld [vmem:[%s1248 + $0x60] sm:$0xff]
        %v1253 = vld [vmem:[%s1248 + $0x80] sm:$0xff]
        %v1254 = vld [vmem:[%s1248 + $0xa0] sm:$0xff]
        %v1255 = vld [vmem:[%s1248 + $0xc0] sm:$0xff]
        %v1256 = vld [vmem:[%s1248 + $0xe0] sm:$0xff]
        %v1257 = vld [vmem:[%s1248 + $0x120] sm:$0xff]
        %v1258 = vld [vmem:[%s1248 + $0x140] sm:$0xff]
        %v1259 = vld [vmem:[%s1248 + $0x160] sm:$0xff]
        %v1260 = vld [vmem:[%s1248 + $0x180] sm:$0xff]
        %v1261 = vld [vmem:[%s1248 + $0x1a0] sm:$0xff]
        %v1262 = vld [vmem:[%s1248 + $0x1c0] sm:$0xff]
        %v1263 = vld [vmem:[%s1248 + $0x1e0] sm:$0xff]
        %v1264 = vld [vmem:[%s1248 + $0x200] sm:$0xff]
        %v1265 = vld [vmem:[%s1248 + $0x240] sm:$0xff]
        %v1266 = vld [vmem:[%s1248 + $0x260] sm:$0xff]
        %v1267 = vld [vmem:[%s1248 + $0x280] sm:$0xff]
        %v1268 = vld [vmem:[%s1248 + $0x2a0] sm:$0xff]
        %v1269 = vld [vmem:[%s1248 + $0x2c0] sm:$0xff]
        %v1270 = vld [vmem:[%s1248 + $0x2e0] sm:$0xff]
        %v1271 = vld [vmem:[%s1248 + $0x300] sm:$0xff]
        %v1272 = vld [vmem:[%s1248 + $0x320] sm:$0xff]
        %v1273 = vld [vmem:[%s1248 + $0x360] sm:$0xff]
        %v1274 = vld [vmem:[%s1248 + $0x380] sm:$0xff]
        %v1275 = vld [vmem:[%s1248 + $0x3a0] sm:$0xff]
        %v1276 = vld [vmem:[%s1248 + $0x3c0] sm:$0xff]
        %v1277 = vld [vmem:[%s1248 + $0x3e0] sm:$0xff]
        %v1278 = vld [vmem:[%s1248 + $0x400] sm:$0xff]
        %v1279 = vld [vmem:[%s1248 + $0x420] sm:$0xff]
        %v1280 = vld [vmem:[%s1248 + $0x440] sm:$0xff]
        %v1281 = vlaneseq
        %v1282 = vshrl.u32 %v1281, 7
        %v1283 = vsub.s32 6, %v1282
        %v1284 = vrot.slane %v445, %v1283
        %v1285 = vmul.f32 %v1249, %v1284
        %v1286 = vmul.f32 %v1250, %v1284
        %v1287 = vmul.f32 %v1251, %v1284
        %v1288 = vmul.f32 %v1252, %v1284
        %v1289 = vmul.f32 %v1253, %v1284
        %v1290 = vmul.f32 %v1254, %v1284
        %v1291 = vmul.f32 %v1255, %v1284
        %v1292 = vmul.f32 %v1256, %v1284
        %v1293 = vmul.f32 %v1257, %v1284
        %v1294 = vmul.f32 %v1258, %v1284
        %v1295 = vmul.f32 %v1259, %v1284
        %v1296 = vmul.f32 %v1260, %v1284
        %v1297 = vmul.f32 %v1261, %v1284
        %v1298 = vmul.f32 %v1262, %v1284
        %v1299 = vmul.f32 %v1263, %v1284
        %v1300 = vmul.f32 %v1264, %v1284
        %v1301 = vmul.f32 %v1265, %v1284
        %v1302 = vmul.f32 %v1266, %v1284
        %v1303 = vmul.f32 %v1267, %v1284
        %v1304 = vmul.f32 %v1268, %v1284
        %v1305 = vmul.f32 %v1269, %v1284
        %v1306 = vmul.f32 %v1270, %v1284
        %v1307 = vmul.f32 %v1271, %v1284
        %v1308 = vmul.f32 %v1272, %v1284
        %v1309 = vmul.f32 %v1273, %v1284
        %v1310 = vmul.f32 %v1274, %v1284
        %v1311 = vmul.f32 %v1275, %v1284
        %v1312 = vmul.f32 %v1276, %v1284
        %v1313 = vmul.f32 %v1277, %v1284
        %v1314 = vmul.f32 %v1278, %v1284
        %v1315 = vmul.f32 %v1279, %v1284
        %v1316 = vmul.f32 %v1280, %v1284
        %v1317 = vadd.f32 %v1216, %v1285
        %v1318 = vadd.f32 %v1217, %v1286
        %v1319 = vadd.f32 %v1218, %v1287
        %v1320 = vadd.f32 %v1219, %v1288
        %v1321 = vadd.f32 %v1220, %v1289
        %v1322 = vadd.f32 %v1221, %v1290
        %v1323 = vadd.f32 %v1222, %v1291
        %v1324 = vadd.f32 %v1223, %v1292
        %v1325 = vadd.f32 %v1224, %v1293
        %v1326 = vadd.f32 %v1225, %v1294
        %v1327 = vadd.f32 %v1226, %v1295
        %v1328 = vadd.f32 %v1227, %v1296
        %v1329 = vadd.f32 %v1228, %v1297
        %v1330 = vadd.f32 %v1229, %v1298
        %v1331 = vadd.f32 %v1230, %v1299
        %v1332 = vadd.f32 %v1231, %v1300
        %v1333 = vadd.f32 %v1232, %v1301
        %v1334 = vadd.f32 %v1233, %v1302
        %v1335 = vadd.f32 %v1234, %v1303
        %v1336 = vadd.f32 %v1235, %v1304
        %v1337 = vadd.f32 %v1236, %v1305
        %v1338 = vadd.f32 %v1237, %v1306
        %v1339 = vadd.f32 %v1238, %v1307
        %v1340 = vadd.f32 %v1239, %v1308
        %v1341 = vadd.f32 %v1240, %v1309
        %v1342 = vadd.f32 %v1241, %v1310
        %v1343 = vadd.f32 %v1242, %v1311
        %v1344 = vadd.f32 %v1243, %v1312
        %v1345 = vadd.f32 %v1244, %v1313
        %v1346 = vadd.f32 %v1245, %v1314
        %v1347 = vadd.f32 %v1246, %v1315
        %v1348 = vadd.f32 %v1247, %v1316
        %v1349 = vlaneseq
        %v1350 = vshrl.u32 %v1349, 7
        %v1351 = vsub.s32 7, %v1350
        %v1352 = vrot.slane %v445, %v1351
        %1354 = vrot.lane.b32.xlu0 %v1352, 16
        %v1355 = vpop.permute.xlu0 %1354
        %v1357 = vmul.f32 %v1249, %v1355
        %v1358 = vmul.f32 %v1250, %v1355
        %v1359 = vmul.f32 %v1251, %v1355
        %v1360 = vmul.f32 %v1252, %v1355
        %v1361 = vmul.f32 %v1253, %v1355
        %v1362 = vmul.f32 %v1254, %v1355
        %v1363 = vmul.f32 %v1255, %v1355
        %v1364 = vmul.f32 %v1256, %v1355
        %v1365 = vmul.f32 %v1257, %v1355
        %v1366 = vmul.f32 %v1258, %v1355
        %v1367 = vmul.f32 %v1259, %v1355
        %v1368 = vmul.f32 %v1260, %v1355
        %v1369 = vmul.f32 %v1261, %v1355
        %v1370 = vmul.f32 %v1262, %v1355
        %v1371 = vmul.f32 %v1263, %v1355
        %v1372 = vmul.f32 %v1264, %v1355
        %v1373 = vmul.f32 %v1265, %v1355
        %v1374 = vmul.f32 %v1266, %v1355
        %v1375 = vmul.f32 %v1267, %v1355
        %v1376 = vmul.f32 %v1268, %v1355
        %v1377 = vmul.f32 %v1269, %v1355
        %v1378 = vmul.f32 %v1270, %v1355
        %v1379 = vmul.f32 %v1271, %v1355
        %v1380 = vmul.f32 %v1272, %v1355
        %v1381 = vmul.f32 %v1273, %v1355
        %v1382 = vmul.f32 %v1274, %v1355
        %v1383 = vmul.f32 %v1275, %v1355
        %v1384 = vmul.f32 %v1276, %v1355
        %v1385 = vmul.f32 %v1277, %v1355
        %v1386 = vmul.f32 %v1278, %v1355
        %v1387 = vmul.f32 %v1279, %v1355
        %v1388 = vmul.f32 %v1280, %v1355
        %1421 = vrot.lane.b32.xlu0 %v1357, 112
        %v1422 = vpop.permute.xlu0 %1421
        %1423 = vrot.lane.b32.xlu0 %v1358, 112
        %v1424 = vpop.permute.xlu0 %1423
        %1425 = vrot.lane.b32.xlu0 %v1359, 112
        %v1426 = vpop.permute.xlu0 %1425
        %1427 = vrot.lane.b32.xlu0 %v1360, 112
        %v1428 = vpop.permute.xlu0 %1427
        %1429 = vrot.lane.b32.xlu0 %v1361, 112
        %v1430 = vpop.permute.xlu0 %1429
        %1431 = vrot.lane.b32.xlu0 %v1362, 112
        %v1432 = vpop.permute.xlu0 %1431
        %1433 = vrot.lane.b32.xlu0 %v1363, 112
        %v1434 = vpop.permute.xlu0 %1433
        %1435 = vrot.lane.b32.xlu0 %v1364, 112
        %v1436 = vpop.permute.xlu0 %1435
        %1437 = vrot.lane.b32.xlu0 %v1365, 112
        %v1438 = vpop.permute.xlu0 %1437
        %1439 = vrot.lane.b32.xlu0 %v1366, 112
        %v1440 = vpop.permute.xlu0 %1439
        %1441 = vrot.lane.b32.xlu0 %v1367, 112
        %v1442 = vpop.permute.xlu0 %1441
        %1443 = vrot.lane.b32.xlu0 %v1368, 112
        %v1444 = vpop.permute.xlu0 %1443
        %1445 = vrot.lane.b32.xlu0 %v1369, 112
        %v1446 = vpop.permute.xlu0 %1445
        %1447 = vrot.lane.b32.xlu0 %v1370, 112
        %v1448 = vpop.permute.xlu0 %1447
        %1449 = vrot.lane.b32.xlu0 %v1371, 112
        %v1450 = vpop.permute.xlu0 %1449
        %1451 = vrot.lane.b32.xlu0 %v1372, 112
        %v1452 = vpop.permute.xlu0 %1451
        %1453 = vrot.lane.b32.xlu0 %v1373, 112
        %v1454 = vpop.permute.xlu0 %1453
        %1455 = vrot.lane.b32.xlu0 %v1374, 112
        %v1456 = vpop.permute.xlu0 %1455
        %1457 = vrot.lane.b32.xlu0 %v1375, 112
        %v1458 = vpop.permute.xlu0 %1457
        %1459 = vrot.lane.b32.xlu0 %v1376, 112
        %v1460 = vpop.permute.xlu0 %1459
        %1461 = vrot.lane.b32.xlu0 %v1377, 112
        %v1462 = vpop.permute.xlu0 %1461
        %1463 = vrot.lane.b32.xlu0 %v1378, 112
        %v1464 = vpop.permute.xlu0 %1463
        %1465 = vrot.lane.b32.xlu0 %v1379, 112
        %v1466 = vpop.permute.xlu0 %1465
        %1467 = vrot.lane.b32.xlu0 %v1380, 112
        %v1468 = vpop.permute.xlu0 %1467
        %1469 = vrot.lane.b32.xlu0 %v1381, 112
        %v1470 = vpop.permute.xlu0 %1469
        %1471 = vrot.lane.b32.xlu0 %v1382, 112
        %v1472 = vpop.permute.xlu0 %1471
        %1473 = vrot.lane.b32.xlu0 %v1383, 112
        %v1474 = vpop.permute.xlu0 %1473
        %1475 = vrot.lane.b32.xlu0 %v1384, 112
        %v1476 = vpop.permute.xlu0 %1475
        %1477 = vrot.lane.b32.xlu0 %v1385, 112
        %v1478 = vpop.permute.xlu0 %1477
        %1479 = vrot.lane.b32.xlu0 %v1386, 112
        %v1480 = vpop.permute.xlu0 %1479
        %1481 = vrot.lane.b32.xlu0 %v1387, 112
        %v1482 = vpop.permute.xlu0 %1481
        %1483 = vrot.lane.b32.xlu0 %v1388, 112
        %v1484 = vpop.permute.xlu0 %1483
        %v1517 = vadd.f32 %v1317, %v1422
        %v1518 = vadd.f32 %v1318, %v1424
        %v1519 = vadd.f32 %v1319, %v1426
        %v1520 = vadd.f32 %v1320, %v1428
        %v1521 = vadd.f32 %v1321, %v1430
        %v1522 = vadd.f32 %v1322, %v1432
        %v1523 = vadd.f32 %v1323, %v1434
        %v1524 = vadd.f32 %v1324, %v1436
        %v1525 = vadd.f32 %v1325, %v1438
        %v1526 = vadd.f32 %v1326, %v1440
        %v1527 = vadd.f32 %v1327, %v1442
        %v1528 = vadd.f32 %v1328, %v1444
        %v1529 = vadd.f32 %v1329, %v1446
        %v1530 = vadd.f32 %v1330, %v1448
        %v1531 = vadd.f32 %v1331, %v1450
        %v1532 = vadd.f32 %v1332, %v1452
        %v1533 = vadd.f32 %v1333, %v1454
        %v1534 = vadd.f32 %v1334, %v1456
        %v1535 = vadd.f32 %v1335, %v1458
        %v1536 = vadd.f32 %v1336, %v1460
        %v1537 = vadd.f32 %v1337, %v1462
        %v1538 = vadd.f32 %v1338, %v1464
        %v1539 = vadd.f32 %v1339, %v1466
        %v1540 = vadd.f32 %v1340, %v1468
        %v1541 = vadd.f32 %v1341, %v1470
        %v1542 = vadd.f32 %v1342, %v1472
        %v1543 = vadd.f32 %v1343, %v1474
        %v1544 = vadd.f32 %v1344, %v1476
        %v1545 = vadd.f32 %v1345, %v1478
        %v1546 = vadd.f32 %v1346, %v1480
        %v1547 = vadd.f32 %v1347, %v1482
        %v1548 = vadd.f32 %v1348, %v1484
        %v1549 = vld [vmem:[%s1248 + $0x1] sm:$0xff]
        %v1550 = vld [vmem:[%s1248 + $0x21] sm:$0xff]
        %v1551 = vld [vmem:[%s1248 + $0x41] sm:$0xff]
        %v1552 = vld [vmem:[%s1248 + $0x61] sm:$0xff]
        %v1553 = vld [vmem:[%s1248 + $0x81] sm:$0xff]
        %v1554 = vld [vmem:[%s1248 + $0xa1] sm:$0xff]
        %v1555 = vld [vmem:[%s1248 + $0xc1] sm:$0xff]
        %v1556 = vld [vmem:[%s1248 + $0xe1] sm:$0xff]
        %v1557 = vld [vmem:[%s1248 + $0x121] sm:$0xff]
        %v1558 = vld [vmem:[%s1248 + $0x141] sm:$0xff]
        %v1559 = vld [vmem:[%s1248 + $0x161] sm:$0xff]
        %v1560 = vld [vmem:[%s1248 + $0x181] sm:$0xff]
        %v1561 = vld [vmem:[%s1248 + $0x1a1] sm:$0xff]
        %v1562 = vld [vmem:[%s1248 + $0x1c1] sm:$0xff]
        %v1563 = vld [vmem:[%s1248 + $0x1e1] sm:$0xff]
        %v1564 = vld [vmem:[%s1248 + $0x201] sm:$0xff]
        %v1565 = vld [vmem:[%s1248 + $0x241] sm:$0xff]
        %v1566 = vld [vmem:[%s1248 + $0x261] sm:$0xff]
        %v1567 = vld [vmem:[%s1248 + $0x281] sm:$0xff]
        %v1568 = vld [vmem:[%s1248 + $0x2a1] sm:$0xff]
        %v1569 = vld [vmem:[%s1248 + $0x2c1] sm:$0xff]
        %v1570 = vld [vmem:[%s1248 + $0x2e1] sm:$0xff]
        %v1571 = vld [vmem:[%s1248 + $0x301] sm:$0xff]
        %v1572 = vld [vmem:[%s1248 + $0x321] sm:$0xff]
        %v1573 = vld [vmem:[%s1248 + $0x361] sm:$0xff]
        %v1574 = vld [vmem:[%s1248 + $0x381] sm:$0xff]
        %v1575 = vld [vmem:[%s1248 + $0x3a1] sm:$0xff]
        %v1576 = vld [vmem:[%s1248 + $0x3c1] sm:$0xff]
        %v1577 = vld [vmem:[%s1248 + $0x3e1] sm:$0xff]
        %v1578 = vld [vmem:[%s1248 + $0x401] sm:$0xff]
        %v1579 = vld [vmem:[%s1248 + $0x421] sm:$0xff]
        %v1580 = vld [vmem:[%s1248 + $0x441] sm:$0xff]
        %v1581 = vlaneseq
        %v1582 = vshrl.u32 %v1581, 7
        %v1583 = vsub.s32 0, %v1582
        %v1584 = vrot.slane %v446, %v1583
        %v1585 = vmul.f32 %v1549, %v1584
        %v1586 = vmul.f32 %v1550, %v1584
        %v1587 = vmul.f32 %v1551, %v1584
        %v1588 = vmul.f32 %v1552, %v1584
        %v1589 = vmul.f32 %v1553, %v1584
        %v1590 = vmul.f32 %v1554, %v1584
        %v1591 = vmul.f32 %v1555, %v1584
        %v1592 = vmul.f32 %v1556, %v1584
        %v1593 = vmul.f32 %v1557, %v1584
        %v1594 = vmul.f32 %v1558, %v1584
        %v1595 = vmul.f32 %v1559, %v1584
        %v1596 = vmul.f32 %v1560, %v1584
        %v1597 = vmul.f32 %v1561, %v1584
        %v1598 = vmul.f32 %v1562, %v1584
        %v1599 = vmul.f32 %v1563, %v1584
        %v1600 = vmul.f32 %v1564, %v1584
        %v1601 = vmul.f32 %v1565, %v1584
        %v1602 = vmul.f32 %v1566, %v1584
        %v1603 = vmul.f32 %v1567, %v1584
        %v1604 = vmul.f32 %v1568, %v1584
        %v1605 = vmul.f32 %v1569, %v1584
        %v1606 = vmul.f32 %v1570, %v1584
        %v1607 = vmul.f32 %v1571, %v1584
        %v1608 = vmul.f32 %v1572, %v1584
        %v1609 = vmul.f32 %v1573, %v1584
        %v1610 = vmul.f32 %v1574, %v1584
        %v1611 = vmul.f32 %v1575, %v1584
        %v1612 = vmul.f32 %v1576, %v1584
        %v1613 = vmul.f32 %v1577, %v1584
        %v1614 = vmul.f32 %v1578, %v1584
        %v1615 = vmul.f32 %v1579, %v1584
        %v1616 = vmul.f32 %v1580, %v1584
        %v1617 = vadd.f32 %v1517, %v1585
        %v1618 = vadd.f32 %v1518, %v1586
        %v1619 = vadd.f32 %v1519, %v1587
        %v1620 = vadd.f32 %v1520, %v1588
        %v1621 = vadd.f32 %v1521, %v1589
        %v1622 = vadd.f32 %v1522, %v1590
        %v1623 = vadd.f32 %v1523, %v1591
        %v1624 = vadd.f32 %v1524, %v1592
        %v1625 = vadd.f32 %v1525, %v1593
        %v1626 = vadd.f32 %v1526, %v1594
        %v1627 = vadd.f32 %v1527, %v1595
        %v1628 = vadd.f32 %v1528, %v1596
        %v1629 = vadd.f32 %v1529, %v1597
        %v1630 = vadd.f32 %v1530, %v1598
        %v1631 = vadd.f32 %v1531, %v1599
        %v1632 = vadd.f32 %v1532, %v1600
        %v1633 = vadd.f32 %v1533, %v1601
        %v1634 = vadd.f32 %v1534, %v1602
        %v1635 = vadd.f32 %v1535, %v1603
        %v1636 = vadd.f32 %v1536, %v1604
        %v1637 = vadd.f32 %v1537, %v1605
        %v1638 = vadd.f32 %v1538, %v1606
        %v1639 = vadd.f32 %v1539, %v1607
        %v1640 = vadd.f32 %v1540, %v1608
        %v1641 = vadd.f32 %v1541, %v1609
        %v1642 = vadd.f32 %v1542, %v1610
        %v1643 = vadd.f32 %v1543, %v1611
        %v1644 = vadd.f32 %v1544, %v1612
        %v1645 = vadd.f32 %v1545, %v1613
        %v1646 = vadd.f32 %v1546, %v1614
        %v1647 = vadd.f32 %v1547, %v1615
        %v1648 = vadd.f32 %v1548, %v1616
        %v1649 = vld [vmem:[%s2] sm:$0x1]
        %v1651 = vlaneseq
        %v1652 = vshrl.u32 %v1651, 7
        %v1653 = vsub.s32 0, %v1652
        %v1654 = vrot.slane %v1649, %v1653
        %v1656 = vadd.f32 %v1617, %v1654
        %v1657 = vadd.f32 %v1618, %v1654
        %v1658 = vadd.f32 %v1619, %v1654
        %v1659 = vadd.f32 %v1620, %v1654
        %v1660 = vadd.f32 %v1621, %v1654
        %v1661 = vadd.f32 %v1622, %v1654
        %v1662 = vadd.f32 %v1623, %v1654
        %v1663 = vadd.f32 %v1624, %v1654
        %v1664 = vadd.f32 %v1625, %v1654
        %v1665 = vadd.f32 %v1626, %v1654
        %v1666 = vadd.f32 %v1627, %v1654
        %v1667 = vadd.f32 %v1628, %v1654
        %v1668 = vadd.f32 %v1629, %v1654
        %v1669 = vadd.f32 %v1630, %v1654
        %v1670 = vadd.f32 %v1631, %v1654
        %v1671 = vadd.f32 %v1632, %v1654
        %v1672 = vadd.f32 %v1633, %v1654
        %v1673 = vadd.f32 %v1634, %v1654
        %v1674 = vadd.f32 %v1635, %v1654
        %v1675 = vadd.f32 %v1636, %v1654
        %v1676 = vadd.f32 %v1637, %v1654
        %v1677 = vadd.f32 %v1638, %v1654
        %v1678 = vadd.f32 %v1639, %v1654
        %v1679 = vadd.f32 %v1640, %v1654
        %v1680 = vadd.f32 %v1641, %v1654
        %v1681 = vadd.f32 %v1642, %v1654
        %v1682 = vadd.f32 %v1643, %v1654
        %v1683 = vadd.f32 %v1644, %v1654
        %v1684 = vadd.f32 %v1645, %v1654
        %v1685 = vadd.f32 %v1646, %v1654
        %v1686 = vadd.f32 %v1647, %v1654
        %v1687 = vadd.f32 %v1648, %v1654
        %vm1688 = vcmask 130048
        %v1689 = vsel %vm1688, %v1656, 0.0
        %v1690 = vsel %vm1688, %v1657, 0.0
        %v1691 = vadd.f32 %v1689, %v1690
        %v1692 = vsel %vm1688, %v1658, 0.0
        %v1693 = vadd.f32 %v1691, %v1692
        %v1694 = vsel %vm1688, %v1659, 0.0
        %v1695 = vadd.f32 %v1693, %v1694
        %v1696 = vsel %vm1688, %v1660, 0.0
        %v1697 = vadd.f32 %v1695, %v1696
        %v1698 = vsel %vm1688, %v1661, 0.0
        %v1699 = vadd.f32 %v1697, %v1698
        %v1700 = vsel %vm1688, %v1662, 0.0
        %v1701 = vadd.f32 %v1699, %v1700
        %v1702 = vsel %vm1688, %v1663, 0.0
        %v1703 = vadd.f32 %v1701, %v1702
        %v1704 = vrot.slane %v1703, 4
        %v1705 = vadd.f32 %v1703, %v1704
        %v1706 = vrot.slane %v1705, 2
        %v1707 = vadd.f32 %v1705, %v1706
        %v1708 = vrot.slane %v1707, 1
        %v1709 = vadd.f32 %v1707, %v1708
        %v1710 = vsel %vm1688, %v1664, 0.0
        %v1711 = vsel %vm1688, %v1665, 0.0
        %v1712 = vadd.f32 %v1710, %v1711
        %v1713 = vsel %vm1688, %v1666, 0.0
        %v1714 = vadd.f32 %v1712, %v1713
        %v1715 = vsel %vm1688, %v1667, 0.0
        %v1716 = vadd.f32 %v1714, %v1715
        %v1717 = vsel %vm1688, %v1668, 0.0
        %v1718 = vadd.f32 %v1716, %v1717
        %v1719 = vsel %vm1688, %v1669, 0.0
        %v1720 = vadd.f32 %v1718, %v1719
        %v1721 = vsel %vm1688, %v1670, 0.0
        %v1722 = vadd.f32 %v1720, %v1721
        %v1723 = vsel %vm1688, %v1671, 0.0
        %v1724 = vadd.f32 %v1722, %v1723
        %v1725 = vrot.slane %v1724, 4
        %v1726 = vadd.f32 %v1724, %v1725
        %v1727 = vrot.slane %v1726, 2
        %v1728 = vadd.f32 %v1726, %v1727
        %v1729 = vrot.slane %v1728, 1
        %v1730 = vadd.f32 %v1728, %v1729
        %v1731 = vsel %vm1688, %v1672, 0.0
        %v1732 = vsel %vm1688, %v1673, 0.0
        %v1733 = vadd.f32 %v1731, %v1732
        %v1734 = vsel %vm1688, %v1674, 0.0
        %v1735 = vadd.f32 %v1733, %v1734
        %v1736 = vsel %vm1688, %v1675, 0.0
        %v1737 = vadd.f32 %v1735, %v1736
        %v1738 = vsel %vm1688, %v1676, 0.0
        %v1739 = vadd.f32 %v1737, %v1738
        %v1740 = vsel %vm1688, %v1677, 0.0
        %v1741 = vadd.f32 %v1739, %v1740
        %v1742 = vsel %vm1688, %v1678, 0.0
        %v1743 = vadd.f32 %v1741, %v1742
        %v1744 = vsel %vm1688, %v1679, 0.0
        %v1745 = vadd.f32 %v1743, %v1744
        %v1746 = vrot.slane %v1745, 4
        %v1747 = vadd.f32 %v1745, %v1746
        %v1748 = vrot.slane %v1747, 2
        %v1749 = vadd.f32 %v1747, %v1748
        %v1750 = vrot.slane %v1749, 1
        %v1751 = vadd.f32 %v1749, %v1750
        %v1752 = vsel %vm1688, %v1680, 0.0
        %v1753 = vsel %vm1688, %v1681, 0.0
        %v1754 = vadd.f32 %v1752, %v1753
        %v1755 = vsel %vm1688, %v1682, 0.0
        %v1756 = vadd.f32 %v1754, %v1755
        %v1757 = vsel %vm1688, %v1683, 0.0
        %v1758 = vadd.f32 %v1756, %v1757
        %v1759 = vsel %vm1688, %v1684, 0.0
        %v1760 = vadd.f32 %v1758, %v1759
        %v1761 = vsel %vm1688, %v1685, 0.0
        %v1762 = vadd.f32 %v1760, %v1761
        %v1763 = vsel %vm1688, %v1686, 0.0
        %v1764 = vadd.f32 %v1762, %v1763
        %v1765 = vsel %vm1688, %v1687, 0.0
        %v1766 = vadd.f32 %v1764, %v1765
        %v1767 = vrot.slane %v1766, 4
        %v1768 = vadd.f32 %v1766, %v1767
        %v1769 = vrot.slane %v1768, 2
        %v1770 = vadd.f32 %v1768, %v1769
        %v1771 = vrot.slane %v1770, 1
        %v1772 = vadd.f32 %v1770, %v1771
        %v1773 = vrcp.pop 64.0
        %v1774 = vmul.f32 %v1709, %v1773
        %v1775 = vmul.f32 %v1730, %v1773
        %v1776 = vmul.f32 %v1751, %v1773
        %v1777 = vmul.f32 %v1772, %v1773
        %v1778 = vld [vmem:[%s3] sm:$0xff]
        %v1779 = vld [vmem:[%s3 + $0x8] sm:$0xff]
        %v1780 = vld [vmem:[%s4] sm:$0x1]
        %v1782 = vlaneseq
        %v1783 = vshrl.u32 %v1782, 7
        %v1784 = vsub.s32 0, %v1783
        %v1785 = vrot.slane %v1780, %v1784
        %vm1791 = vcmask 1041409
        %v1792 = vsel %vm1791, %v1775, %v1774
        %vm1793 = vcmask 1042434
        %v1794 = vsel %vm1793, %v1776, %v1792
        %vm1795 = vcmask 1043459
        %v1796 = vsel %vm1795, %v1777, %v1794
        %v1797 = vsel %vm1688, %v1796, 0
        %1799 = vmatprep.subr.mxu0 0.0
        %1800 = vmatpush1.msra.mxu0 %v1778
        %1801 = vmatprep.subr.mxu0 0.0
        %1802 = vmatpush1.msra.mxu0 %v1779
        %1803 = vmatprep.subr.mxu0 0.0
        %1804 = vmatpush1.msra.mxu0 0.0
        %1805 = vmatprep.subr.mxu0 0.0
        %1806 = vmatpush1.msra.mxu0 0.0
        %1807 = vmatprep.subr.mxu0 0.0
        %1808 = vmatpush1.msra.mxu0 0.0
        %1809 = vmatprep.subr.mxu0 0.0
        %1810 = vmatpush1.msra.mxu0 0.0
        %1811 = vmatprep.subr.mxu0 0.0
        %1812 = vmatpush1.msra.mxu0 0.0
        %1813 = vmatprep.subr.mxu0 0.0
        %1814 = vmatpush1.msra.mxu0 0.0
        %1815 = vmatprep.subr.mxu0 0.0
        %1816 = vmatpush1.msra.mxu0 0.0
        %1817 = vmatprep.subr.mxu0 0.0
        %1818 = vmatpush1.msra.mxu0 0.0
        %1819 = vmatprep.subr.mxu0 0.0
        %1820 = vmatpush1.msra.mxu0 0.0
        %1821 = vmatprep.subr.mxu0 0.0
        %1822 = vmatpush1.msra.mxu0 0.0
        %1823 = vmatprep.subr.mxu0 0.0
        %1824 = vmatpush1.msra.mxu0 0.0
        %1825 = vmatprep.subr.mxu0 0.0
        %1826 = vmatpush1.msra.mxu0 0.0
        %1827 = vmatprep.subr.mxu0 0.0
        %1828 = vmatpush1.msra.mxu0 0.0
        %1829 = vmatprep.subr.mxu0 0.0
        %1830 = vmatpush1.msra.mxu0 0.0
        %1831 = vmatprep.subr.mxu0 0.0
        %1832 = vmatpush1.msra.mxu0 0.0
        %1833 = vmatprep.subr.mxu0 0.0
        %1834 = vmatpush1.msra.mxu0 0.0
        %1835 = vmatprep.subr.mxu0 0.0
        %1836 = vmatpush1.msra.mxu0 0.0
        %1837 = vmatprep.subr.mxu0 0.0
        %1838 = vmatpush1.msra.mxu0 0.0
        %1839 = vmatprep.subr.mxu0 0.0
        %1840 = vmatpush1.msra.mxu0 0.0
        %1841 = vmatprep.subr.mxu0 0.0
        %1842 = vmatpush1.msra.mxu0 0.0
        %1843 = vmatprep.subr.mxu0 0.0
        %1844 = vmatpush1.msra.mxu0 0.0
        %1845 = vmatprep.subr.mxu0 0.0
        %1846 = vmatpush1.msra.mxu0 0.0
        %1847 = vmatprep.subr.mxu0 0.0
        %1848 = vmatpush1.msra.mxu0 0.0
        %1849 = vmatprep.subr.mxu0 0.0
        %1850 = vmatpush1.msra.mxu0 0.0
        %1851 = vmatprep.subr.mxu0 0.0
        %1852 = vmatpush1.msra.mxu0 0.0
        %1853 = vmatprep.subr.mxu0 0.0
        %1854 = vmatpush1.msra.mxu0 0.0
        %1855 = vmatprep.subr.mxu0 0.0
        %1856 = vmatpush1.msra.mxu0 0.0
        %1857 = vmatprep.subr.mxu0 0.0
        %1858 = vmatpush1.msra.mxu0 0.0
        %1859 = vmatprep.subr.mxu0 0.0
        %1860 = vmatpush1.msra.mxu0 0.0
        %1861 = vmatprep.subr.mxu0 0.0
        %1862 = vmatpush1.msra.mxu0 0.0
        %1863 = vmatprep.mubr.f32.mxu0 0.0
        %1864 = vmatmul.mubr.f32.gmra.mrb[0].mxu0 %v1797
        %v1865 = vpop.f32.mrb[0].mxu0
        %v1866 = vadd.f32 %v1785, %v1865
        %v1867 = vpop.f32.mrb[0].mxu0
        %1868 = vdwg.mxu0
        %v1869 = vmax.f32 %v1866, 0.0
        %v1870 = vld [vmem:[%s5] sm:$0xff]
        %v1871 = vld [vmem:[%s6] sm:$0x1]
        %v1873 = vlaneseq
        %v1874 = vshrl.u32 %v1873, 7
        %v1875 = vsub.s32 0, %v1874
        %v1876 = vrot.slane %v1871, %v1875
        %vm1878 = vcmask 64512
        %v1880 = vsel %vm1878, %v1869, 0
        %1882 = vmatprep.subr.mxu0 0.0
        %1883 = vmatpush1.msra.mxu0 %v1870
        %1884 = vmatprep.subr.mxu0 0.0
        %1885 = vmatpush1.msra.mxu0 0.0
        %1886 = vmatprep.subr.mxu0 0.0
        %1887 = vmatpush1.msra.mxu0 0.0
        %1888 = vmatprep.subr.mxu0 0.0
        %1889 = vmatpush1.msra.mxu0 0.0
        %1890 = vmatprep.subr.mxu0 0.0
        %1891 = vmatpush1.msra.mxu0 0.0
        %1892 = vmatprep.subr.mxu0 0.0
        %1893 = vmatpush1.msra.mxu0 0.0
        %1894 = vmatprep.subr.mxu0 0.0
        %1895 = vmatpush1.msra.mxu0 0.0
        %1896 = vmatprep.subr.mxu0 0.0
        %1897 = vmatpush1.msra.mxu0 0.0
        %1898 = vmatprep.subr.mxu0 0.0
        %1899 = vmatpush1.msra.mxu0 0.0
        %1900 = vmatprep.subr.mxu0 0.0
        %1901 = vmatpush1.msra.mxu0 0.0
        %1902 = vmatprep.subr.mxu0 0.0
        %1903 = vmatpush1.msra.mxu0 0.0
        %1904 = vmatprep.subr.mxu0 0.0
        %1905 = vmatpush1.msra.mxu0 0.0
        %1906 = vmatprep.subr.mxu0 0.0
        %1907 = vmatpush1.msra.mxu0 0.0
        %1908 = vmatprep.subr.mxu0 0.0
        %1909 = vmatpush1.msra.mxu0 0.0
        %1910 = vmatprep.subr.mxu0 0.0
        %1911 = vmatpush1.msra.mxu0 0.0
        %1912 = vmatprep.subr.mxu0 0.0
        %1913 = vmatpush1.msra.mxu0 0.0
        %1914 = vmatprep.subr.mxu0 0.0
        %1915 = vmatpush1.msra.mxu0 0.0
        %1916 = vmatprep.subr.mxu0 0.0
        %1917 = vmatpush1.msra.mxu0 0.0
        %1918 = vmatprep.subr.mxu0 0.0
        %1919 = vmatpush1.msra.mxu0 0.0
        %1920 = vmatprep.subr.mxu0 0.0
        %1921 = vmatpush1.msra.mxu0 0.0
        %1922 = vmatprep.subr.mxu0 0.0
        %1923 = vmatpush1.msra.mxu0 0.0
        %1924 = vmatprep.subr.mxu0 0.0
        %1925 = vmatpush1.msra.mxu0 0.0
        %1926 = vmatprep.subr.mxu0 0.0
        %1927 = vmatpush1.msra.mxu0 0.0
        %1928 = vmatprep.subr.mxu0 0.0
        %1929 = vmatpush1.msra.mxu0 0.0
        %1930 = vmatprep.subr.mxu0 0.0
        %1931 = vmatpush1.msra.mxu0 0.0
        %1932 = vmatprep.subr.mxu0 0.0
        %1933 = vmatpush1.msra.mxu0 0.0
        %1934 = vmatprep.subr.mxu0 0.0
        %1935 = vmatpush1.msra.mxu0 0.0
        %1936 = vmatprep.subr.mxu0 0.0
        %1937 = vmatpush1.msra.mxu0 0.0
        %1938 = vmatprep.subr.mxu0 0.0
        %1939 = vmatpush1.msra.mxu0 0.0
        %1940 = vmatprep.subr.mxu0 0.0
        %1941 = vmatpush1.msra.mxu0 0.0
        %1942 = vmatprep.subr.mxu0 0.0
        %1943 = vmatpush1.msra.mxu0 0.0
        %1944 = vmatprep.subr.mxu0 0.0
        %1945 = vmatpush1.msra.mxu0 0.0
        %1946 = vmatprep.mubr.f32.mxu0 0.0
        %1947 = vmatmul.mubr.f32.gmra.mrb[0].mxu0 %v1880
        %v1948 = vpop.f32.mrb[0].mxu0
        %v1949 = vadd.f32 %v1876, %v1948
        %v1950 = vpop.f32.mrb[0].mxu0
        %1951 = vdwg.mxu0
        %v1952 = vxor.u32 %v1949, 2147483648
        %v1953 = vmul.f32 %v1952, 1.442695
        %v1954 = vpow.pop %v1953
        %v1955 = vadd.f32 %v1954, 1.0
        %v1956 = vrcp.pop %v1955
        %v1957 = vmul.f32 1.0, %v1956
        %v1960 = vunpack.c.l.s4 1966171168
        %v1961 = vunpack.c.0.s8 %v1960
        %v1962 = vlaneseq
        %v1963 = vshrl.u32 %v1962, 7
        %v1964 = vsub.s32 %v1961, %v1963
        %v1965 = vrot.slane %v1957, %v1964
        %v1966 = vcombine.high %v1965, %v1965
        %v1968 = vunpack.c.l.s4 1966171168
        %v1969 = vunpack.c.0.s8 %v1968
        %v1970 = vlaneseq
        %v1971 = vshrl.u32 %v1970, 7
        %v1972 = vsub.s32 %v1969, %v1971
        %v1973 = vrot.slane %v1965, %v1972
        %v1975 = vunpack.c.l.s4 1966171168
        %v1976 = vunpack.c.0.s8 %v1975
        %v1977 = vlaneseq
        %v1978 = vshrl.u32 %v1977, 7
        %v1979 = vsub.s32 %v1976, %v1978
        %v1980 = vrot.slane %v1966, %v1979
        %v1981 = vcombine.high %v1973, %v1973
        %v1982 = vcombine.high %v1980, %v1980
        %v1983 = vlaneseq
        %v1984 = vshrl.u32 %v1983, 7
        %v1985 = vsub.s32 0, %v1984
        %v1986 = vrot.slane %v1973, %v1985
        %v1987 = vlaneseq
        %v1988 = vshrl.u32 %v1987, 7
        %v1989 = vsub.s32 0, %v1988
        %v1990 = vrot.slane %v1980, %v1989
        %v1991 = vlaneseq
        %v1992 = vshrl.u32 %v1991, 7
        %v1993 = vsub.s32 0, %v1992
        %v1994 = vrot.slane %v1981, %v1993
        %v1995 = vlaneseq
        %v1996 = vshrl.u32 %v1995, 7
        %v1997 = vsub.s32 0, %v1996
        %v1998 = vrot.slane %v1982, %v1997
        %v2003 = vmul.f32 %v1656, %v1986
        %v2004 = vmul.f32 %v1657, %v1986
        %v2005 = vmul.f32 %v1658, %v1986
        %v2006 = vmul.f32 %v1659, %v1986
        %v2007 = vmul.f32 %v1660, %v1986
        %v2008 = vmul.f32 %v1661, %v1986
        %v2009 = vmul.f32 %v1662, %v1986
        %v2010 = vmul.f32 %v1663, %v1986
        %v2011 = vmul.f32 %v1664, %v1990
        %v2012 = vmul.f32 %v1665, %v1990
        %v2013 = vmul.f32 %v1666, %v1990
        %v2014 = vmul.f32 %v1667, %v1990
        %v2015 = vmul.f32 %v1668, %v1990
        %v2016 = vmul.f32 %v1669, %v1990
        %v2017 = vmul.f32 %v1670, %v1990
        %v2018 = vmul.f32 %v1671, %v1990
        %v2019 = vmul.f32 %v1672, %v1994
        %v2020 = vmul.f32 %v1673, %v1994
        %v2021 = vmul.f32 %v1674, %v1994
        %v2022 = vmul.f32 %v1675, %v1994
        %v2023 = vmul.f32 %v1676, %v1994
        %v2024 = vmul.f32 %v1677, %v1994
        %v2025 = vmul.f32 %v1678, %v1994
        %v2026 = vmul.f32 %v1679, %v1994
        %v2027 = vmul.f32 %v1680, %v1998
        %v2028 = vmul.f32 %v1681, %v1998
        %v2029 = vmul.f32 %v1682, %v1998
        %v2030 = vmul.f32 %v1683, %v1998
        %v2031 = vmul.f32 %v1684, %v1998
        %v2032 = vmul.f32 %v1685, %v1998
        %v2033 = vmul.f32 %v1686, %v1998
        %v2034 = vmul.f32 %v1687, %v1998
        %v2035 = vld [vmem:[%s7] sm:$0xff]
        %v2036 = vld [vmem:[%s7 + $0x8] sm:$0xff]
        %v2037 = vld [vmem:[%s8] sm:$0x1]
        %v2039 = vlaneseq
        %v2040 = vshrl.u32 %v2039, 7
        %v2041 = vsub.s32 0, %v2040
        %v2042 = vrot.slane %v2037, %v2041
        %v2045 = vsel %vm1688, %v2003, 0
        %v2048 = vsel %vm1688, %v2004, 0
        %v2051 = vsel %vm1688, %v2005, 0
        %v2054 = vsel %vm1688, %v2006, 0
        %v2057 = vsel %vm1688, %v2007, 0
        %v2060 = vsel %vm1688, %v2008, 0
        %v2063 = vsel %vm1688, %v2009, 0
        %v2066 = vsel %vm1688, %v2010, 0
        %v2069 = vsel %vm1688, %v2011, 0
        %v2072 = vsel %vm1688, %v2012, 0
        %v2075 = vsel %vm1688, %v2013, 0
        %v2078 = vsel %vm1688, %v2014, 0
        %v2081 = vsel %vm1688, %v2015, 0
        %v2084 = vsel %vm1688, %v2016, 0
        %v2087 = vsel %vm1688, %v2017, 0
        %v2090 = vsel %vm1688, %v2018, 0
        %v2093 = vsel %vm1688, %v2019, 0
        %v2096 = vsel %vm1688, %v2020, 0
        %v2099 = vsel %vm1688, %v2021, 0
        %v2102 = vsel %vm1688, %v2022, 0
        %v2105 = vsel %vm1688, %v2023, 0
        %v2108 = vsel %vm1688, %v2024, 0
        %v2111 = vsel %vm1688, %v2025, 0
        %v2114 = vsel %vm1688, %v2026, 0
        %v2117 = vsel %vm1688, %v2027, 0
        %v2120 = vsel %vm1688, %v2028, 0
        %v2123 = vsel %vm1688, %v2029, 0
        %v2126 = vsel %vm1688, %v2030, 0
        %v2129 = vsel %vm1688, %v2031, 0
        %v2132 = vsel %vm1688, %v2032, 0
        %v2135 = vsel %vm1688, %v2033, 0
        %v2138 = vsel %vm1688, %v2034, 0
        %2140 = vmatprep.subr.mxu0 0.0
        %2141 = vmatpush1.msra.mxu0 %v2035
        %2142 = vmatprep.subr.mxu0 0.0
        %2143 = vmatpush1.msra.mxu0 %v2036
        %2144 = vmatprep.subr.mxu0 0.0
        %2145 = vmatpush1.msra.mxu0 0.0
        %2146 = vmatprep.subr.mxu0 0.0
        %2147 = vmatpush1.msra.mxu0 0.0
        %2148 = vmatprep.subr.mxu0 0.0
        %2149 = vmatpush1.msra.mxu0 0.0
        %2150 = vmatprep.subr.mxu0 0.0
        %2151 = vmatpush1.msra.mxu0 0.0
        %2152 = vmatprep.subr.mxu0 0.0
        %2153 = vmatpush1.msra.mxu0 0.0
        %2154 = vmatprep.subr.mxu0 0.0
        %2155 = vmatpush1.msra.mxu0 0.0
        %2156 = vmatprep.subr.mxu0 0.0
        %2157 = vmatpush1.msra.mxu0 0.0
        %2158 = vmatprep.subr.mxu0 0.0
        %2159 = vmatpush1.msra.mxu0 0.0
        %2160 = vmatprep.subr.mxu0 0.0
        %2161 = vmatpush1.msra.mxu0 0.0
        %2162 = vmatprep.subr.mxu0 0.0
        %2163 = vmatpush1.msra.mxu0 0.0
        %2164 = vmatprep.subr.mxu0 0.0
        %2165 = vmatpush1.msra.mxu0 0.0
        %2166 = vmatprep.subr.mxu0 0.0
        %2167 = vmatpush1.msra.mxu0 0.0
        %2168 = vmatprep.subr.mxu0 0.0
        %2169 = vmatpush1.msra.mxu0 0.0
        %2170 = vmatprep.subr.mxu0 0.0
        %2171 = vmatpush1.msra.mxu0 0.0
        %2172 = vmatprep.subr.mxu0 0.0
        %2173 = vmatpush1.msra.mxu0 0.0
        %2174 = vmatprep.subr.mxu0 0.0
        %2175 = vmatpush1.msra.mxu0 0.0
        %2176 = vmatprep.subr.mxu0 0.0
        %2177 = vmatpush1.msra.mxu0 0.0
        %2178 = vmatprep.subr.mxu0 0.0
        %2179 = vmatpush1.msra.mxu0 0.0
        %2180 = vmatprep.subr.mxu0 0.0
        %2181 = vmatpush1.msra.mxu0 0.0
        %2182 = vmatprep.subr.mxu0 0.0
        %2183 = vmatpush1.msra.mxu0 0.0
        %2184 = vmatprep.subr.mxu0 0.0
        %2185 = vmatpush1.msra.mxu0 0.0
        %2186 = vmatprep.subr.mxu0 0.0
        %2187 = vmatpush1.msra.mxu0 0.0
        %2188 = vmatprep.subr.mxu0 0.0
        %2189 = vmatpush1.msra.mxu0 0.0
        %2190 = vmatprep.subr.mxu0 0.0
        %2191 = vmatpush1.msra.mxu0 0.0
        %2192 = vmatprep.subr.mxu0 0.0
        %2193 = vmatpush1.msra.mxu0 0.0
        %2194 = vmatprep.subr.mxu0 0.0
        %2195 = vmatpush1.msra.mxu0 0.0
        %2196 = vmatprep.subr.mxu0 0.0
        %2197 = vmatpush1.msra.mxu0 0.0
        %2198 = vmatprep.subr.mxu0 0.0
        %2199 = vmatpush1.msra.mxu0 0.0
        %2200 = vmatprep.subr.mxu0 0.0
        %2201 = vmatpush1.msra.mxu0 0.0
        %2202 = vmatprep.subr.mxu0 0.0
        %2203 = vmatpush1.msra.mxu0 0.0
        %2204 = vmatprep.mubr.f32.mxu0 0.0
        %2205 = vmatmul.mubr.f32.gmra.mrb[0].mxu0 %v2045
        %v2206 = vpop.f32.mrb[0].mxu0
        %v2207 = vadd.f32 %v2042, %v2206
        %v2208 = vpop.f32.mrb[0].mxu0
        %2209 = vmatprep.mubr.f32.mxu0 0.0
        %2210 = vmatmul.mubr.f32.gmra.mrb[0].mxu0 %v2048
        %v2211 = vpop.f32.mrb[0].mxu0
        %v2212 = vadd.f32 %v2042, %v2211
        %v2213 = vpop.f32.mrb[0].mxu0
        %2214 = vmatprep.mubr.f32.mxu0 0.0
        %2215 = vmatmul.mubr.f32.gmra.mrb[0].mxu0 %v2051
        %v2216 = vpop.f32.mrb[0].mxu0
        %v2217 = vadd.f32 %v2042, %v2216
        %v2218 = vpop.f32.mrb[0].mxu0
        %2219 = vmatprep.mubr.f32.mxu0 0.0
        %2220 = vmatmul.mubr.f32.gmra.mrb[0].mxu0 %v2054
        %v2221 = vpop.f32.mrb[0].mxu0
        %v2222 = vadd.f32 %v2042, %v2221
        %v2223 = vpop.f32.mrb[0].mxu0
        %2224 = vmatprep.mubr.f32.mxu0 0.0
        %2225 = vmatmul.mubr.f32.gmra.mrb[0].mxu0 %v2057
        %v2226 = vpop.f32.mrb[0].mxu0
        %v2227 = vadd.f32 %v2042, %v2226
        %v2228 = vpop.f32.mrb[0].mxu0
        %2229 = vmatprep.mubr.f32.mxu0 0.0
        %2230 = vmatmul.mubr.f32.gmra.mrb[0].mxu0 %v2060
        %v2231 = vpop.f32.mrb[0].mxu0
        %v2232 = vadd.f32 %v2042, %v2231
        %v2233 = vpop.f32.mrb[0].mxu0
        %2234 = vmatprep.mubr.f32.mxu0 0.0
        %2235 = vmatmul.mubr.f32.gmra.mrb[0].mxu0 %v2063
        %v2236 = vpop.f32.mrb[0].mxu0
        %v2237 = vadd.f32 %v2042, %v2236
        %v2238 = vpop.f32.mrb[0].mxu0
        %2239 = vmatprep.mubr.f32.mxu0 0.0
        %2240 = vmatmul.mubr.f32.gmra.mrb[0].mxu0 %v2066
        %v2241 = vpop.f32.mrb[0].mxu0
        %v2242 = vadd.f32 %v2042, %v2241
        %v2243 = vpop.f32.mrb[0].mxu0
        %2244 = vmatprep.mubr.f32.mxu0 0.0
        %2245 = vmatmul.mubr.f32.gmra.mrb[0].mxu0 %v2069
        %v2246 = vpop.f32.mrb[0].mxu0
        %v2247 = vadd.f32 %v2042, %v2246
        %v2248 = vpop.f32.mrb[0].mxu0
        %2249 = vmatprep.mubr.f32.mxu0 0.0
        %2250 = vmatmul.mubr.f32.gmra.mrb[0].mxu0 %v2072
        %v2251 = vpop.f32.mrb[0].mxu0
        %v2252 = vadd.f32 %v2042, %v2251
        %v2253 = vpop.f32.mrb[0].mxu0
        %2254 = vmatprep.mubr.f32.mxu0 0.0
        %2255 = vmatmul.mubr.f32.gmra.mrb[0].mxu0 %v2075
        %v2256 = vpop.f32.mrb[0].mxu0
        %v2257 = vadd.f32 %v2042, %v2256
        %v2258 = vpop.f32.mrb[0].mxu0
        %2259 = vmatprep.mubr.f32.mxu0 0.0
        %2260 = vmatmul.mubr.f32.gmra.mrb[0].mxu0 %v2078
        %v2261 = vpop.f32.mrb[0].mxu0
        %v2262 = vadd.f32 %v2042, %v2261
        %v2263 = vpop.f32.mrb[0].mxu0
        %2264 = vmatprep.mubr.f32.mxu0 0.0
        %2265 = vmatmul.mubr.f32.gmra.mrb[0].mxu0 %v2081
        %v2266 = vpop.f32.mrb[0].mxu0
        %v2267 = vadd.f32 %v2042, %v2266
        %v2268 = vpop.f32.mrb[0].mxu0
        %2269 = vmatprep.mubr.f32.mxu0 0.0
        %2270 = vmatmul.mubr.f32.gmra.mrb[0].mxu0 %v2084
        %v2271 = vpop.f32.mrb[0].mxu0
        %v2272 = vadd.f32 %v2042, %v2271
        %v2273 = vpop.f32.mrb[0].mxu0
        %2274 = vmatprep.mubr.f32.mxu0 0.0
        %2275 = vmatmul.mubr.f32.gmra.mrb[0].mxu0 %v2087
        %v2276 = vpop.f32.mrb[0].mxu0
        %v2277 = vadd.f32 %v2042, %v2276
        %v2278 = vpop.f32.mrb[0].mxu0
        %2279 = vmatprep.mubr.f32.mxu0 0.0
        %2280 = vmatmul.mubr.f32.gmra.mrb[0].mxu0 %v2090
        %v2281 = vpop.f32.mrb[0].mxu0
        %v2282 = vadd.f32 %v2042, %v2281
        %v2283 = vpop.f32.mrb[0].mxu0
        %2284 = vmatprep.mubr.f32.mxu0 0.0
        %2285 = vmatmul.mubr.f32.gmra.mrb[0].mxu0 %v2093
        %v2286 = vpop.f32.mrb[0].mxu0
        %v2287 = vadd.f32 %v2042, %v2286
        %v2288 = vpop.f32.mrb[0].mxu0
        %2289 = vmatprep.mubr.f32.mxu0 0.0
        %2290 = vmatmul.mubr.f32.gmra.mrb[0].mxu0 %v2096
        %v2291 = vpop.f32.mrb[0].mxu0
        %v2292 = vadd.f32 %v2042, %v2291
        %v2293 = vpop.f32.mrb[0].mxu0
        %2294 = vmatprep.mubr.f32.mxu0 0.0
        %2295 = vmatmul.mubr.f32.gmra.mrb[0].mxu0 %v2099
        %v2296 = vpop.f32.mrb[0].mxu0
        %v2297 = vadd.f32 %v2042, %v2296
        %v2298 = vpop.f32.mrb[0].mxu0
        %2299 = vmatprep.mubr.f32.mxu0 0.0
        %2300 = vmatmul.mubr.f32.gmra.mrb[0].mxu0 %v2102
        %v2301 = vpop.f32.mrb[0].mxu0
        %v2302 = vadd.f32 %v2042, %v2301
        %v2303 = vpop.f32.mrb[0].mxu0
        %2304 = vmatprep.mubr.f32.mxu0 0.0
        %2305 = vmatmul.mubr.f32.gmra.mrb[0].mxu0 %v2105
        %v2306 = vpop.f32.mrb[0].mxu0
        %v2307 = vadd.f32 %v2042, %v2306
        %v2308 = vpop.f32.mrb[0].mxu0
        %2309 = vmatprep.mubr.f32.mxu0 0.0
        %2310 = vmatmul.mubr.f32.gmra.mrb[0].mxu0 %v2108
        %v2311 = vpop.f32.mrb[0].mxu0
        %v2312 = vadd.f32 %v2042, %v2311
        %v2313 = vpop.f32.mrb[0].mxu0
        %2314 = vmatprep.mubr.f32.mxu0 0.0
        %2315 = vmatmul.mubr.f32.gmra.mrb[0].mxu0 %v2111
        %v2316 = vpop.f32.mrb[0].mxu0
        %v2317 = vadd.f32 %v2042, %v2316
        %v2318 = vpop.f32.mrb[0].mxu0
        %2319 = vmatprep.mubr.f32.mxu0 0.0
        %2320 = vmatmul.mubr.f32.gmra.mrb[0].mxu0 %v2114
        %v2321 = vpop.f32.mrb[0].mxu0
        %v2322 = vadd.f32 %v2042, %v2321
        %v2323 = vpop.f32.mrb[0].mxu0
        %2324 = vmatprep.mubr.f32.mxu0 0.0
        %2325 = vmatmul.mubr.f32.gmra.mrb[0].mxu0 %v2117
        %v2326 = vpop.f32.mrb[0].mxu0
        %v2327 = vadd.f32 %v2042, %v2326
        %v2328 = vpop.f32.mrb[0].mxu0
        %2329 = vmatprep.mubr.f32.mxu0 0.0
        %2330 = vmatmul.mubr.f32.gmra.mrb[0].mxu0 %v2120
        %v2331 = vpop.f32.mrb[0].mxu0
        %v2332 = vadd.f32 %v2042, %v2331
        %v2333 = vpop.f32.mrb[0].mxu0
        %2334 = vmatprep.mubr.f32.mxu0 0.0
        %2335 = vmatmul.mubr.f32.gmra.mrb[0].mxu0 %v2123
        %v2336 = vpop.f32.mrb[0].mxu0
        %v2337 = vadd.f32 %v2042, %v2336
        %v2338 = vpop.f32.mrb[0].mxu0
        %2339 = vmatprep.mubr.f32.mxu0 0.0
        %2340 = vmatmul.mubr.f32.gmra.mrb[0].mxu0 %v2126
        %v2341 = vpop.f32.mrb[0].mxu0
        %v2342 = vadd.f32 %v2042, %v2341
        %v2343 = vpop.f32.mrb[0].mxu0
        %2344 = vmatprep.mubr.f32.mxu0 0.0
        %2345 = vmatmul.mubr.f32.gmra.mrb[0].mxu0 %v2129
        %v2346 = vpop.f32.mrb[0].mxu0
        %v2347 = vadd.f32 %v2042, %v2346
        %v2348 = vpop.f32.mrb[0].mxu0
        %2349 = vmatprep.mubr.f32.mxu0 0.0
        %2350 = vmatmul.mubr.f32.gmra.mrb[0].mxu0 %v2132
        %v2351 = vpop.f32.mrb[0].mxu0
        %v2352 = vadd.f32 %v2042, %v2351
        %v2353 = vpop.f32.mrb[0].mxu0
        %2354 = vmatprep.mubr.f32.mxu0 0.0
        %2355 = vmatmul.mubr.f32.gmra.mrb[0].mxu0 %v2135
        %v2356 = vpop.f32.mrb[0].mxu0
        %v2357 = vadd.f32 %v2042, %v2356
        %v2358 = vpop.f32.mrb[0].mxu0
        %2359 = vmatprep.mubr.f32.mxu0 0.0
        %2360 = vmatmul.mubr.f32.gmra.mrb[0].mxu0 %v2138
        %v2361 = vpop.f32.mrb[0].mxu0
        %v2362 = vadd.f32 %v2042, %v2361
        %v2363 = vpop.f32.mrb[0].mxu0
        %2364 = vdwg.mxu0
        %v2366 = vsel %vm1688, %v2207, 0
        %v2369 = vsel %vm1688, %v2212, 0
        %v2372 = vsel %vm1688, %v2217, 0
        %v2375 = vsel %vm1688, %v2222, 0
        %v2378 = vsel %vm1688, %v2227, 0
        %v2381 = vsel %vm1688, %v2232, 0
        %v2384 = vsel %vm1688, %v2237, 0
        %v2387 = vsel %vm1688, %v2242, 0
        %2389 = vmatprep.subr.mxu0 0.0
        %2390 = vmatpush1.xpose.msra.mxu0 %v2045
        %2391 = vmatprep.subr.mxu0 0.0
        %2392 = vmatpush1.xpose.msra.mxu0 %v2048
        %2393 = vmatprep.subr.mxu0 0.0
        %2394 = vmatpush1.xpose.msra.mxu0 %v2051
        %2395 = vmatprep.subr.mxu0 0.0
        %2396 = vmatpush1.xpose.msra.mxu0 %v2054
        %2397 = vmatprep.subr.mxu0 0.0
        %2398 = vmatpush1.xpose.msra.mxu0 %v2057
        %2399 = vmatprep.subr.mxu0 0.0
        %2400 = vmatpush1.xpose.msra.mxu0 %v2060
        %2401 = vmatprep.subr.mxu0 0.0
        %2402 = vmatpush1.xpose.msra.mxu0 %v2063
        %2403 = vmatprep.subr.mxu0 0.0
        %2404 = vmatpush1.xpose.msra.mxu0 %v2066
        %2405 = vmatprep.subr.mxu0 0.0
        %2406 = vmatpush1.xpose.msra.mxu0 0.0
        %2407 = vmatprep.subr.mxu0 0.0
        %2408 = vmatpush1.xpose.msra.mxu0 0.0
        %2409 = vmatprep.subr.mxu0 0.0
        %2410 = vmatpush1.xpose.msra.mxu0 0.0
        %2411 = vmatprep.subr.mxu0 0.0
        %2412 = vmatpush1.xpose.msra.mxu0 0.0
        %2413 = vmatprep.subr.mxu0 0.0
        %2414 = vmatpush1.xpose.msra.mxu0 0.0
        %2415 = vmatprep.subr.mxu0 0.0
        %2416 = vmatpush1.xpose.msra.mxu0 0.0
        %2417 = vmatprep.subr.mxu0 0.0
        %2418 = vmatpush1.xpose.msra.mxu0 0.0
        %2419 = vmatprep.subr.mxu0 0.0
        %2420 = vmatpush1.xpose.msra.mxu0 0.0
        %2421 = vmatprep.subr.mxu0 0.0
        %2422 = vmatpush1.xpose.msra.mxu0 0.0
        %2423 = vmatprep.subr.mxu0 0.0
        %2424 = vmatpush1.xpose.msra.mxu0 0.0
        %2425 = vmatprep.subr.mxu0 0.0
        %2426 = vmatpush1.xpose.msra.mxu0 0.0
        %2427 = vmatprep.subr.mxu0 0.0
        %2428 = vmatpush1.xpose.msra.mxu0 0.0
        %2429 = vmatprep.subr.mxu0 0.0
        %2430 = vmatpush1.xpose.msra.mxu0 0.0
        %2431 = vmatprep.subr.mxu0 0.0
        %2432 = vmatpush1.xpose.msra.mxu0 0.0
        %2433 = vmatprep.subr.mxu0 0.0
        %2434 = vmatpush1.xpose.msra.mxu0 0.0
        %2435 = vmatprep.subr.mxu0 0.0
        %2436 = vmatpush1.xpose.msra.mxu0 0.0
        %2437 = vmatprep.subr.mxu0 0.0
        %2438 = vmatpush1.xpose.msra.mxu0 0.0
        %2439 = vmatprep.subr.mxu0 0.0
        %2440 = vmatpush1.xpose.msra.mxu0 0.0
        %2441 = vmatprep.subr.mxu0 0.0
        %2442 = vmatpush1.xpose.msra.mxu0 0.0
        %2443 = vmatprep.subr.mxu0 0.0
        %2444 = vmatpush1.xpose.msra.mxu0 0.0
        %2445 = vmatprep.subr.mxu0 0.0
        %2446 = vmatpush1.xpose.msra.mxu0 0.0
        %2447 = vmatprep.subr.mxu0 0.0
        %2448 = vmatpush1.xpose.msra.mxu0 0.0
        %2449 = vmatprep.subr.mxu0 0.0
        %2450 = vmatpush1.xpose.msra.mxu0 0.0
        %2451 = vmatprep.subr.mxu0 0.0
        %2452 = vmatpush1.xpose.msra.mxu0 0.0
        %2453 = vmatprep.mubr.f32.mxu0 0.0
        %2454 = vmatmul.mubr.f32.gmra.mrb[0].mxu0 %v2366
        %v2455 = vpop.f32.mrb[0].mxu0
        %v2456 = vadd.f32 0.0, %v2455
        %v2457 = vpop.f32.mrb[0].mxu0
        %2458 = vmatprep.mubr.f32.mxu0 0.0
        %2459 = vmatmul.mubr.f32.gmra.mrb[0].mxu0 %v2369
        %v2460 = vpop.f32.mrb[0].mxu0
        %v2461 = vadd.f32 0.0, %v2460
        %v2462 = vpop.f32.mrb[0].mxu0
        %2463 = vmatprep.mubr.f32.mxu0 0.0
        %2464 = vmatmul.mubr.f32.gmra.mrb[0].mxu0 %v2372
        %v2465 = vpop.f32.mrb[0].mxu0
        %v2466 = vadd.f32 0.0, %v2465
        %v2467 = vpop.f32.mrb[0].mxu0
        %2468 = vmatprep.mubr.f32.mxu0 0.0
        %2469 = vmatmul.mubr.f32.gmra.mrb[0].mxu0 %v2375
        %v2470 = vpop.f32.mrb[0].mxu0
        %v2471 = vadd.f32 0.0, %v2470
        %v2472 = vpop.f32.mrb[0].mxu0
        %2473 = vmatprep.mubr.f32.mxu0 0.0
        %2474 = vmatmul.mubr.f32.gmra.mrb[0].mxu0 %v2378
        %v2475 = vpop.f32.mrb[0].mxu0
        %v2476 = vadd.f32 0.0, %v2475
        %v2477 = vpop.f32.mrb[0].mxu0
        %2478 = vmatprep.mubr.f32.mxu0 0.0
        %2479 = vmatmul.mubr.f32.gmra.mrb[0].mxu0 %v2381
        %v2480 = vpop.f32.mrb[0].mxu0
        %v2481 = vadd.f32 0.0, %v2480
        %v2482 = vpop.f32.mrb[0].mxu0
        %2483 = vmatprep.mubr.f32.mxu0 0.0
        %2484 = vmatmul.mubr.f32.gmra.mrb[0].mxu0 %v2384
        %v2485 = vpop.f32.mrb[0].mxu0
        %v2486 = vadd.f32 0.0, %v2485
        %v2487 = vpop.f32.mrb[0].mxu0
        %2488 = vmatprep.mubr.f32.mxu0 0.0
        %2489 = vmatmul.mubr.f32.gmra.mrb[0].mxu0 %v2387
        %v2490 = vpop.f32.mrb[0].mxu0
        %v2491 = vadd.f32 0.0, %v2490
        %v2492 = vpop.f32.mrb[0].mxu0
        %2493 = vdwg.mxu0
        %v2495 = vsel %vm1688, %v2247, 0
        %v2498 = vsel %vm1688, %v2252, 0
        %v2501 = vsel %vm1688, %v2257, 0
        %v2504 = vsel %vm1688, %v2262, 0
        %v2507 = vsel %vm1688, %v2267, 0
        %v2510 = vsel %vm1688, %v2272, 0
        %v2513 = vsel %vm1688, %v2277, 0
        %v2516 = vsel %vm1688, %v2282, 0
        %2518 = vmatprep.subr.mxu0 0.0
        %2519 = vmatpush1.xpose.msra.mxu0 %v2069
        %2520 = vmatprep.subr.mxu0 0.0
        %2521 = vmatpush1.xpose.msra.mxu0 %v2072
        %2522 = vmatprep.subr.mxu0 0.0
        %2523 = vmatpush1.xpose.msra.mxu0 %v2075
        %2524 = vmatprep.subr.mxu0 0.0
        %2525 = vmatpush1.xpose.msra.mxu0 %v2078
        %2526 = vmatprep.subr.mxu0 0.0
        %2527 = vmatpush1.xpose.msra.mxu0 %v2081
        %2528 = vmatprep.subr.mxu0 0.0
        %2529 = vmatpush1.xpose.msra.mxu0 %v2084
        %2530 = vmatprep.subr.mxu0 0.0
        %2531 = vmatpush1.xpose.msra.mxu0 %v2087
        %2532 = vmatprep.subr.mxu0 0.0
        %2533 = vmatpush1.xpose.msra.mxu0 %v2090
        %2534 = vmatprep.subr.mxu0 0.0
        %2535 = vmatpush1.xpose.msra.mxu0 0.0
        %2536 = vmatprep.subr.mxu0 0.0
        %2537 = vmatpush1.xpose.msra.mxu0 0.0
        %2538 = vmatprep.subr.mxu0 0.0
        %2539 = vmatpush1.xpose.msra.mxu0 0.0
        %2540 = vmatprep.subr.mxu0 0.0
        %2541 = vmatpush1.xpose.msra.mxu0 0.0
        %2542 = vmatprep.subr.mxu0 0.0
        %2543 = vmatpush1.xpose.msra.mxu0 0.0
        %2544 = vmatprep.subr.mxu0 0.0
        %2545 = vmatpush1.xpose.msra.mxu0 0.0
        %2546 = vmatprep.subr.mxu0 0.0
        %2547 = vmatpush1.xpose.msra.mxu0 0.0
        %2548 = vmatprep.subr.mxu0 0.0
        %2549 = vmatpush1.xpose.msra.mxu0 0.0
        %2550 = vmatprep.subr.mxu0 0.0
        %2551 = vmatpush1.xpose.msra.mxu0 0.0
        %2552 = vmatprep.subr.mxu0 0.0
        %2553 = vmatpush1.xpose.msra.mxu0 0.0
        %2554 = vmatprep.subr.mxu0 0.0
        %2555 = vmatpush1.xpose.msra.mxu0 0.0
        %2556 = vmatprep.subr.mxu0 0.0
        %2557 = vmatpush1.xpose.msra.mxu0 0.0
        %2558 = vmatprep.subr.mxu0 0.0
        %2559 = vmatpush1.xpose.msra.mxu0 0.0
        %2560 = vmatprep.subr.mxu0 0.0
        %2561 = vmatpush1.xpose.msra.mxu0 0.0
        %2562 = vmatprep.subr.mxu0 0.0
        %2563 = vmatpush1.xpose.msra.mxu0 0.0
        %2564 = vmatprep.subr.mxu0 0.0
        %2565 = vmatpush1.xpose.msra.mxu0 0.0
        %2566 = vmatprep.subr.mxu0 0.0
        %2567 = vmatpush1.xpose.msra.mxu0 0.0
        %2568 = vmatprep.subr.mxu0 0.0
        %2569 = vmatpush1.xpose.msra.mxu0 0.0
        %2570 = vmatprep.subr.mxu0 0.0
        %2571 = vmatpush1.xpose.msra.mxu0 0.0
        %2572 = vmatprep.subr.mxu0 0.0
        %2573 = vmatpush1.xpose.msra.mxu0 0.0
        %2574 = vmatprep.subr.mxu0 0.0
        %2575 = vmatpush1.xpose.msra.mxu0 0.0
        %2576 = vmatprep.subr.mxu0 0.0
        %2577 = vmatpush1.xpose.msra.mxu0 0.0
        %2578 = vmatprep.subr.mxu0 0.0
        %2579 = vmatpush1.xpose.msra.mxu0 0.0
        %2580 = vmatprep.subr.mxu0 0.0
        %2581 = vmatpush1.xpose.msra.mxu0 0.0
        %2582 = vmatprep.mubr.f32.mxu0 0.0
        %2583 = vmatmul.mubr.f32.gmra.mrb[0].mxu0 %v2495
        %v2584 = vpop.f32.mrb[0].mxu0
        %v2585 = vadd.f32 0.0, %v2584
        %v2586 = vpop.f32.mrb[0].mxu0
        %2587 = vmatprep.mubr.f32.mxu0 0.0
        %2588 = vmatmul.mubr.f32.gmra.mrb[0].mxu0 %v2498
        %v2589 = vpop.f32.mrb[0].mxu0
        %v2590 = vadd.f32 0.0, %v2589
        %v2591 = vpop.f32.mrb[0].mxu0
        %2592 = vmatprep.mubr.f32.mxu0 0.0
        %2593 = vmatmul.mubr.f32.gmra.mrb[0].mxu0 %v2501
        %v2594 = vpop.f32.mrb[0].mxu0
        %v2595 = vadd.f32 0.0, %v2594
        %v2596 = vpop.f32.mrb[0].mxu0
        %2597 = vmatprep.mubr.f32.mxu0 0.0
        %2598 = vmatmul.mubr.f32.gmra.mrb[0].mxu0 %v2504
        %v2599 = vpop.f32.mrb[0].mxu0
        %v2600 = vadd.f32 0.0, %v2599
        %v2601 = vpop.f32.mrb[0].mxu0
        %2602 = vmatprep.mubr.f32.mxu0 0.0
        %2603 = vmatmul.mubr.f32.gmra.mrb[0].mxu0 %v2507
        %v2604 = vpop.f32.mrb[0].mxu0
        %v2605 = vadd.f32 0.0, %v2604
        %v2606 = vpop.f32.mrb[0].mxu0
        %2607 = vmatprep.mubr.f32.mxu0 0.0
        %2608 = vmatmul.mubr.f32.gmra.mrb[0].mxu0 %v2510
        %v2609 = vpop.f32.mrb[0].mxu0
        %v2610 = vadd.f32 0.0, %v2609
        %v2611 = vpop.f32.mrb[0].mxu0
        %2612 = vmatprep.mubr.f32.mxu0 0.0
        %2613 = vmatmul.mubr.f32.gmra.mrb[0].mxu0 %v2513
        %v2614 = vpop.f32.mrb[0].mxu0
        %v2615 = vadd.f32 0.0, %v2614
        %v2616 = vpop.f32.mrb[0].mxu0
        %2617 = vmatprep.mubr.f32.mxu0 0.0
        %2618 = vmatmul.mubr.f32.gmra.mrb[0].mxu0 %v2516
        %v2619 = vpop.f32.mrb[0].mxu0
        %v2620 = vadd.f32 0.0, %v2619
        %v2621 = vpop.f32.mrb[0].mxu0
        %2622 = vdwg.mxu0
        %v2624 = vsel %vm1688, %v2287, 0
        %v2627 = vsel %vm1688, %v2292, 0
        %v2630 = vsel %vm1688, %v2297, 0
        %v2633 = vsel %vm1688, %v2302, 0
        %v2636 = vsel %vm1688, %v2307, 0
        %v2639 = vsel %vm1688, %v2312, 0
        %v2642 = vsel %vm1688, %v2317, 0
        %v2645 = vsel %vm1688, %v2322, 0
        %2647 = vmatprep.subr.mxu0 0.0
        %2648 = vmatpush1.xpose.msra.mxu0 %v2093
        %2649 = vmatprep.subr.mxu0 0.0
        %2650 = vmatpush1.xpose.msra.mxu0 %v2096
        %2651 = vmatprep.subr.mxu0 0.0
        %2652 = vmatpush1.xpose.msra.mxu0 %v2099
        %2653 = vmatprep.subr.mxu0 0.0
        %2654 = vmatpush1.xpose.msra.mxu0 %v2102
        %2655 = vmatprep.subr.mxu0 0.0
        %2656 = vmatpush1.xpose.msra.mxu0 %v2105
        %2657 = vmatprep.subr.mxu0 0.0
        %2658 = vmatpush1.xpose.msra.mxu0 %v2108
        %2659 = vmatprep.subr.mxu0 0.0
        %2660 = vmatpush1.xpose.msra.mxu0 %v2111
        %2661 = vmatprep.subr.mxu0 0.0
        %2662 = vmatpush1.xpose.msra.mxu0 %v2114
        %2663 = vmatprep.subr.mxu0 0.0
        %2664 = vmatpush1.xpose.msra.mxu0 0.0
        %2665 = vmatprep.subr.mxu0 0.0
        %2666 = vmatpush1.xpose.msra.mxu0 0.0
        %2667 = vmatprep.subr.mxu0 0.0
        %2668 = vmatpush1.xpose.msra.mxu0 0.0
        %2669 = vmatprep.subr.mxu0 0.0
        %2670 = vmatpush1.xpose.msra.mxu0 0.0
        %2671 = vmatprep.subr.mxu0 0.0
        %2672 = vmatpush1.xpose.msra.mxu0 0.0
        %2673 = vmatprep.subr.mxu0 0.0
        %2674 = vmatpush1.xpose.msra.mxu0 0.0
        %2675 = vmatprep.subr.mxu0 0.0
        %2676 = vmatpush1.xpose.msra.mxu0 0.0
        %2677 = vmatprep.subr.mxu0 0.0
        %2678 = vmatpush1.xpose.msra.mxu0 0.0
        %2679 = vmatprep.subr.mxu0 0.0
        %2680 = vmatpush1.xpose.msra.mxu0 0.0
        %2681 = vmatprep.subr.mxu0 0.0
        %2682 = vmatpush1.xpose.msra.mxu0 0.0
        %2683 = vmatprep.subr.mxu0 0.0
        %2684 = vmatpush1.xpose.msra.mxu0 0.0
        %2685 = vmatprep.subr.mxu0 0.0
        %2686 = vmatpush1.xpose.msra.mxu0 0.0
        %2687 = vmatprep.subr.mxu0 0.0
        %2688 = vmatpush1.xpose.msra.mxu0 0.0
        %2689 = vmatprep.subr.mxu0 0.0
        %2690 = vmatpush1.xpose.msra.mxu0 0.0
        %2691 = vmatprep.subr.mxu0 0.0
        %2692 = vmatpush1.xpose.msra.mxu0 0.0
        %2693 = vmatprep.subr.mxu0 0.0
        %2694 = vmatpush1.xpose.msra.mxu0 0.0
        %2695 = vmatprep.subr.mxu0 0.0
        %2696 = vmatpush1.xpose.msra.mxu0 0.0
        %2697 = vmatprep.subr.mxu0 0.0
        %2698 = vmatpush1.xpose.msra.mxu0 0.0
        %2699 = vmatprep.subr.mxu0 0.0
        %2700 = vmatpush1.xpose.msra.mxu0 0.0
        %2701 = vmatprep.subr.mxu0 0.0
        %2702 = vmatpush1.xpose.msra.mxu0 0.0
        %2703 = vmatprep.subr.mxu0 0.0
        %2704 = vmatpush1.xpose.msra.mxu0 0.0
        %2705 = vmatprep.subr.mxu0 0.0
        %2706 = vmatpush1.xpose.msra.mxu0 0.0
        %2707 = vmatprep.subr.mxu0 0.0
        %2708 = vmatpush1.xpose.msra.mxu0 0.0
        %2709 = vmatprep.subr.mxu0 0.0
        %2710 = vmatpush1.xpose.msra.mxu0 0.0
        %2711 = vmatprep.mubr.f32.mxu0 0.0
        %2712 = vmatmul.mubr.f32.gmra.mrb[0].mxu0 %v2624
        %v2713 = vpop.f32.mrb[0].mxu0
        %v2714 = vadd.f32 0.0, %v2713
        %v2715 = vpop.f32.mrb[0].mxu0
        %2716 = vmatprep.mubr.f32.mxu0 0.0
        %2717 = vmatmul.mubr.f32.gmra.mrb[0].mxu0 %v2627
        %v2718 = vpop.f32.mrb[0].mxu0
        %v2719 = vadd.f32 0.0, %v2718
        %v2720 = vpop.f32.mrb[0].mxu0
        %2721 = vmatprep.mubr.f32.mxu0 0.0
        %2722 = vmatmul.mubr.f32.gmra.mrb[0].mxu0 %v2630
        %v2723 = vpop.f32.mrb[0].mxu0
        %v2724 = vadd.f32 0.0, %v2723
        %v2725 = vpop.f32.mrb[0].mxu0
        %2726 = vmatprep.mubr.f32.mxu0 0.0
        %2727 = vmatmul.mubr.f32.gmra.mrb[0].mxu0 %v2633
        %v2728 = vpop.f32.mrb[0].mxu0
        %v2729 = vadd.f32 0.0, %v2728
        %v2730 = vpop.f32.mrb[0].mxu0
        %2731 = vmatprep.mubr.f32.mxu0 0.0
        %2732 = vmatmul.mubr.f32.gmra.mrb[0].mxu0 %v2636
        %v2733 = vpop.f32.mrb[0].mxu0
        %v2734 = vadd.f32 0.0, %v2733
        %v2735 = vpop.f32.mrb[0].mxu0
        %2736 = vmatprep.mubr.f32.mxu0 0.0
        %2737 = vmatmul.mubr.f32.gmra.mrb[0].mxu0 %v2639
        %v2738 = vpop.f32.mrb[0].mxu0
        %v2739 = vadd.f32 0.0, %v2738
        %v2740 = vpop.f32.mrb[0].mxu0
        %2741 = vmatprep.mubr.f32.mxu0 0.0
        %2742 = vmatmul.mubr.f32.gmra.mrb[0].mxu0 %v2642
        %v2743 = vpop.f32.mrb[0].mxu0
        %v2744 = vadd.f32 0.0, %v2743
        %v2745 = vpop.f32.mrb[0].mxu0
        %2746 = vmatprep.mubr.f32.mxu0 0.0
        %2747 = vmatmul.mubr.f32.gmra.mrb[0].mxu0 %v2645
        %v2748 = vpop.f32.mrb[0].mxu0
        %v2749 = vadd.f32 0.0, %v2748
        %v2750 = vpop.f32.mrb[0].mxu0
        %2751 = vdwg.mxu0
        %v2753 = vsel %vm1688, %v2327, 0
        %v2756 = vsel %vm1688, %v2332, 0
        %v2759 = vsel %vm1688, %v2337, 0
        %v2762 = vsel %vm1688, %v2342, 0
        %v2765 = vsel %vm1688, %v2347, 0
        %v2768 = vsel %vm1688, %v2352, 0
        %v2771 = vsel %vm1688, %v2357, 0
        %v2774 = vsel %vm1688, %v2362, 0
        %2776 = vmatprep.subr.mxu0 0.0
        %2777 = vmatpush1.xpose.msra.mxu0 %v2117
        %2778 = vmatprep.subr.mxu0 0.0
        %2779 = vmatpush1.xpose.msra.mxu0 %v2120
        %2780 = vmatprep.subr.mxu0 0.0
        %2781 = vmatpush1.xpose.msra.mxu0 %v2123
        %2782 = vmatprep.subr.mxu0 0.0
        %2783 = vmatpush1.xpose.msra.mxu0 %v2126
        %2784 = vmatprep.subr.mxu0 0.0
        %2785 = vmatpush1.xpose.msra.mxu0 %v2129
        %2786 = vmatprep.subr.mxu0 0.0
        %2787 = vmatpush1.xpose.msra.mxu0 %v2132
        %2788 = vmatprep.subr.mxu0 0.0
        %2789 = vmatpush1.xpose.msra.mxu0 %v2135
        %2790 = vmatprep.subr.mxu0 0.0
        %2791 = vmatpush1.xpose.msra.mxu0 %v2138
        %2792 = vmatprep.subr.mxu0 0.0
        %2793 = vmatpush1.xpose.msra.mxu0 0.0
        %2794 = vmatprep.subr.mxu0 0.0
        %2795 = vmatpush1.xpose.msra.mxu0 0.0
        %2796 = vmatprep.subr.mxu0 0.0
        %2797 = vmatpush1.xpose.msra.mxu0 0.0
        %2798 = vmatprep.subr.mxu0 0.0
        %2799 = vmatpush1.xpose.msra.mxu0 0.0
        %2800 = vmatprep.subr.mxu0 0.0
        %2801 = vmatpush1.xpose.msra.mxu0 0.0
        %2802 = vmatprep.subr.mxu0 0.0
        %2803 = vmatpush1.xpose.msra.mxu0 0.0
        %2804 = vmatprep.subr.mxu0 0.0
        %2805 = vmatpush1.xpose.msra.mxu0 0.0
        %2806 = vmatprep.subr.mxu0 0.0
        %2807 = vmatpush1.xpose.msra.mxu0 0.0
        %2808 = vmatprep.subr.mxu0 0.0
        %2809 = vmatpush1.xpose.msra.mxu0 0.0
        %2810 = vmatprep.subr.mxu0 0.0
        %2811 = vmatpush1.xpose.msra.mxu0 0.0
        %2812 = vmatprep.subr.mxu0 0.0
        %2813 = vmatpush1.xpose.msra.mxu0 0.0
        %2814 = vmatprep.subr.mxu0 0.0
        %2815 = vmatpush1.xpose.msra.mxu0 0.0
        %2816 = vmatprep.subr.mxu0 0.0
        %2817 = vmatpush1.xpose.msra.mxu0 0.0
        %2818 = vmatprep.subr.mxu0 0.0
        %2819 = vmatpush1.xpose.msra.mxu0 0.0
        %2820 = vmatprep.subr.mxu0 0.0
        %2821 = vmatpush1.xpose.msra.mxu0 0.0
        %2822 = vmatprep.subr.mxu0 0.0
        %2823 = vmatpush1.xpose.msra.mxu0 0.0
        %2824 = vmatprep.subr.mxu0 0.0
        %2825 = vmatpush1.xpose.msra.mxu0 0.0
        %2826 = vmatprep.subr.mxu0 0.0
        %2827 = vmatpush1.xpose.msra.mxu0 0.0
        %2828 = vmatprep.subr.mxu0 0.0
        %2829 = vmatpush1.xpose.msra.mxu0 0.0
        %2830 = vmatprep.subr.mxu0 0.0
        %2831 = vmatpush1.xpose.msra.mxu0 0.0
        %2832 = vmatprep.subr.mxu0 0.0
        %2833 = vmatpush1.xpose.msra.mxu0 0.0
        %2834 = vmatprep.subr.mxu0 0.0
        %2835 = vmatpush1.xpose.msra.mxu0 0.0
        %2836 = vmatprep.subr.mxu0 0.0
        %2837 = vmatpush1.xpose.msra.mxu0 0.0
        %2838 = vmatprep.subr.mxu0 0.0
        %2839 = vmatpush1.xpose.msra.mxu0 0.0
        %2840 = vmatprep.mubr.f32.mxu0 0.0
        %2841 = vmatmul.mubr.f32.gmra.mrb[0].mxu0 %v2753
        %v2842 = vpop.f32.mrb[0].mxu0
        %v2843 = vadd.f32 0.0, %v2842
        %v2844 = vpop.f32.mrb[0].mxu0
        %2845 = vmatprep.mubr.f32.mxu0 0.0
        %2846 = vmatmul.mubr.f32.gmra.mrb[0].mxu0 %v2756
        %v2847 = vpop.f32.mrb[0].mxu0
        %v2848 = vadd.f32 0.0, %v2847
        %v2849 = vpop.f32.mrb[0].mxu0
        %2850 = vmatprep.mubr.f32.mxu0 0.0
        %2851 = vmatmul.mubr.f32.gmra.mrb[0].mxu0 %v2759
        %v2852 = vpop.f32.mrb[0].mxu0
        %v2853 = vadd.f32 0.0, %v2852
        %v2854 = vpop.f32.mrb[0].mxu0
        %2855 = vmatprep.mubr.f32.mxu0 0.0
        %2856 = vmatmul.mubr.f32.gmra.mrb[0].mxu0 %v2762
        %v2857 = vpop.f32.mrb[0].mxu0
        %v2858 = vadd.f32 0.0, %v2857
        %v2859 = vpop.f32.mrb[0].mxu0
        %2860 = vmatprep.mubr.f32.mxu0 0.0
        %2861 = vmatmul.mubr.f32.gmra.mrb[0].mxu0 %v2765
        %v2862 = vpop.f32.mrb[0].mxu0
        %v2863 = vadd.f32 0.0, %v2862
        %v2864 = vpop.f32.mrb[0].mxu0
        %2865 = vmatprep.mubr.f32.mxu0 0.0
        %2866 = vmatmul.mubr.f32.gmra.mrb[0].mxu0 %v2768
        %v2867 = vpop.f32.mrb[0].mxu0
        %v2868 = vadd.f32 0.0, %v2867
        %v2869 = vpop.f32.mrb[0].mxu0
        %2870 = vmatprep.mubr.f32.mxu0 0.0
        %2871 = vmatmul.mubr.f32.gmra.mrb[0].mxu0 %v2771
        %v2872 = vpop.f32.mrb[0].mxu0
        %v2873 = vadd.f32 0.0, %v2872
        %v2874 = vpop.f32.mrb[0].mxu0
        %2875 = vmatprep.mubr.f32.mxu0 0.0
        %2876 = vmatmul.mubr.f32.gmra.mrb[0].mxu0 %v2774
        %v2877 = vpop.f32.mrb[0].mxu0
        %v2878 = vadd.f32 0.0, %v2877
        %v2879 = vpop.f32.mrb[0].mxu0
        %2880 = vdwg.mxu0
        %vm2881 = vcmask 523264
        %v2882 = vsel %vm2881, %v2456, -inf
        %2883 = vmax.xlane.f32.xlu0 %v2882
        %v2884 = vpop.xlane.xlu0 %2883
        %v2885 = vsel %vm2881, %v2461, -inf
        %2886 = vmax.xlane.f32.xlu0 %v2885
        %v2887 = vpop.xlane.xlu0 %2886
        %v2888 = vsel %vm2881, %v2466, -inf
        %2889 = vmax.xlane.f32.xlu0 %v2888
        %v2890 = vpop.xlane.xlu0 %2889
        %v2891 = vsel %vm2881, %v2471, -inf
        %2892 = vmax.xlane.f32.xlu0 %v2891
        %v2893 = vpop.xlane.xlu0 %2892
        %v2894 = vsel %vm2881, %v2476, -inf
        %2895 = vmax.xlane.f32.xlu0 %v2894
        %v2896 = vpop.xlane.xlu0 %2895
        %v2897 = vsel %vm2881, %v2481, -inf
        %2898 = vmax.xlane.f32.xlu0 %v2897
        %v2899 = vpop.xlane.xlu0 %2898
        %v2900 = vsel %vm2881, %v2486, -inf
        %2901 = vmax.xlane.f32.xlu0 %v2900
        %v2902 = vpop.xlane.xlu0 %2901
        %v2903 = vsel %vm2881, %v2491, -inf
        %2904 = vmax.xlane.f32.xlu0 %v2903
        %v2905 = vpop.xlane.xlu0 %2904
        %v2906 = vsel %vm2881, %v2585, -inf
        %2907 = vmax.xlane.f32.xlu0 %v2906
        %v2908 = vpop.xlane.xlu0 %2907
        %v2909 = vsel %vm2881, %v2590, -inf
        %2910 = vmax.xlane.f32.xlu0 %v2909
        %v2911 = vpop.xlane.xlu0 %2910
        %v2912 = vsel %vm2881, %v2595, -inf
        %2913 = vmax.xlane.f32.xlu0 %v2912
        %v2914 = vpop.xlane.xlu0 %2913
        %v2915 = vsel %vm2881, %v2600, -inf
        %2916 = vmax.xlane.f32.xlu0 %v2915
        %v2917 = vpop.xlane.xlu0 %2916
        %v2918 = vsel %vm2881, %v2605, -inf
        %2919 = vmax.xlane.f32.xlu0 %v2918
        %v2920 = vpop.xlane.xlu0 %2919
        %v2921 = vsel %vm2881, %v2610, -inf
        %2922 = vmax.xlane.f32.xlu0 %v2921
        %v2923 = vpop.xlane.xlu0 %2922
        %v2924 = vsel %vm2881, %v2615, -inf
        %2925 = vmax.xlane.f32.xlu0 %v2924
        %v2926 = vpop.xlane.xlu0 %2925
        %v2927 = vsel %vm2881, %v2620, -inf
        %2928 = vmax.xlane.f32.xlu0 %v2927
        %v2929 = vpop.xlane.xlu0 %2928
        %v2930 = vsel %vm2881, %v2714, -inf
        %2931 = vmax.xlane.f32.xlu0 %v2930
        %v2932 = vpop.xlane.xlu0 %2931
        %v2933 = vsel %vm2881, %v2719, -inf
        %2934 = vmax.xlane.f32.xlu0 %v2933
        %v2935 = vpop.xlane.xlu0 %2934
        %v2936 = vsel %vm2881, %v2724, -inf
        %2937 = vmax.xlane.f32.xlu0 %v2936
        %v2938 = vpop.xlane.xlu0 %2937
        %v2939 = vsel %vm2881, %v2729, -inf
        %2940 = vmax.xlane.f32.xlu0 %v2939
        %v2941 = vpop.xlane.xlu0 %2940
        %v2942 = vsel %vm2881, %v2734, -inf
        %2943 = vmax.xlane.f32.xlu0 %v2942
        %v2944 = vpop.xlane.xlu0 %2943
        %v2945 = vsel %vm2881, %v2739, -inf
        %2946 = vmax.xlane.f32.xlu0 %v2945
        %v2947 = vpop.xlane.xlu0 %2946
        %v2948 = vsel %vm2881, %v2744, -inf
        %2949 = vmax.xlane.f32.xlu0 %v2948
        %v2950 = vpop.xlane.xlu0 %2949
        %v2951 = vsel %vm2881, %v2749, -inf
        %2952 = vmax.xlane.f32.xlu0 %v2951
        %v2953 = vpop.xlane.xlu0 %2952
        %v2954 = vsel %vm2881, %v2843, -inf
        %2955 = vmax.xlane.f32.xlu0 %v2954
        %v2956 = vpop.xlane.xlu0 %2955
        %v2957 = vsel %vm2881, %v2848, -inf
        %2958 = vmax.xlane.f32.xlu0 %v2957
        %v2959 = vpop.xlane.xlu0 %2958
        %v2960 = vsel %vm2881, %v2853, -inf
        %2961 = vmax.xlane.f32.xlu0 %v2960
        %v2962 = vpop.xlane.xlu0 %2961
        %v2963 = vsel %vm2881, %v2858, -inf
        %2964 = vmax.xlane.f32.xlu0 %v2963
        %v2965 = vpop.xlane.xlu0 %2964
        %v2966 = vsel %vm2881, %v2863, -inf
        %2967 = vmax.xlane.f32.xlu0 %v2966
        %v2968 = vpop.xlane.xlu0 %2967
        %v2969 = vsel %vm2881, %v2868, -inf
        %2970 = vmax.xlane.f32.xlu0 %v2969
        %v2971 = vpop.xlane.xlu0 %2970
        %v2972 = vsel %vm2881, %v2873, -inf
        %2973 = vmax.xlane.f32.xlu0 %v2972
        %v2974 = vpop.xlane.xlu0 %2973
        %v2975 = vsel %vm2881, %v2878, -inf
        %2976 = vmax.xlane.f32.xlu0 %v2975
        %v2977 = vpop.xlane.xlu0 %2976
        %v2978 = vsub.f32 %v2456, %v2884
        %v2979 = vsub.f32 %v2461, %v2887
        %v2980 = vsub.f32 %v2466, %v2890
        %v2981 = vsub.f32 %v2471, %v2893
        %v2982 = vsub.f32 %v2476, %v2896
        %v2983 = vsub.f32 %v2481, %v2899
        %v2984 = vsub.f32 %v2486, %v2902
        %v2985 = vsub.f32 %v2491, %v2905
        %v2986 = vsub.f32 %v2585, %v2908
        %v2987 = vsub.f32 %v2590, %v2911
        %v2988 = vsub.f32 %v2595, %v2914
        %v2989 = vsub.f32 %v2600, %v2917
        %v2990 = vsub.f32 %v2605, %v2920
        %v2991 = vsub.f32 %v2610, %v2923
        %v2992 = vsub.f32 %v2615, %v2926
        %v2993 = vsub.f32 %v2620, %v2929
        %v2994 = vsub.f32 %v2714, %v2932
        %v2995 = vsub.f32 %v2719, %v2935
        %v2996 = vsub.f32 %v2724, %v2938
        %v2997 = vsub.f32 %v2729, %v2941
        %v2998 = vsub.f32 %v2734, %v2944
        %v2999 = vsub.f32 %v2739, %v2947
        %v3000 = vsub.f32 %v2744, %v2950
        %v3001 = vsub.f32 %v2749, %v2953
        %v3002 = vsub.f32 %v2843, %v2956
        %v3003 = vsub.f32 %v2848, %v2959
        %v3004 = vsub.f32 %v2853, %v2962
        %v3005 = vsub.f32 %v2858, %v2965
        %v3006 = vsub.f32 %v2863, %v2968
        %v3007 = vsub.f32 %v2868, %v2971
        %v3008 = vsub.f32 %v2873, %v2974
        %v3009 = vsub.f32 %v2878, %v2977
        %v3010 = vmul.f32 %v2978, 1.442695
        %v3011 = vpow.pop %v3010
        %v3012 = vmul.f32 %v2979, 1.442695
        %v3013 = vpow.pop %v3012
        %v3014 = vmul.f32 %v2980, 1.442695
        %v3015 = vpow.pop %v3014
        %v3016 = vmul.f32 %v2981, 1.442695
        %v3017 = vpow.pop %v3016
        %v3018 = vmul.f32 %v2982, 1.442695
        %v3019 = vpow.pop %v3018
        %v3020 = vmul.f32 %v2983, 1.442695
        %v3021 = vpow.pop %v3020
        %v3022 = vmul.f32 %v2984, 1.442695
        %v3023 = vpow.pop %v3022
        %v3024 = vmul.f32 %v2985, 1.442695
        %v3025 = vpow.pop %v3024
        %v3026 = vmul.f32 %v2986, 1.442695
        %v3027 = vpow.pop %v3026
        %v3028 = vmul.f32 %v2987, 1.442695
        %v3029 = vpow.pop %v3028
        %v3030 = vmul.f32 %v2988, 1.442695
        %v3031 = vpow.pop %v3030
        %v3032 = vmul.f32 %v2989, 1.442695
        %v3033 = vpow.pop %v3032
        %v3034 = vmul.f32 %v2990, 1.442695
        %v3035 = vpow.pop %v3034
        %v3036 = vmul.f32 %v2991, 1.442695
        %v3037 = vpow.pop %v3036
        %v3038 = vmul.f32 %v2992, 1.442695
        %v3039 = vpow.pop %v3038
        %v3040 = vmul.f32 %v2993, 1.442695
        %v3041 = vpow.pop %v3040
        %v3042 = vmul.f32 %v2994, 1.442695
        %v3043 = vpow.pop %v3042
        %v3044 = vmul.f32 %v2995, 1.442695
        %v3045 = vpow.pop %v3044
        %v3046 = vmul.f32 %v2996, 1.442695
        %v3047 = vpow.pop %v3046
        %v3048 = vmul.f32 %v2997, 1.442695
        %v3049 = vpow.pop %v3048
        %v3050 = vmul.f32 %v2998, 1.442695
        %v3051 = vpow.pop %v3050
        %v3052 = vmul.f32 %v2999, 1.442695
        %v3053 = vpow.pop %v3052
        %v3054 = vmul.f32 %v3000, 1.442695
        %v3055 = vpow.pop %v3054
        %v3056 = vmul.f32 %v3001, 1.442695
        %v3057 = vpow.pop %v3056
        %v3058 = vmul.f32 %v3002, 1.442695
        %v3059 = vpow.pop %v3058
        %v3060 = vmul.f32 %v3003, 1.442695
        %v3061 = vpow.pop %v3060
        %v3062 = vmul.f32 %v3004, 1.442695
        %v3063 = vpow.pop %v3062
        %v3064 = vmul.f32 %v3005, 1.442695
        %v3065 = vpow.pop %v3064
        %v3066 = vmul.f32 %v3006, 1.442695
        %v3067 = vpow.pop %v3066
        %v3068 = vmul.f32 %v3007, 1.442695
        %v3069 = vpow.pop %v3068
        %v3070 = vmul.f32 %v3008, 1.442695
        %v3071 = vpow.pop %v3070
        %v3072 = vmul.f32 %v3009, 1.442695
        %v3073 = vpow.pop %v3072
        %v3074 = vsel %vm2881, %v3011, 0.0
        %3075 = vadd.xlane.f32.xlu0 %v3074
        %v3076 = vpop.xlane.xlu0 %3075
        %v3077 = vsel %vm2881, %v3013, 0.0
        %3078 = vadd.xlane.f32.xlu0 %v3077
        %v3079 = vpop.xlane.xlu0 %3078
        %v3080 = vsel %vm2881, %v3015, 0.0
        %3081 = vadd.xlane.f32.xlu0 %v3080
        %v3082 = vpop.xlane.xlu0 %3081
        %v3083 = vsel %vm2881, %v3017, 0.0
        %3084 = vadd.xlane.f32.xlu0 %v3083
        %v3085 = vpop.xlane.xlu0 %3084
        %v3086 = vsel %vm2881, %v3019, 0.0
        %3087 = vadd.xlane.f32.xlu0 %v3086
        %v3088 = vpop.xlane.xlu0 %3087
        %v3089 = vsel %vm2881, %v3021, 0.0
        %3090 = vadd.xlane.f32.xlu0 %v3089
        %v3091 = vpop.xlane.xlu0 %3090
        %v3092 = vsel %vm2881, %v3023, 0.0
        %3093 = vadd.xlane.f32.xlu0 %v3092
        %v3094 = vpop.xlane.xlu0 %3093
        %v3095 = vsel %vm2881, %v3025, 0.0
        %3096 = vadd.xlane.f32.xlu0 %v3095
        %v3097 = vpop.xlane.xlu0 %3096
        %v3098 = vsel %vm2881, %v3027, 0.0
        %3099 = vadd.xlane.f32.xlu0 %v3098
        %v3100 = vpop.xlane.xlu0 %3099
        %v3101 = vsel %vm2881, %v3029, 0.0
        %3102 = vadd.xlane.f32.xlu0 %v3101
        %v3103 = vpop.xlane.xlu0 %3102
        %v3104 = vsel %vm2881, %v3031, 0.0
        %3105 = vadd.xlane.f32.xlu0 %v3104
        %v3106 = vpop.xlane.xlu0 %3105
        %v3107 = vsel %vm2881, %v3033, 0.0
        %3108 = vadd.xlane.f32.xlu0 %v3107
        %v3109 = vpop.xlane.xlu0 %3108
        %v3110 = vsel %vm2881, %v3035, 0.0
        %3111 = vadd.xlane.f32.xlu0 %v3110
        %v3112 = vpop.xlane.xlu0 %3111
        %v3113 = vsel %vm2881, %v3037, 0.0
        %3114 = vadd.xlane.f32.xlu0 %v3113
        %v3115 = vpop.xlane.xlu0 %3114
        %v3116 = vsel %vm2881, %v3039, 0.0
        %3117 = vadd.xlane.f32.xlu0 %v3116
        %v3118 = vpop.xlane.xlu0 %3117
        %v3119 = vsel %vm2881, %v3041, 0.0
        %3120 = vadd.xlane.f32.xlu0 %v3119
        %v3121 = vpop.xlane.xlu0 %3120
        %v3122 = vsel %vm2881, %v3043, 0.0
        %3123 = vadd.xlane.f32.xlu0 %v3122
        %v3124 = vpop.xlane.xlu0 %3123
        %v3125 = vsel %vm2881, %v3045, 0.0
        %3126 = vadd.xlane.f32.xlu0 %v3125
        %v3127 = vpop.xlane.xlu0 %3126
        %v3128 = vsel %vm2881, %v3047, 0.0
        %3129 = vadd.xlane.f32.xlu0 %v3128
        %v3130 = vpop.xlane.xlu0 %3129
        %v3131 = vsel %vm2881, %v3049, 0.0
        %3132 = vadd.xlane.f32.xlu0 %v3131
        %v3133 = vpop.xlane.xlu0 %3132
        %v3134 = vsel %vm2881, %v3051, 0.0
        %3135 = vadd.xlane.f32.xlu0 %v3134
        %v3136 = vpop.xlane.xlu0 %3135
        %v3137 = vsel %vm2881, %v3053, 0.0
        %3138 = vadd.xlane.f32.xlu0 %v3137
        %v3139 = vpop.xlane.xlu0 %3138
        %v3140 = vsel %vm2881, %v3055, 0.0
        %3141 = vadd.xlane.f32.xlu0 %v3140
        %v3142 = vpop.xlane.xlu0 %3141
        %v3143 = vsel %vm2881, %v3057, 0.0
        %3144 = vadd.xlane.f32.xlu0 %v3143
        %v3145 = vpop.xlane.xlu0 %3144
        %v3146 = vsel %vm2881, %v3059, 0.0
        %3147 = vadd.xlane.f32.xlu0 %v3146
        %v3148 = vpop.xlane.xlu0 %3147
        %v3149 = vsel %vm2881, %v3061, 0.0
        %3150 = vadd.xlane.f32.xlu0 %v3149
        %v3151 = vpop.xlane.xlu0 %3150
        %v3152 = vsel %vm2881, %v3063, 0.0
        %3153 = vadd.xlane.f32.xlu0 %v3152
        %v3154 = vpop.xlane.xlu0 %3153
        %v3155 = vsel %vm2881, %v3065, 0.0
        %3156 = vadd.xlane.f32.xlu0 %v3155
        %v3157 = vpop.xlane.xlu0 %3156
        %v3158 = vsel %vm2881, %v3067, 0.0
        %3159 = vadd.xlane.f32.xlu0 %v3158
        %v3160 = vpop.xlane.xlu0 %3159
        %v3161 = vsel %vm2881, %v3069, 0.0
        %3162 = vadd.xlane.f32.xlu0 %v3161
        %v3163 = vpop.xlane.xlu0 %3162
        %v3164 = vsel %vm2881, %v3071, 0.0
        %3165 = vadd.xlane.f32.xlu0 %v3164
        %v3166 = vpop.xlane.xlu0 %3165
        %v3167 = vsel %vm2881, %v3073, 0.0
        %3168 = vadd.xlane.f32.xlu0 %v3167
        %v3169 = vpop.xlane.xlu0 %3168
        %v3170 = vrcp.pop %v3076
        %v3171 = vmul.f32 %v3011, %v3170
        %v3172 = vrcp.pop %v3079
        %v3173 = vmul.f32 %v3013, %v3172
        %v3174 = vrcp.pop %v3082
        %v3175 = vmul.f32 %v3015, %v3174
        %v3176 = vrcp.pop %v3085
        %v3177 = vmul.f32 %v3017, %v3176
        %v3178 = vrcp.pop %v3088
        %v3179 = vmul.f32 %v3019, %v3178
        %v3180 = vrcp.pop %v3091
        %v3181 = vmul.f32 %v3021, %v3180
        %v3182 = vrcp.pop %v3094
        %v3183 = vmul.f32 %v3023, %v3182
        %v3184 = vrcp.pop %v3097
        %v3185 = vmul.f32 %v3025, %v3184
        %v3186 = vrcp.pop %v3100
        %v3187 = vmul.f32 %v3027, %v3186
        %v3188 = vrcp.pop %v3103
        %v3189 = vmul.f32 %v3029, %v3188
        %v3190 = vrcp.pop %v3106
        %v3191 = vmul.f32 %v3031, %v3190
        %v3192 = vrcp.pop %v3109
        %v3193 = vmul.f32 %v3033, %v3192
        %v3194 = vrcp.pop %v3112
        %v3195 = vmul.f32 %v3035, %v3194
        %v3196 = vrcp.pop %v3115
        %v3197 = vmul.f32 %v3037, %v3196
        %v3198 = vrcp.pop %v3118
        %v3199 = vmul.f32 %v3039, %v3198
        %v3200 = vrcp.pop %v3121
        %v3201 = vmul.f32 %v3041, %v3200
        %v3202 = vrcp.pop %v3124
        %v3203 = vmul.f32 %v3043, %v3202
        %v3204 = vrcp.pop %v3127
        %v3205 = vmul.f32 %v3045, %v3204
        %v3206 = vrcp.pop %v3130
        %v3207 = vmul.f32 %v3047, %v3206
        %v3208 = vrcp.pop %v3133
        %v3209 = vmul.f32 %v3049, %v3208
        %v3210 = vrcp.pop %v3136
        %v3211 = vmul.f32 %v3051, %v3210
        %v3212 = vrcp.pop %v3139
        %v3213 = vmul.f32 %v3053, %v3212
        %v3214 = vrcp.pop %v3142
        %v3215 = vmul.f32 %v3055, %v3214
        %v3216 = vrcp.pop %v3145
        %v3217 = vmul.f32 %v3057, %v3216
        %v3218 = vrcp.pop %v3148
        %v3219 = vmul.f32 %v3059, %v3218
        %v3220 = vrcp.pop %v3151
        %v3221 = vmul.f32 %v3061, %v3220
        %v3222 = vrcp.pop %v3154
        %v3223 = vmul.f32 %v3063, %v3222
        %v3224 = vrcp.pop %v3157
        %v3225 = vmul.f32 %v3065, %v3224
        %v3226 = vrcp.pop %v3160
        %v3227 = vmul.f32 %v3067, %v3226
        %v3228 = vrcp.pop %v3163
        %v3229 = vmul.f32 %v3069, %v3228
        %v3230 = vrcp.pop %v3166
        %v3231 = vmul.f32 %v3071, %v3230
        %v3232 = vrcp.pop %v3169
        %v3233 = vmul.f32 %v3073, %v3232
        %3234 = vrot.lane.b32.xlu0 %v2207, 112
        %v3235 = vpop.permute.xlu0 %3234
        %3236 = vrot.lane.b32.xlu0 %v2212, 112
        %v3237 = vpop.permute.xlu0 %3236
        %3238 = vrot.lane.b32.xlu0 %v2217, 112
        %v3239 = vpop.permute.xlu0 %3238
        %3240 = vrot.lane.b32.xlu0 %v2222, 112
        %v3241 = vpop.permute.xlu0 %3240
        %3242 = vrot.lane.b32.xlu0 %v2227, 112
        %v3243 = vpop.permute.xlu0 %3242
        %3244 = vrot.lane.b32.xlu0 %v2232, 112
        %v3245 = vpop.permute.xlu0 %3244
        %3246 = vrot.lane.b32.xlu0 %v2237, 112
        %v3247 = vpop.permute.xlu0 %3246
        %3248 = vrot.lane.b32.xlu0 %v2242, 112
        %v3249 = vpop.permute.xlu0 %3248
        %v3259 = vsel %vm2881, %v3171, 0
        %v3262 = vsel %vm2881, %v3173, 0
        %v3265 = vsel %vm2881, %v3175, 0
        %v3268 = vsel %vm2881, %v3177, 0
        %v3271 = vsel %vm2881, %v3179, 0
        %v3274 = vsel %vm2881, %v3181, 0
        %v3277 = vsel %vm2881, %v3183, 0
        %v3280 = vsel %vm2881, %v3185, 0
        %3282 = vmatprep.subr.mxu0 0.0
        %3283 = vmatpush1.msra.mxu0 %v3235
        %3284 = vmatprep.subr.mxu0 0.0
        %3285 = vmatpush1.msra.mxu0 %v3237
        %3286 = vmatprep.subr.mxu0 0.0
        %3287 = vmatpush1.msra.mxu0 %v3239
        %3288 = vmatprep.subr.mxu0 0.0
        %3289 = vmatpush1.msra.mxu0 %v3241
        %3290 = vmatprep.subr.mxu0 0.0
        %3291 = vmatpush1.msra.mxu0 %v3243
        %3292 = vmatprep.subr.mxu0 0.0
        %3293 = vmatpush1.msra.mxu0 %v3245
        %3294 = vmatprep.subr.mxu0 0.0
        %3295 = vmatpush1.msra.mxu0 %v3247
        %3296 = vmatprep.subr.mxu0 0.0
        %3297 = vmatpush1.msra.mxu0 %v3249
        %3298 = vmatprep.subr.mxu0 0.0
        %3299 = vmatpush1.msra.mxu0 0.0
        %3300 = vmatprep.subr.mxu0 0.0
        %3301 = vmatpush1.msra.mxu0 0.0
        %3302 = vmatprep.subr.mxu0 0.0
        %3303 = vmatpush1.msra.mxu0 0.0
        %3304 = vmatprep.subr.mxu0 0.0
        %3305 = vmatpush1.msra.mxu0 0.0
        %3306 = vmatprep.subr.mxu0 0.0
        %3307 = vmatpush1.msra.mxu0 0.0
        %3308 = vmatprep.subr.mxu0 0.0
        %3309 = vmatpush1.msra.mxu0 0.0
        %3310 = vmatprep.subr.mxu0 0.0
        %3311 = vmatpush1.msra.mxu0 0.0
        %3312 = vmatprep.subr.mxu0 0.0
        %3313 = vmatpush1.msra.mxu0 0.0
        %3314 = vmatprep.subr.mxu0 0.0
        %3315 = vmatpush1.msra.mxu0 0.0
        %3316 = vmatprep.subr.mxu0 0.0
        %3317 = vmatpush1.msra.mxu0 0.0
        %3318 = vmatprep.subr.mxu0 0.0
        %3319 = vmatpush1.msra.mxu0 0.0
        %3320 = vmatprep.subr.mxu0 0.0
        %3321 = vmatpush1.msra.mxu0 0.0
        %3322 = vmatprep.subr.mxu0 0.0
        %3323 = vmatpush1.msra.mxu0 0.0
        %3324 = vmatprep.subr.mxu0 0.0
        %3325 = vmatpush1.msra.mxu0 0.0
        %3326 = vmatprep.subr.mxu0 0.0
        %3327 = vmatpush1.msra.mxu0 0.0
        %3328 = vmatprep.subr.mxu0 0.0
        %3329 = vmatpush1.msra.mxu0 0.0
        %3330 = vmatprep.subr.mxu0 0.0
        %3331 = vmatpush1.msra.mxu0 0.0
        %3332 = vmatprep.subr.mxu0 0.0
        %3333 = vmatpush1.msra.mxu0 0.0
        %3334 = vmatprep.subr.mxu0 0.0
        %3335 = vmatpush1.msra.mxu0 0.0
        %3336 = vmatprep.subr.mxu0 0.0
        %3337 = vmatpush1.msra.mxu0 0.0
        %3338 = vmatprep.subr.mxu0 0.0
        %3339 = vmatpush1.msra.mxu0 0.0
        %3340 = vmatprep.subr.mxu0 0.0
        %3341 = vmatpush1.msra.mxu0 0.0
        %3342 = vmatprep.subr.mxu0 0.0
        %3343 = vmatpush1.msra.mxu0 0.0
        %3344 = vmatprep.subr.mxu0 0.0
        %3345 = vmatpush1.msra.mxu0 0.0
        %3346 = vmatprep.mubr.f32.mxu0 0.0
        %3347 = vmatmul.mubr.f32.gmra.mrb[0].mxu0 %v3259
        %v3348 = vpop.f32.mrb[0].mxu0
        %v3349 = vadd.f32 %v2003, %v3348
        %v3350 = vpop.f32.mrb[0].mxu0
        %3351 = vmatprep.mubr.f32.mxu0 0.0
        %3352 = vmatmul.mubr.f32.gmra.mrb[0].mxu0 %v3262
        %v3353 = vpop.f32.mrb[0].mxu0
        %v3354 = vadd.f32 %v2004, %v3353
        %v3355 = vpop.f32.mrb[0].mxu0
        %3356 = vmatprep.mubr.f32.mxu0 0.0
        %3357 = vmatmul.mubr.f32.gmra.mrb[0].mxu0 %v3265
        %v3358 = vpop.f32.mrb[0].mxu0
        %v3359 = vadd.f32 %v2005, %v3358
        %v3360 = vpop.f32.mrb[0].mxu0
        %3361 = vmatprep.mubr.f32.mxu0 0.0
        %3362 = vmatmul.mubr.f32.gmra.mrb[0].mxu0 %v3268
        %v3363 = vpop.f32.mrb[0].mxu0
        %v3364 = vadd.f32 %v2006, %v3363
        %v3365 = vpop.f32.mrb[0].mxu0
        %3366 = vmatprep.mubr.f32.mxu0 0.0
        %3367 = vmatmul.mubr.f32.gmra.mrb[0].mxu0 %v3271
        %v3368 = vpop.f32.mrb[0].mxu0
        %v3369 = vadd.f32 %v2007, %v3368
        %v3370 = vpop.f32.mrb[0].mxu0
        %3371 = vmatprep.mubr.f32.mxu0 0.0
        %3372 = vmatmul.mubr.f32.gmra.mrb[0].mxu0 %v3274
        %v3373 = vpop.f32.mrb[0].mxu0
        %v3374 = vadd.f32 %v2008, %v3373
        %v3375 = vpop.f32.mrb[0].mxu0
        %3376 = vmatprep.mubr.f32.mxu0 0.0
        %3377 = vmatmul.mubr.f32.gmra.mrb[0].mxu0 %v3277
        %v3378 = vpop.f32.mrb[0].mxu0
        %v3379 = vadd.f32 %v2009, %v3378
        %v3380 = vpop.f32.mrb[0].mxu0
        %3381 = vmatprep.mubr.f32.mxu0 0.0
        %3382 = vmatmul.mubr.f32.gmra.mrb[0].mxu0 %v3280
        %v3383 = vpop.f32.mrb[0].mxu0
        %v3384 = vadd.f32 %v2010, %v3383
        %v3385 = vpop.f32.mrb[0].mxu0
        %3386 = vdwg.mxu0
        %3387 = vrot.lane.b32.xlu0 %v2247, 112
        %v3388 = vpop.permute.xlu0 %3387
        %3389 = vrot.lane.b32.xlu0 %v2252, 112
        %v3390 = vpop.permute.xlu0 %3389
        %3391 = vrot.lane.b32.xlu0 %v2257, 112
        %v3392 = vpop.permute.xlu0 %3391
        %3393 = vrot.lane.b32.xlu0 %v2262, 112
        %v3394 = vpop.permute.xlu0 %3393
        %3395 = vrot.lane.b32.xlu0 %v2267, 112
        %v3396 = vpop.permute.xlu0 %3395
        %3397 = vrot.lane.b32.xlu0 %v2272, 112
        %v3398 = vpop.permute.xlu0 %3397
        %3399 = vrot.lane.b32.xlu0 %v2277, 112
        %v3400 = vpop.permute.xlu0 %3399
        %3401 = vrot.lane.b32.xlu0 %v2282, 112
        %v3402 = vpop.permute.xlu0 %3401
        %v3412 = vsel %vm2881, %v3187, 0
        %v3415 = vsel %vm2881, %v3189, 0
        %v3418 = vsel %vm2881, %v3191, 0
        %v3421 = vsel %vm2881, %v3193, 0
        %v3424 = vsel %vm2881, %v3195, 0
        %v3427 = vsel %vm2881, %v3197, 0
        %v3430 = vsel %vm2881, %v3199, 0
        %v3433 = vsel %vm2881, %v3201, 0
        %3435 = vmatprep.subr.mxu0 0.0
        %3436 = vmatpush1.msra.mxu0 %v3388
        %3437 = vmatprep.subr.mxu0 0.0
        %3438 = vmatpush1.msra.mxu0 %v3390
        %3439 = vmatprep.subr.mxu0 0.0
        %3440 = vmatpush1.msra.mxu0 %v3392
        %3441 = vmatprep.subr.mxu0 0.0
        %3442 = vmatpush1.msra.mxu0 %v3394
        %3443 = vmatprep.subr.mxu0 0.0
        %3444 = vmatpush1.msra.mxu0 %v3396
        %3445 = vmatprep.subr.mxu0 0.0
        %3446 = vmatpush1.msra.mxu0 %v3398
        %3447 = vmatprep.subr.mxu0 0.0
        %3448 = vmatpush1.msra.mxu0 %v3400
        %3449 = vmatprep.subr.mxu0 0.0
        %3450 = vmatpush1.msra.mxu0 %v3402
        %3451 = vmatprep.subr.mxu0 0.0
        %3452 = vmatpush1.msra.mxu0 0.0
        %3453 = vmatprep.subr.mxu0 0.0
        %3454 = vmatpush1.msra.mxu0 0.0
        %3455 = vmatprep.subr.mxu0 0.0
        %3456 = vmatpush1.msra.mxu0 0.0
        %3457 = vmatprep.subr.mxu0 0.0
        %3458 = vmatpush1.msra.mxu0 0.0
        %3459 = vmatprep.subr.mxu0 0.0
        %3460 = vmatpush1.msra.mxu0 0.0
        %3461 = vmatprep.subr.mxu0 0.0
        %3462 = vmatpush1.msra.mxu0 0.0
        %3463 = vmatprep.subr.mxu0 0.0
        %3464 = vmatpush1.msra.mxu0 0.0
        %3465 = vmatprep.subr.mxu0 0.0
        %3466 = vmatpush1.msra.mxu0 0.0
        %3467 = vmatprep.subr.mxu0 0.0
        %3468 = vmatpush1.msra.mxu0 0.0
        %3469 = vmatprep.subr.mxu0 0.0
        %3470 = vmatpush1.msra.mxu0 0.0
        %3471 = vmatprep.subr.mxu0 0.0
        %3472 = vmatpush1.msra.mxu0 0.0
        %3473 = vmatprep.subr.mxu0 0.0
        %3474 = vmatpush1.msra.mxu0 0.0
        %3475 = vmatprep.subr.mxu0 0.0
        %3476 = vmatpush1.msra.mxu0 0.0
        %3477 = vmatprep.subr.mxu0 0.0
        %3478 = vmatpush1.msra.mxu0 0.0
        %3479 = vmatprep.subr.mxu0 0.0
        %3480 = vmatpush1.msra.mxu0 0.0
        %3481 = vmatprep.subr.mxu0 0.0
        %3482 = vmatpush1.msra.mxu0 0.0
        %3483 = vmatprep.subr.mxu0 0.0
        %3484 = vmatpush1.msra.mxu0 0.0
        %3485 = vmatprep.subr.mxu0 0.0
        %3486 = vmatpush1.msra.mxu0 0.0
        %3487 = vmatprep.subr.mxu0 0.0
        %3488 = vmatpush1.msra.mxu0 0.0
        %3489 = vmatprep.subr.mxu0 0.0
        %3490 = vmatpush1.msra.mxu0 0.0
        %3491 = vmatprep.subr.mxu0 0.0
        %3492 = vmatpush1.msra.mxu0 0.0
        %3493 = vmatprep.subr.mxu0 0.0
        %3494 = vmatpush1.msra.mxu0 0.0
        %3495 = vmatprep.subr.mxu0 0.0
        %3496 = vmatpush1.msra.mxu0 0.0
        %3497 = vmatprep.subr.mxu0 0.0
        %3498 = vmatpush1.msra.mxu0 0.0
        %3499 = vmatprep.mubr.f32.mxu0 0.0
        %3500 = vmatmul.mubr.f32.gmra.mrb[0].mxu0 %v3412
        %v3501 = vpop.f32.mrb[0].mxu0
        %v3502 = vadd.f32 %v2011, %v3501
        %v3503 = vpop.f32.mrb[0].mxu0
        %3504 = vmatprep.mubr.f32.mxu0 0.0
        %3505 = vmatmul.mubr.f32.gmra.mrb[0].mxu0 %v3415
        %v3506 = vpop.f32.mrb[0].mxu0
        %v3507 = vadd.f32 %v2012, %v3506
        %v3508 = vpop.f32.mrb[0].mxu0
        %3509 = vmatprep.mubr.f32.mxu0 0.0
        %3510 = vmatmul.mubr.f32.gmra.mrb[0].mxu0 %v3418
        %v3511 = vpop.f32.mrb[0].mxu0
        %v3512 = vadd.f32 %v2013, %v3511
        %v3513 = vpop.f32.mrb[0].mxu0
        %3514 = vmatprep.mubr.f32.mxu0 0.0
        %3515 = vmatmul.mubr.f32.gmra.mrb[0].mxu0 %v3421
        %v3516 = vpop.f32.mrb[0].mxu0
        %v3517 = vadd.f32 %v2014, %v3516
        %v3518 = vpop.f32.mrb[0].mxu0
        %3519 = vmatprep.mubr.f32.mxu0 0.0
        %3520 = vmatmul.mubr.f32.gmra.mrb[0].mxu0 %v3424
        %v3521 = vpop.f32.mrb[0].mxu0
        %v3522 = vadd.f32 %v2015, %v3521
        %v3523 = vpop.f32.mrb[0].mxu0
        %3524 = vmatprep.mubr.f32.mxu0 0.0
        %3525 = vmatmul.mubr.f32.gmra.mrb[0].mxu0 %v3427
        %v3526 = vpop.f32.mrb[0].mxu0
        %v3527 = vadd.f32 %v2016, %v3526
        %v3528 = vpop.f32.mrb[0].mxu0
        %3529 = vmatprep.mubr.f32.mxu0 0.0
        %3530 = vmatmul.mubr.f32.gmra.mrb[0].mxu0 %v3430
        %v3531 = vpop.f32.mrb[0].mxu0
        %v3532 = vadd.f32 %v2017, %v3531
        %v3533 = vpop.f32.mrb[0].mxu0
        %3534 = vmatprep.mubr.f32.mxu0 0.0
        %3535 = vmatmul.mubr.f32.gmra.mrb[0].mxu0 %v3433
        %v3536 = vpop.f32.mrb[0].mxu0
        %v3537 = vadd.f32 %v2018, %v3536
        %v3538 = vpop.f32.mrb[0].mxu0
        %3539 = vdwg.mxu0
        %3540 = vrot.lane.b32.xlu0 %v2287, 112
        %v3541 = vpop.permute.xlu0 %3540
        %3542 = vrot.lane.b32.xlu0 %v2292, 112
        %v3543 = vpop.permute.xlu0 %3542
        %3544 = vrot.lane.b32.xlu0 %v2297, 112
        %v3545 = vpop.permute.xlu0 %3544
        %3546 = vrot.lane.b32.xlu0 %v2302, 112
        %v3547 = vpop.permute.xlu0 %3546
        %3548 = vrot.lane.b32.xlu0 %v2307, 112
        %v3549 = vpop.permute.xlu0 %3548
        %3550 = vrot.lane.b32.xlu0 %v2312, 112
        %v3551 = vpop.permute.xlu0 %3550
        %3552 = vrot.lane.b32.xlu0 %v2317, 112
        %v3553 = vpop.permute.xlu0 %3552
        %3554 = vrot.lane.b32.xlu0 %v2322, 112
        %v3555 = vpop.permute.xlu0 %3554
        %v3565 = vsel %vm2881, %v3203, 0
        %v3568 = vsel %vm2881, %v3205, 0
        %v3571 = vsel %vm2881, %v3207, 0
        %v3574 = vsel %vm2881, %v3209, 0
        %v3577 = vsel %vm2881, %v3211, 0
        %v3580 = vsel %vm2881, %v3213, 0
        %v3583 = vsel %vm2881, %v3215, 0
        %v3586 = vsel %vm2881, %v3217, 0
        %3588 = vmatprep.subr.mxu0 0.0
        %3589 = vmatpush1.msra.mxu0 %v3541
        %3590 = vmatprep.subr.mxu0 0.0
        %3591 = vmatpush1.msra.mxu0 %v3543
        %3592 = vmatprep.subr.mxu0 0.0
        %3593 = vmatpush1.msra.mxu0 %v3545
        %3594 = vmatprep.subr.mxu0 0.0
        %3595 = vmatpush1.msra.mxu0 %v3547
        %3596 = vmatprep.subr.mxu0 0.0
        %3597 = vmatpush1.msra.mxu0 %v3549
        %3598 = vmatprep.subr.mxu0 0.0
        %3599 = vmatpush1.msra.mxu0 %v3551
        %3600 = vmatprep.subr.mxu0 0.0
        %3601 = vmatpush1.msra.mxu0 %v3553
        %3602 = vmatprep.subr.mxu0 0.0
        %3603 = vmatpush1.msra.mxu0 %v3555
        %3604 = vmatprep.subr.mxu0 0.0
        %3605 = vmatpush1.msra.mxu0 0.0
        %3606 = vmatprep.subr.mxu0 0.0
        %3607 = vmatpush1.msra.mxu0 0.0
        %3608 = vmatprep.subr.mxu0 0.0
        %3609 = vmatpush1.msra.mxu0 0.0
        %3610 = vmatprep.subr.mxu0 0.0
        %3611 = vmatpush1.msra.mxu0 0.0
        %3612 = vmatprep.subr.mxu0 0.0
        %3613 = vmatpush1.msra.mxu0 0.0
        %3614 = vmatprep.subr.mxu0 0.0
        %3615 = vmatpush1.msra.mxu0 0.0
        %3616 = vmatprep.subr.mxu0 0.0
        %3617 = vmatpush1.msra.mxu0 0.0
        %3618 = vmatprep.subr.mxu0 0.0
        %3619 = vmatpush1.msra.mxu0 0.0
        %3620 = vmatprep.subr.mxu0 0.0
        %3621 = vmatpush1.msra.mxu0 0.0
        %3622 = vmatprep.subr.mxu0 0.0
        %3623 = vmatpush1.msra.mxu0 0.0
        %3624 = vmatprep.subr.mxu0 0.0
        %3625 = vmatpush1.msra.mxu0 0.0
        %3626 = vmatprep.subr.mxu0 0.0
        %3627 = vmatpush1.msra.mxu0 0.0
        %3628 = vmatprep.subr.mxu0 0.0
        %3629 = vmatpush1.msra.mxu0 0.0
        %3630 = vmatprep.subr.mxu0 0.0
        %3631 = vmatpush1.msra.mxu0 0.0
        %3632 = vmatprep.subr.mxu0 0.0
        %3633 = vmatpush1.msra.mxu0 0.0
        %3634 = vmatprep.subr.mxu0 0.0
        %3635 = vmatpush1.msra.mxu0 0.0
        %3636 = vmatprep.subr.mxu0 0.0
        %3637 = vmatpush1.msra.mxu0 0.0
        %3638 = vmatprep.subr.mxu0 0.0
        %3639 = vmatpush1.msra.mxu0 0.0
        %3640 = vmatprep.subr.mxu0 0.0
        %3641 = vmatpush1.msra.mxu0 0.0
        %3642 = vmatprep.subr.mxu0 0.0
        %3643 = vmatpush1.msra.mxu0 0.0
        %3644 = vmatprep.subr.mxu0 0.0
        %3645 = vmatpush1.msra.mxu0 0.0
        %3646 = vmatprep.subr.mxu0 0.0
        %3647 = vmatpush1.msra.mxu0 0.0
        %3648 = vmatprep.subr.mxu0 0.0
        %3649 = vmatpush1.msra.mxu0 0.0
        %3650 = vmatprep.subr.mxu0 0.0
        %3651 = vmatpush1.msra.mxu0 0.0
        %3652 = vmatprep.mubr.f32.mxu0 0.0
        %3653 = vmatmul.mubr.f32.gmra.mrb[0].mxu0 %v3565
        %v3654 = vpop.f32.mrb[0].mxu0
        %v3655 = vadd.f32 %v2019, %v3654
        %v3656 = vpop.f32.mrb[0].mxu0
        %3657 = vmatprep.mubr.f32.mxu0 0.0
        %3658 = vmatmul.mubr.f32.gmra.mrb[0].mxu0 %v3568
        %v3659 = vpop.f32.mrb[0].mxu0
        %v3660 = vadd.f32 %v2020, %v3659
        %v3661 = vpop.f32.mrb[0].mxu0
        %3662 = vmatprep.mubr.f32.mxu0 0.0
        %3663 = vmatmul.mubr.f32.gmra.mrb[0].mxu0 %v3571
        %v3664 = vpop.f32.mrb[0].mxu0
        %v3665 = vadd.f32 %v2021, %v3664
        %v3666 = vpop.f32.mrb[0].mxu0
        %3667 = vmatprep.mubr.f32.mxu0 0.0
        %3668 = vmatmul.mubr.f32.gmra.mrb[0].mxu0 %v3574
        %v3669 = vpop.f32.mrb[0].mxu0
        %v3670 = vadd.f32 %v2022, %v3669
        %v3671 = vpop.f32.mrb[0].mxu0
        %3672 = vmatprep.mubr.f32.mxu0 0.0
        %3673 = vmatmul.mubr.f32.gmra.mrb[0].mxu0 %v3577
        %v3674 = vpop.f32.mrb[0].mxu0
        %v3675 = vadd.f32 %v2023, %v3674
        %v3676 = vpop.f32.mrb[0].mxu0
        %3677 = vmatprep.mubr.f32.mxu0 0.0
        %3678 = vmatmul.mubr.f32.gmra.mrb[0].mxu0 %v3580
        %v3679 = vpop.f32.mrb[0].mxu0
        %v3680 = vadd.f32 %v2024, %v3679
        %v3681 = vpop.f32.mrb[0].mxu0
        %3682 = vmatprep.mubr.f32.mxu0 0.0
        %3683 = vmatmul.mubr.f32.gmra.mrb[0].mxu0 %v3583
        %v3684 = vpop.f32.mrb[0].mxu0
        %v3685 = vadd.f32 %v2025, %v3684
        %v3686 = vpop.f32.mrb[0].mxu0
        %3687 = vmatprep.mubr.f32.mxu0 0.0
        %3688 = vmatmul.mubr.f32.gmra.mrb[0].mxu0 %v3586
        %v3689 = vpop.f32.mrb[0].mxu0
        %v3690 = vadd.f32 %v2026, %v3689
        %v3691 = vpop.f32.mrb[0].mxu0
        %3692 = vdwg.mxu0
        %3693 = vrot.lane.b32.xlu0 %v2327, 112
        %v3694 = vpop.permute.xlu0 %3693
        %3695 = vrot.lane.b32.xlu0 %v2332, 112
        %v3696 = vpop.permute.xlu0 %3695
        %3697 = vrot.lane.b32.xlu0 %v2337, 112
        %v3698 = vpop.permute.xlu0 %3697
        %3699 = vrot.lane.b32.xlu0 %v2342, 112
        %v3700 = vpop.permute.xlu0 %3699
        %3701 = vrot.lane.b32.xlu0 %v2347, 112
        %v3702 = vpop.permute.xlu0 %3701
        %3703 = vrot.lane.b32.xlu0 %v2352, 112
        %v3704 = vpop.permute.xlu0 %3703
        %3705 = vrot.lane.b32.xlu0 %v2357, 112
        %v3706 = vpop.permute.xlu0 %3705
        %3707 = vrot.lane.b32.xlu0 %v2362, 112
        %v3708 = vpop.permute.xlu0 %3707
        %v3718 = vsel %vm2881, %v3219, 0
        %v3721 = vsel %vm2881, %v3221, 0
        %v3724 = vsel %vm2881, %v3223, 0
        %v3727 = vsel %vm2881, %v3225, 0
        %v3730 = vsel %vm2881, %v3227, 0
        %v3733 = vsel %vm2881, %v3229, 0
        %v3736 = vsel %vm2881, %v3231, 0
        %v3739 = vsel %vm2881, %v3233, 0
        %3741 = vmatprep.subr.mxu0 0.0
        %3742 = vmatpush1.msra.mxu0 %v3694
        %3743 = vmatprep.subr.mxu0 0.0
        %3744 = vmatpush1.msra.mxu0 %v3696
        %3745 = vmatprep.subr.mxu0 0.0
        %3746 = vmatpush1.msra.mxu0 %v3698
        %3747 = vmatprep.subr.mxu0 0.0
        %3748 = vmatpush1.msra.mxu0 %v3700
        %3749 = vmatprep.subr.mxu0 0.0
        %3750 = vmatpush1.msra.mxu0 %v3702
        %3751 = vmatprep.subr.mxu0 0.0
        %3752 = vmatpush1.msra.mxu0 %v3704
        %3753 = vmatprep.subr.mxu0 0.0
        %3754 = vmatpush1.msra.mxu0 %v3706
        %3755 = vmatprep.subr.mxu0 0.0
        %3756 = vmatpush1.msra.mxu0 %v3708
        %3757 = vmatprep.subr.mxu0 0.0
        %3758 = vmatpush1.msra.mxu0 0.0
        %3759 = vmatprep.subr.mxu0 0.0
        %3760 = vmatpush1.msra.mxu0 0.0
        %3761 = vmatprep.subr.mxu0 0.0
        %3762 = vmatpush1.msra.mxu0 0.0
        %3763 = vmatprep.subr.mxu0 0.0
        %3764 = vmatpush1.msra.mxu0 0.0
        %3765 = vmatprep.subr.mxu0 0.0
        %3766 = vmatpush1.msra.mxu0 0.0
        %3767 = vmatprep.subr.mxu0 0.0
        %3768 = vmatpush1.msra.mxu0 0.0
        %3769 = vmatprep.subr.mxu0 0.0
        %3770 = vmatpush1.msra.mxu0 0.0
        %3771 = vmatprep.subr.mxu0 0.0
        %3772 = vmatpush1.msra.mxu0 0.0
        %3773 = vmatprep.subr.mxu0 0.0
        %3774 = vmatpush1.msra.mxu0 0.0
        %3775 = vmatprep.subr.mxu0 0.0
        %3776 = vmatpush1.msra.mxu0 0.0
        %3777 = vmatprep.subr.mxu0 0.0
        %3778 = vmatpush1.msra.mxu0 0.0
        %3779 = vmatprep.subr.mxu0 0.0
        %3780 = vmatpush1.msra.mxu0 0.0
        %3781 = vmatprep.subr.mxu0 0.0
        %3782 = vmatpush1.msra.mxu0 0.0
        %3783 = vmatprep.subr.mxu0 0.0
        %3784 = vmatpush1.msra.mxu0 0.0
        %3785 = vmatprep.subr.mxu0 0.0
        %3786 = vmatpush1.msra.mxu0 0.0
        %3787 = vmatprep.subr.mxu0 0.0
        %3788 = vmatpush1.msra.mxu0 0.0
        %3789 = vmatprep.subr.mxu0 0.0
        %3790 = vmatpush1.msra.mxu0 0.0
        %3791 = vmatprep.subr.mxu0 0.0
        %3792 = vmatpush1.msra.mxu0 0.0
        %3793 = vmatprep.subr.mxu0 0.0
        %3794 = vmatpush1.msra.mxu0 0.0
        %3795 = vmatprep.subr.mxu0 0.0
        %3796 = vmatpush1.msra.mxu0 0.0
        %3797 = vmatprep.subr.mxu0 0.0
        %3798 = vmatpush1.msra.mxu0 0.0
        %3799 = vmatprep.subr.mxu0 0.0
        %3800 = vmatpush1.msra.mxu0 0.0
        %3801 = vmatprep.subr.mxu0 0.0
        %3802 = vmatpush1.msra.mxu0 0.0
        %3803 = vmatprep.subr.mxu0 0.0
        %3804 = vmatpush1.msra.mxu0 0.0
        %3805 = vmatprep.mubr.f32.mxu0 0.0
        %3806 = vmatmul.mubr.f32.gmra.mrb[0].mxu0 %v3718
        %v3807 = vpop.f32.mrb[0].mxu0
        %v3808 = vadd.f32 %v2027, %v3807
        %v3809 = vpop.f32.mrb[0].mxu0
        %3810 = vmatprep.mubr.f32.mxu0 0.0
        %3811 = vmatmul.mubr.f32.gmra.mrb[0].mxu0 %v3721
        %v3812 = vpop.f32.mrb[0].mxu0
        %v3813 = vadd.f32 %v2028, %v3812
        %v3814 = vpop.f32.mrb[0].mxu0
        %3815 = vmatprep.mubr.f32.mxu0 0.0
        %3816 = vmatmul.mubr.f32.gmra.mrb[0].mxu0 %v3724
        %v3817 = vpop.f32.mrb[0].mxu0
        %v3818 = vadd.f32 %v2029, %v3817
        %v3819 = vpop.f32.mrb[0].mxu0
        %3820 = vmatprep.mubr.f32.mxu0 0.0
        %3821 = vmatmul.mubr.f32.gmra.mrb[0].mxu0 %v3727
        %v3822 = vpop.f32.mrb[0].mxu0
        %v3823 = vadd.f32 %v2030, %v3822
        %v3824 = vpop.f32.mrb[0].mxu0
        %3825 = vmatprep.mubr.f32.mxu0 0.0
        %3826 = vmatmul.mubr.f32.gmra.mrb[0].mxu0 %v3730
        %v3827 = vpop.f32.mrb[0].mxu0
        %v3828 = vadd.f32 %v2031, %v3827
        %v3829 = vpop.f32.mrb[0].mxu0
        %3830 = vmatprep.mubr.f32.mxu0 0.0
        %3831 = vmatmul.mubr.f32.gmra.mrb[0].mxu0 %v3733
        %v3832 = vpop.f32.mrb[0].mxu0
        %v3833 = vadd.f32 %v2032, %v3832
        %v3834 = vpop.f32.mrb[0].mxu0
        %3835 = vmatprep.mubr.f32.mxu0 0.0
        %3836 = vmatmul.mubr.f32.gmra.mrb[0].mxu0 %v3736
        %v3837 = vpop.f32.mrb[0].mxu0
        %v3838 = vadd.f32 %v2033, %v3837
        %v3839 = vpop.f32.mrb[0].mxu0
        %3840 = vmatprep.mubr.f32.mxu0 0.0
        %3841 = vmatmul.mubr.f32.gmra.mrb[0].mxu0 %v3739
        %v3842 = vpop.f32.mrb[0].mxu0
        %v3843 = vadd.f32 %v2034, %v3842
        %v3844 = vpop.f32.mrb[0].mxu0
        %3845 = vdwg.mxu0
        %v3846 = vld [vmem:[%s9] sm:$0xff]
        %v3847 = vld [vmem:[%s9 + $0x8] sm:$0xff]
        %v3848 = vld [vmem:[%s10] sm:$0x1]
        %v3850 = vlaneseq
        %v3851 = vshrl.u32 %v3850, 7
        %v3852 = vsub.s32 0, %v3851
        %v3853 = vrot.slane %v3848, %v3852
        %v3856 = vsel %vm1688, %v3349, 0
        %v3859 = vsel %vm1688, %v3354, 0
        %v3862 = vsel %vm1688, %v3359, 0
        %v3865 = vsel %vm1688, %v3364, 0
        %v3868 = vsel %vm1688, %v3369, 0
        %v3871 = vsel %vm1688, %v3374, 0
        %v3874 = vsel %vm1688, %v3379, 0
        %v3877 = vsel %vm1688, %v3384, 0
        %v3880 = vsel %vm1688, %v3502, 0
        %v3883 = vsel %vm1688, %v3507, 0
        %v3886 = vsel %vm1688, %v3512, 0
        %v3889 = vsel %vm1688, %v3517, 0
        %v3892 = vsel %vm1688, %v3522, 0
        %v3895 = vsel %vm1688, %v3527, 0
        %v3898 = vsel %vm1688, %v3532, 0
        %v3901 = vsel %vm1688, %v3537, 0
        %v3904 = vsel %vm1688, %v3655, 0
        %v3907 = vsel %vm1688, %v3660, 0
        %v3910 = vsel %vm1688, %v3665, 0
        %v3913 = vsel %vm1688, %v3670, 0
        %v3916 = vsel %vm1688, %v3675, 0
        %v3919 = vsel %vm1688, %v3680, 0
        %v3922 = vsel %vm1688, %v3685, 0
        %v3925 = vsel %vm1688, %v3690, 0
        %v3928 = vsel %vm1688, %v3808, 0
        %v3931 = vsel %vm1688, %v3813, 0
        %v3934 = vsel %vm1688, %v3818, 0
        %v3937 = vsel %vm1688, %v3823, 0
        %v3940 = vsel %vm1688, %v3828, 0
        %v3943 = vsel %vm1688, %v3833, 0
        %v3946 = vsel %vm1688, %v3838, 0
        %v3949 = vsel %vm1688, %v3843, 0
        %3951 = vmatprep.subr.mxu0 0.0
        %3952 = vmatpush1.msra.mxu0 %v3846
        %3953 = vmatprep.subr.mxu0 0.0
        %3954 = vmatpush1.msra.mxu0 %v3847
        %3955 = vmatprep.subr.mxu0 0.0
        %3956 = vmatpush1.msra.mxu0 0.0
        %3957 = vmatprep.subr.mxu0 0.0
        %3958 = vmatpush1.msra.mxu0 0.0
        %3959 = vmatprep.subr.mxu0 0.0
        %3960 = vmatpush1.msra.mxu0 0.0
        %3961 = vmatprep.subr.mxu0 0.0
        %3962 = vmatpush1.msra.mxu0 0.0
        %3963 = vmatprep.subr.mxu0 0.0
        %3964 = vmatpush1.msra.mxu0 0.0
        %3965 = vmatprep.subr.mxu0 0.0
        %3966 = vmatpush1.msra.mxu0 0.0
        %3967 = vmatprep.subr.mxu0 0.0
        %3968 = vmatpush1.msra.mxu0 0.0
        %3969 = vmatprep.subr.mxu0 0.0
        %3970 = vmatpush1.msra.mxu0 0.0
        %3971 = vmatprep.subr.mxu0 0.0
        %3972 = vmatpush1.msra.mxu0 0.0
        %3973 = vmatprep.subr.mxu0 0.0
        %3974 = vmatpush1.msra.mxu0 0.0
        %3975 = vmatprep.subr.mxu0 0.0
        %3976 = vmatpush1.msra.mxu0 0.0
        %3977 = vmatprep.subr.mxu0 0.0
        %3978 = vmatpush1.msra.mxu0 0.0
        %3979 = vmatprep.subr.mxu0 0.0
        %3980 = vmatpush1.msra.mxu0 0.0
        %3981 = vmatprep.subr.mxu0 0.0
        %3982 = vmatpush1.msra.mxu0 0.0
        %3983 = vmatprep.subr.mxu0 0.0
        %3984 = vmatpush1.msra.mxu0 0.0
        %3985 = vmatprep.subr.mxu0 0.0
        %3986 = vmatpush1.msra.mxu0 0.0
        %3987 = vmatprep.subr.mxu0 0.0
        %3988 = vmatpush1.msra.mxu0 0.0
        %3989 = vmatprep.subr.mxu0 0.0
        %3990 = vmatpush1.msra.mxu0 0.0
        %3991 = vmatprep.subr.mxu0 0.0
        %3992 = vmatpush1.msra.mxu0 0.0
        %3993 = vmatprep.subr.mxu0 0.0
        %3994 = vmatpush1.msra.mxu0 0.0
        %3995 = vmatprep.subr.mxu0 0.0
        %3996 = vmatpush1.msra.mxu0 0.0
        %3997 = vmatprep.subr.mxu0 0.0
        %3998 = vmatpush1.msra.mxu0 0.0
        %3999 = vmatprep.subr.mxu0 0.0
        %4000 = vmatpush1.msra.mxu0 0.0
        %4001 = vmatprep.subr.mxu0 0.0
        %4002 = vmatpush1.msra.mxu0 0.0
        %4003 = vmatprep.subr.mxu0 0.0
        %4004 = vmatpush1.msra.mxu0 0.0
        %4005 = vmatprep.subr.mxu0 0.0
        %4006 = vmatpush1.msra.mxu0 0.0
        %4007 = vmatprep.subr.mxu0 0.0
        %4008 = vmatpush1.msra.mxu0 0.0
        %4009 = vmatprep.subr.mxu0 0.0
        %4010 = vmatpush1.msra.mxu0 0.0
        %4011 = vmatprep.subr.mxu0 0.0
        %4012 = vmatpush1.msra.mxu0 0.0
        %4013 = vmatprep.subr.mxu0 0.0
        %4014 = vmatpush1.msra.mxu0 0.0
        %4015 = vmatprep.mubr.f32.mxu0 0.0
        %4016 = vmatmul.mubr.f32.gmra.mrb[0].mxu0 %v3856
        %v4017 = vpop.f32.mrb[0].mxu0
        %v4018 = vadd.f32 %v3853, %v4017
        %v4019 = vpop.f32.mrb[0].mxu0
        %4020 = vmatprep.mubr.f32.mxu0 0.0
        %4021 = vmatmul.mubr.f32.gmra.mrb[0].mxu0 %v3859
        %v4022 = vpop.f32.mrb[0].mxu0
        %v4023 = vadd.f32 %v3853, %v4022
        %v4024 = vpop.f32.mrb[0].mxu0
        %4025 = vmatprep.mubr.f32.mxu0 0.0
        %4026 = vmatmul.mubr.f32.gmra.mrb[0].mxu0 %v3862
        %v4027 = vpop.f32.mrb[0].mxu0
        %v4028 = vadd.f32 %v3853, %v4027
        %v4029 = vpop.f32.mrb[0].mxu0
        %4030 = vmatprep.mubr.f32.mxu0 0.0
        %4031 = vmatmul.mubr.f32.gmra.mrb[0].mxu0 %v3865
        %v4032 = vpop.f32.mrb[0].mxu0
        %v4033 = vadd.f32 %v3853, %v4032
        %v4034 = vpop.f32.mrb[0].mxu0
        %4035 = vmatprep.mubr.f32.mxu0 0.0
        %4036 = vmatmul.mubr.f32.gmra.mrb[0].mxu0 %v3868
        %v4037 = vpop.f32.mrb[0].mxu0
        %v4038 = vadd.f32 %v3853, %v4037
        %v4039 = vpop.f32.mrb[0].mxu0
        %4040 = vmatprep.mubr.f32.mxu0 0.0
        %4041 = vmatmul.mubr.f32.gmra.mrb[0].mxu0 %v3871
        %v4042 = vpop.f32.mrb[0].mxu0
        %v4043 = vadd.f32 %v3853, %v4042
        %v4044 = vpop.f32.mrb[0].mxu0
        %4045 = vmatprep.mubr.f32.mxu0 0.0
        %4046 = vmatmul.mubr.f32.gmra.mrb[0].mxu0 %v3874
        %v4047 = vpop.f32.mrb[0].mxu0
        %v4048 = vadd.f32 %v3853, %v4047
        %v4049 = vpop.f32.mrb[0].mxu0
        %4050 = vmatprep.mubr.f32.mxu0 0.0
        %4051 = vmatmul.mubr.f32.gmra.mrb[0].mxu0 %v3877
        %v4052 = vpop.f32.mrb[0].mxu0
        %v4053 = vadd.f32 %v3853, %v4052
        %v4054 = vpop.f32.mrb[0].mxu0
        %4055 = vmatprep.mubr.f32.mxu0 0.0
        %4056 = vmatmul.mubr.f32.gmra.mrb[0].mxu0 %v3880
        %v4057 = vpop.f32.mrb[0].mxu0
        %v4058 = vadd.f32 %v3853, %v4057
        %v4059 = vpop.f32.mrb[0].mxu0
        %4060 = vmatprep.mubr.f32.mxu0 0.0
        %4061 = vmatmul.mubr.f32.gmra.mrb[0].mxu0 %v3883
        %v4062 = vpop.f32.mrb[0].mxu0
        %v4063 = vadd.f32 %v3853, %v4062
        %v4064 = vpop.f32.mrb[0].mxu0
        %4065 = vmatprep.mubr.f32.mxu0 0.0
        %4066 = vmatmul.mubr.f32.gmra.mrb[0].mxu0 %v3886
        %v4067 = vpop.f32.mrb[0].mxu0
        %v4068 = vadd.f32 %v3853, %v4067
        %v4069 = vpop.f32.mrb[0].mxu0
        %4070 = vmatprep.mubr.f32.mxu0 0.0
        %4071 = vmatmul.mubr.f32.gmra.mrb[0].mxu0 %v3889
        %v4072 = vpop.f32.mrb[0].mxu0
        %v4073 = vadd.f32 %v3853, %v4072
        %v4074 = vpop.f32.mrb[0].mxu0
        %4075 = vmatprep.mubr.f32.mxu0 0.0
        %4076 = vmatmul.mubr.f32.gmra.mrb[0].mxu0 %v3892
        %v4077 = vpop.f32.mrb[0].mxu0
        %v4078 = vadd.f32 %v3853, %v4077
        %v4079 = vpop.f32.mrb[0].mxu0
        %4080 = vmatprep.mubr.f32.mxu0 0.0
        %4081 = vmatmul.mubr.f32.gmra.mrb[0].mxu0 %v3895
        %v4082 = vpop.f32.mrb[0].mxu0
        %v4083 = vadd.f32 %v3853, %v4082
        %v4084 = vpop.f32.mrb[0].mxu0
        %4085 = vmatprep.mubr.f32.mxu0 0.0
        %4086 = vmatmul.mubr.f32.gmra.mrb[0].mxu0 %v3898
        %v4087 = vpop.f32.mrb[0].mxu0
        %v4088 = vadd.f32 %v3853, %v4087
        %v4089 = vpop.f32.mrb[0].mxu0
        %4090 = vmatprep.mubr.f32.mxu0 0.0
        %4091 = vmatmul.mubr.f32.gmra.mrb[0].mxu0 %v3901
        %v4092 = vpop.f32.mrb[0].mxu0
        %v4093 = vadd.f32 %v3853, %v4092
        %v4094 = vpop.f32.mrb[0].mxu0
        %4095 = vmatprep.mubr.f32.mxu0 0.0
        %4096 = vmatmul.mubr.f32.gmra.mrb[0].mxu0 %v3904
        %v4097 = vpop.f32.mrb[0].mxu0
        %v4098 = vadd.f32 %v3853, %v4097
        %v4099 = vpop.f32.mrb[0].mxu0
        %4100 = vmatprep.mubr.f32.mxu0 0.0
        %4101 = vmatmul.mubr.f32.gmra.mrb[0].mxu0 %v3907
        %v4102 = vpop.f32.mrb[0].mxu0
        %v4103 = vadd.f32 %v3853, %v4102
        %v4104 = vpop.f32.mrb[0].mxu0
        %4105 = vmatprep.mubr.f32.mxu0 0.0
        %4106 = vmatmul.mubr.f32.gmra.mrb[0].mxu0 %v3910
        %v4107 = vpop.f32.mrb[0].mxu0
        %v4108 = vadd.f32 %v3853, %v4107
        %v4109 = vpop.f32.mrb[0].mxu0
        %4110 = vmatprep.mubr.f32.mxu0 0.0
        %4111 = vmatmul.mubr.f32.gmra.mrb[0].mxu0 %v3913
        %v4112 = vpop.f32.mrb[0].mxu0
        %v4113 = vadd.f32 %v3853, %v4112
        %v4114 = vpop.f32.mrb[0].mxu0
        %4115 = vmatprep.mubr.f32.mxu0 0.0
        %4116 = vmatmul.mubr.f32.gmra.mrb[0].mxu0 %v3916
        %v4117 = vpop.f32.mrb[0].mxu0
        %v4118 = vadd.f32 %v3853, %v4117
        %v4119 = vpop.f32.mrb[0].mxu0
        %4120 = vmatprep.mubr.f32.mxu0 0.0
        %4121 = vmatmul.mubr.f32.gmra.mrb[0].mxu0 %v3919
        %v4122 = vpop.f32.mrb[0].mxu0
        %v4123 = vadd.f32 %v3853, %v4122
        %v4124 = vpop.f32.mrb[0].mxu0
        %4125 = vmatprep.mubr.f32.mxu0 0.0
        %4126 = vmatmul.mubr.f32.gmra.mrb[0].mxu0 %v3922
        %v4127 = vpop.f32.mrb[0].mxu0
        %v4128 = vadd.f32 %v3853, %v4127
        %v4129 = vpop.f32.mrb[0].mxu0
        %4130 = vmatprep.mubr.f32.mxu0 0.0
        %4131 = vmatmul.mubr.f32.gmra.mrb[0].mxu0 %v3925
        %v4132 = vpop.f32.mrb[0].mxu0
        %v4133 = vadd.f32 %v3853, %v4132
        %v4134 = vpop.f32.mrb[0].mxu0
        %4135 = vmatprep.mubr.f32.mxu0 0.0
        %4136 = vmatmul.mubr.f32.gmra.mrb[0].mxu0 %v3928
        %v4137 = vpop.f32.mrb[0].mxu0
        %v4138 = vadd.f32 %v3853, %v4137
        %v4139 = vpop.f32.mrb[0].mxu0
        %4140 = vmatprep.mubr.f32.mxu0 0.0
        %4141 = vmatmul.mubr.f32.gmra.mrb[0].mxu0 %v3931
        %v4142 = vpop.f32.mrb[0].mxu0
        %v4143 = vadd.f32 %v3853, %v4142
        %v4144 = vpop.f32.mrb[0].mxu0
        %4145 = vmatprep.mubr.f32.mxu0 0.0
        %4146 = vmatmul.mubr.f32.gmra.mrb[0].mxu0 %v3934
        %v4147 = vpop.f32.mrb[0].mxu0
        %v4148 = vadd.f32 %v3853, %v4147
        %v4149 = vpop.f32.mrb[0].mxu0
        %4150 = vmatprep.mubr.f32.mxu0 0.0
        %4151 = vmatmul.mubr.f32.gmra.mrb[0].mxu0 %v3937
        %v4152 = vpop.f32.mrb[0].mxu0
        %v4153 = vadd.f32 %v3853, %v4152
        %v4154 = vpop.f32.mrb[0].mxu0
        %4155 = vmatprep.mubr.f32.mxu0 0.0
        %4156 = vmatmul.mubr.f32.gmra.mrb[0].mxu0 %v3940
        %v4157 = vpop.f32.mrb[0].mxu0
        %v4158 = vadd.f32 %v3853, %v4157
        %v4159 = vpop.f32.mrb[0].mxu0
        %4160 = vmatprep.mubr.f32.mxu0 0.0
        %4161 = vmatmul.mubr.f32.gmra.mrb[0].mxu0 %v3943
        %v4162 = vpop.f32.mrb[0].mxu0
        %v4163 = vadd.f32 %v3853, %v4162
        %v4164 = vpop.f32.mrb[0].mxu0
        %4165 = vmatprep.mubr.f32.mxu0 0.0
        %4166 = vmatmul.mubr.f32.gmra.mrb[0].mxu0 %v3946
        %v4167 = vpop.f32.mrb[0].mxu0
        %v4168 = vadd.f32 %v3853, %v4167
        %v4169 = vpop.f32.mrb[0].mxu0
        %4170 = vmatprep.mubr.f32.mxu0 0.0
        %4171 = vmatmul.mubr.f32.gmra.mrb[0].mxu0 %v3949
        %v4172 = vpop.f32.mrb[0].mxu0
        %v4173 = vadd.f32 %v3853, %v4172
        %v4174 = vpop.f32.mrb[0].mxu0
        %4175 = vdwg.mxu0
        %v4176 = vmul.f32 %v4018, 0.5
        %v4177 = vmul.f32 %v4023, 0.5
        %v4178 = vmul.f32 %v4028, 0.5
        %v4179 = vmul.f32 %v4033, 0.5
        %v4180 = vmul.f32 %v4038, 0.5
        %v4181 = vmul.f32 %v4043, 0.5
        %v4182 = vmul.f32 %v4048, 0.5
        %v4183 = vmul.f32 %v4053, 0.5
        %v4184 = vmul.f32 %v4058, 0.5
        %v4185 = vmul.f32 %v4063, 0.5
        %v4186 = vmul.f32 %v4068, 0.5
        %v4187 = vmul.f32 %v4073, 0.5
        %v4188 = vmul.f32 %v4078, 0.5
        %v4189 = vmul.f32 %v4083, 0.5
        %v4190 = vmul.f32 %v4088, 0.5
        %v4191 = vmul.f32 %v4093, 0.5
        %v4192 = vmul.f32 %v4098, 0.5
        %v4193 = vmul.f32 %v4103, 0.5
        %v4194 = vmul.f32 %v4108, 0.5
        %v4195 = vmul.f32 %v4113, 0.5
        %v4196 = vmul.f32 %v4118, 0.5
        %v4197 = vmul.f32 %v4123, 0.5
        %v4198 = vmul.f32 %v4128, 0.5
        %v4199 = vmul.f32 %v4133, 0.5
        %v4200 = vmul.f32 %v4138, 0.5
        %v4201 = vmul.f32 %v4143, 0.5
        %v4202 = vmul.f32 %v4148, 0.5
        %v4203 = vmul.f32 %v4153, 0.5
        %v4204 = vmul.f32 %v4158, 0.5
        %v4205 = vmul.f32 %v4163, 0.5
        %v4206 = vmul.f32 %v4168, 0.5
        %v4207 = vmul.f32 %v4173, 0.5
        %v4208 = vmul.f32 %v4018, 0.70710677
        %v4209 = vmul.f32 %v4023, 0.70710677
        %v4210 = vmul.f32 %v4028, 0.70710677
        %v4211 = vmul.f32 %v4033, 0.70710677
        %v4212 = vmul.f32 %v4038, 0.70710677
        %v4213 = vmul.f32 %v4043, 0.70710677
        %v4214 = vmul.f32 %v4048, 0.70710677
        %v4215 = vmul.f32 %v4053, 0.70710677
        %v4216 = vmul.f32 %v4058, 0.70710677
        %v4217 = vmul.f32 %v4063, 0.70710677
        %v4218 = vmul.f32 %v4068, 0.70710677
        %v4219 = vmul.f32 %v4073, 0.70710677
        %v4220 = vmul.f32 %v4078, 0.70710677
        %v4221 = vmul.f32 %v4083, 0.70710677
        %v4222 = vmul.f32 %v4088, 0.70710677
        %v4223 = vmul.f32 %v4093, 0.70710677
        %v4224 = vmul.f32 %v4098, 0.70710677
        %v4225 = vmul.f32 %v4103, 0.70710677
        %v4226 = vmul.f32 %v4108, 0.70710677
        %v4227 = vmul.f32 %v4113, 0.70710677
        %v4228 = vmul.f32 %v4118, 0.70710677
        %v4229 = vmul.f32 %v4123, 0.70710677
        %v4230 = vmul.f32 %v4128, 0.70710677
        %v4231 = vmul.f32 %v4133, 0.70710677
        %v4232 = vmul.f32 %v4138, 0.70710677
        %v4233 = vmul.f32 %v4143, 0.70710677
        %v4234 = vmul.f32 %v4148, 0.70710677
        %v4235 = vmul.f32 %v4153, 0.70710677
        %v4236 = vmul.f32 %v4158, 0.70710677
        %v4237 = vmul.f32 %v4163, 0.70710677
        %v4238 = vmul.f32 %v4168, 0.70710677
        %v4239 = vmul.f32 %v4173, 0.70710677
        %vm4240 = vcmp.lt.f32.partialorder %v4208, 0.0
        %vm4241 = vcmp.lt.f32.partialorder %v4209, 0.0
        %vm4242 = vcmp.lt.f32.partialorder %v4210, 0.0
        %vm4243 = vcmp.lt.f32.partialorder %v4211, 0.0
        %vm4244 = vcmp.lt.f32.partialorder %v4212, 0.0
        %vm4245 = vcmp.lt.f32.partialorder %v4213, 0.0
        %vm4246 = vcmp.lt.f32.partialorder %v4214, 0.0
        %vm4247 = vcmp.lt.f32.partialorder %v4215, 0.0
        %vm4248 = vcmp.lt.f32.partialorder %v4216, 0.0
        %vm4249 = vcmp.lt.f32.partialorder %v4217, 0.0
        %vm4250 = vcmp.lt.f32.partialorder %v4218, 0.0
        %vm4251 = vcmp.lt.f32.partialorder %v4219, 0.0
        %vm4252 = vcmp.lt.f32.partialorder %v4220, 0.0
        %vm4253 = vcmp.lt.f32.partialorder %v4221, 0.0
        %vm4254 = vcmp.lt.f32.partialorder %v4222, 0.0
        %vm4255 = vcmp.lt.f32.partialorder %v4223, 0.0
        %vm4256 = vcmp.lt.f32.partialorder %v4224, 0.0
        %vm4257 = vcmp.lt.f32.partialorder %v4225, 0.0
        %vm4258 = vcmp.lt.f32.partialorder %v4226, 0.0
        %vm4259 = vcmp.lt.f32.partialorder %v4227, 0.0
        %vm4260 = vcmp.lt.f32.partialorder %v4228, 0.0
        %vm4261 = vcmp.lt.f32.partialorder %v4229, 0.0
        %vm4262 = vcmp.lt.f32.partialorder %v4230, 0.0
        %vm4263 = vcmp.lt.f32.partialorder %v4231, 0.0
        %vm4264 = vcmp.lt.f32.partialorder %v4232, 0.0
        %vm4265 = vcmp.lt.f32.partialorder %v4233, 0.0
        %vm4266 = vcmp.lt.f32.partialorder %v4234, 0.0
        %vm4267 = vcmp.lt.f32.partialorder %v4235, 0.0
        %vm4268 = vcmp.lt.f32.partialorder %v4236, 0.0
        %vm4269 = vcmp.lt.f32.partialorder %v4237, 0.0
        %vm4270 = vcmp.lt.f32.partialorder %v4238, 0.0
        %vm4271 = vcmp.lt.f32.partialorder %v4239, 0.0
        %v4272 = vsel %vm4240, -1.0, 1.0
        %v4273 = vsel %vm4241, -1.0, 1.0
        %v4274 = vsel %vm4242, -1.0, 1.0
        %v4275 = vsel %vm4243, -1.0, 1.0
        %v4276 = vsel %vm4244, -1.0, 1.0
        %v4277 = vsel %vm4245, -1.0, 1.0
        %v4278 = vsel %vm4246, -1.0, 1.0
        %v4279 = vsel %vm4247, -1.0, 1.0
        %v4280 = vsel %vm4248, -1.0, 1.0
        %v4281 = vsel %vm4249, -1.0, 1.0
        %v4282 = vsel %vm4250, -1.0, 1.0
        %v4283 = vsel %vm4251, -1.0, 1.0
        %v4284 = vsel %vm4252, -1.0, 1.0
        %v4285 = vsel %vm4253, -1.0, 1.0
        %v4286 = vsel %vm4254, -1.0, 1.0
        %v4287 = vsel %vm4255, -1.0, 1.0
        %v4288 = vsel %vm4256, -1.0, 1.0
        %v4289 = vsel %vm4257, -1.0, 1.0
        %v4290 = vsel %vm4258, -1.0, 1.0
        %v4291 = vsel %vm4259, -1.0, 1.0
        %v4292 = vsel %vm4260, -1.0, 1.0
        %v4293 = vsel %vm4261, -1.0, 1.0
        %v4294 = vsel %vm4262, -1.0, 1.0
        %v4295 = vsel %vm4263, -1.0, 1.0
        %v4296 = vsel %vm4264, -1.0, 1.0
        %v4297 = vsel %vm4265, -1.0, 1.0
        %v4298 = vsel %vm4266, -1.0, 1.0
        %v4299 = vsel %vm4267, -1.0, 1.0
        %v4300 = vsel %vm4268, -1.0, 1.0
        %v4301 = vsel %vm4269, -1.0, 1.0
        %v4302 = vsel %vm4270, -1.0, 1.0
        %v4303 = vsel %vm4271, -1.0, 1.0
        %v4304 = vand.u32 2147483647, %v4208
        %v4305 = vand.u32 2147483647, %v4209
        %v4306 = vand.u32 2147483647, %v4210
        %v4307 = vand.u32 2147483647, %v4211
        %v4308 = vand.u32 2147483647, %v4212
        %v4309 = vand.u32 2147483647, %v4213
        %v4310 = vand.u32 2147483647, %v4214
        %v4311 = vand.u32 2147483647, %v4215
        %v4312 = vand.u32 2147483647, %v4216
        %v4313 = vand.u32 2147483647, %v4217
        %v4314 = vand.u32 2147483647, %v4218
        %v4315 = vand.u32 2147483647, %v4219
        %v4316 = vand.u32 2147483647, %v4220
        %v4317 = vand.u32 2147483647, %v4221
        %v4318 = vand.u32 2147483647, %v4222
        %v4319 = vand.u32 2147483647, %v4223
        %v4320 = vand.u32 2147483647, %v4224
        %v4321 = vand.u32 2147483647, %v4225
        %v4322 = vand.u32 2147483647, %v4226
        %v4323 = vand.u32 2147483647, %v4227
        %v4324 = vand.u32 2147483647, %v4228
        %v4325 = vand.u32 2147483647, %v4229
        %v4326 = vand.u32 2147483647, %v4230
        %v4327 = vand.u32 2147483647, %v4231
        %v4328 = vand.u32 2147483647, %v4232
        %v4329 = vand.u32 2147483647, %v4233
        %v4330 = vand.u32 2147483647, %v4234
        %v4331 = vand.u32 2147483647, %v4235
        %v4332 = vand.u32 2147483647, %v4236
        %v4333 = vand.u32 2147483647, %v4237
        %v4334 = vand.u32 2147483647, %v4238
        %v4335 = vand.u32 2147483647, %v4239
        %v4336 = vmul.f32 %v4304, 0.3275911
        %v4337 = vmul.f32 %v4305, 0.3275911
        %v4338 = vmul.f32 %v4306, 0.3275911
        %v4339 = vmul.f32 %v4307, 0.3275911
        %v4340 = vmul.f32 %v4308, 0.3275911
        %v4341 = vmul.f32 %v4309, 0.3275911
        %v4342 = vmul.f32 %v4310, 0.3275911
        %v4343 = vmul.f32 %v4311, 0.3275911
        %v4344 = vmul.f32 %v4312, 0.3275911
        %v4345 = vmul.f32 %v4313, 0.3275911
        %v4346 = vmul.f32 %v4314, 0.3275911
        %v4347 = vmul.f32 %v4315, 0.3275911
        %v4348 = vmul.f32 %v4316, 0.3275911
        %v4349 = vmul.f32 %v4317, 0.3275911
        %v4350 = vmul.f32 %v4318, 0.3275911
        %v4351 = vmul.f32 %v4319, 0.3275911
        %v4352 = vmul.f32 %v4320, 0.3275911
        %v4353 = vmul.f32 %v4321, 0.3275911
        %v4354 = vmul.f32 %v4322, 0.3275911
        %v4355 = vmul.f32 %v4323, 0.3275911
        %v4356 = vmul.f32 %v4324, 0.3275911
        %v4357 = vmul.f32 %v4325, 0.3275911
        %v4358 = vmul.f32 %v4326, 0.3275911
        %v4359 = vmul.f32 %v4327, 0.3275911
        %v4360 = vmul.f32 %v4328, 0.3275911
        %v4361 = vmul.f32 %v4329, 0.3275911
        %v4362 = vmul.f32 %v4330, 0.3275911
        %v4363 = vmul.f32 %v4331, 0.3275911
        %v4364 = vmul.f32 %v4332, 0.3275911
        %v4365 = vmul.f32 %v4333, 0.3275911
        %v4366 = vmul.f32 %v4334, 0.3275911
        %v4367 = vmul.f32 %v4335, 0.3275911
        %v4368 = vadd.f32 %v4336, 1.0
        %v4369 = vadd.f32 %v4337, 1.0
        %v4370 = vadd.f32 %v4338, 1.0
        %v4371 = vadd.f32 %v4339, 1.0
        %v4372 = vadd.f32 %v4340, 1.0
        %v4373 = vadd.f32 %v4341, 1.0
        %v4374 = vadd.f32 %v4342, 1.0
        %v4375 = vadd.f32 %v4343, 1.0
        %v4376 = vadd.f32 %v4344, 1.0
        %v4377 = vadd.f32 %v4345, 1.0
        %v4378 = vadd.f32 %v4346, 1.0
        %v4379 = vadd.f32 %v4347, 1.0
        %v4380 = vadd.f32 %v4348, 1.0
        %v4381 = vadd.f32 %v4349, 1.0
        %v4382 = vadd.f32 %v4350, 1.0
        %v4383 = vadd.f32 %v4351, 1.0
        %v4384 = vadd.f32 %v4352, 1.0
        %v4385 = vadd.f32 %v4353, 1.0
        %v4386 = vadd.f32 %v4354, 1.0
        %v4387 = vadd.f32 %v4355, 1.0
        %v4388 = vadd.f32 %v4356, 1.0
        %v4389 = vadd.f32 %v4357, 1.0
        %v4390 = vadd.f32 %v4358, 1.0
        %v4391 = vadd.f32 %v4359, 1.0
        %v4392 = vadd.f32 %v4360, 1.0
        %v4393 = vadd.f32 %v4361, 1.0
        %v4394 = vadd.f32 %v4362, 1.0
        %v4395 = vadd.f32 %v4363, 1.0
        %v4396 = vadd.f32 %v4364, 1.0
        %v4397 = vadd.f32 %v4365, 1.0
        %v4398 = vadd.f32 %v4366, 1.0
        %v4399 = vadd.f32 %v4367, 1.0
        %v4400 = vrcp.pop %v4368
        %v4401 = vmul.f32 1.0, %v4400
        %v4402 = vrcp.pop %v4369
        %v4403 = vmul.f32 1.0, %v4402
        %v4404 = vrcp.pop %v4370
        %v4405 = vmul.f32 1.0, %v4404
        %v4406 = vrcp.pop %v4371
        %v4407 = vmul.f32 1.0, %v4406
        %v4408 = vrcp.pop %v4372
        %v4409 = vmul.f32 1.0, %v4408
        %v4410 = vrcp.pop %v4373
        %v4411 = vmul.f32 1.0, %v4410
        %v4412 = vrcp.pop %v4374
        %v4413 = vmul.f32 1.0, %v4412
        %v4414 = vrcp.pop %v4375
        %v4415 = vmul.f32 1.0, %v4414
        %v4416 = vrcp.pop %v4376
        %v4417 = vmul.f32 1.0, %v4416
        %v4418 = vrcp.pop %v4377
        %v4419 = vmul.f32 1.0, %v4418
        %v4420 = vrcp.pop %v4378
        %v4421 = vmul.f32 1.0, %v4420
        %v4422 = vrcp.pop %v4379
        %v4423 = vmul.f32 1.0, %v4422
        %v4424 = vrcp.pop %v4380
        %v4425 = vmul.f32 1.0, %v4424
        %v4426 = vrcp.pop %v4381
        %v4427 = vmul.f32 1.0, %v4426
        %v4428 = vrcp.pop %v4382
        %v4429 = vmul.f32 1.0, %v4428
        %v4430 = vrcp.pop %v4383
        %v4431 = vmul.f32 1.0, %v4430
        %v4432 = vrcp.pop %v4384
        %v4433 = vmul.f32 1.0, %v4432
        %v4434 = vrcp.pop %v4385
        %v4435 = vmul.f32 1.0, %v4434
        %v4436 = vrcp.pop %v4386
        %v4437 = vmul.f32 1.0, %v4436
        %v4438 = vrcp.pop %v4387
        %v4439 = vmul.f32 1.0, %v4438
        %v4440 = vrcp.pop %v4388
        %v4441 = vmul.f32 1.0, %v4440
        %v4442 = vrcp.pop %v4389
        %v4443 = vmul.f32 1.0, %v4442
        %v4444 = vrcp.pop %v4390
        %v4445 = vmul.f32 1.0, %v4444
        %v4446 = vrcp.pop %v4391
        %v4447 = vmul.f32 1.0, %v4446
        %v4448 = vrcp.pop %v4392
        %v4449 = vmul.f32 1.0, %v4448
        %v4450 = vrcp.pop %v4393
        %v4451 = vmul.f32 1.0, %v4450
        %v4452 = vrcp.pop %v4394
        %v4453 = vmul.f32 1.0, %v4452
        %v4454 = vrcp.pop %v4395
        %v4455 = vmul.f32 1.0, %v4454
        %v4456 = vrcp.pop %v4396
        %v4457 = vmul.f32 1.0, %v4456
        %v4458 = vrcp.pop %v4397
        %v4459 = vmul.f32 1.0, %v4458
        %v4460 = vrcp.pop %v4398
        %v4461 = vmul.f32 1.0, %v4460
        %v4462 = vrcp.pop %v4399
        %v4463 = vmul.f32 1.0, %v4462
        %v4464 = vmul.f32 %v4401, 1.0614054
        %v4465 = vmul.f32 %v4403, 1.0614054
        %v4466 = vmul.f32 %v4405, 1.0614054
        %v4467 = vmul.f32 %v4407, 1.0614054
        %v4468 = vmul.f32 %v4409, 1.0614054
        %v4469 = vmul.f32 %v4411, 1.0614054
        %v4470 = vmul.f32 %v4413, 1.0614054
        %v4471 = vmul.f32 %v4415, 1.0614054
        %v4472 = vmul.f32 %v4417, 1.0614054
        %v4473 = vmul.f32 %v4419, 1.0614054
        %v4474 = vmul.f32 %v4421, 1.0614054
        %v4475 = vmul.f32 %v4423, 1.0614054
        %v4476 = vmul.f32 %v4425, 1.0614054
        %v4477 = vmul.f32 %v4427, 1.0614054
        %v4478 = vmul.f32 %v4429, 1.0614054
        %v4479 = vmul.f32 %v4431, 1.0614054
        %v4480 = vmul.f32 %v4433, 1.0614054
        %v4481 = vmul.f32 %v4435, 1.0614054
        %v4482 = vmul.f32 %v4437, 1.0614054
        %v4483 = vmul.f32 %v4439, 1.0614054
        %v4484 = vmul.f32 %v4441, 1.0614054
        %v4485 = vmul.f32 %v4443, 1.0614054
        %v4486 = vmul.f32 %v4445, 1.0614054
        %v4487 = vmul.f32 %v4447, 1.0614054
        %v4488 = vmul.f32 %v4449, 1.0614054
        %v4489 = vmul.f32 %v4451, 1.0614054
        %v4490 = vmul.f32 %v4453, 1.0614054
        %v4491 = vmul.f32 %v4455, 1.0614054
        %v4492 = vmul.f32 %v4457, 1.0614054
        %v4493 = vmul.f32 %v4459, 1.0614054
        %v4494 = vmul.f32 %v4461, 1.0614054
        %v4495 = vmul.f32 %v4463, 1.0614054
        %v4496 = vadd.f32 %v4464, -1.4531521
        %v4497 = vadd.f32 %v4465, -1.4531521
        %v4498 = vadd.f32 %v4466, -1.4531521
        %v4499 = vadd.f32 %v4467, -1.4531521
        %v4500 = vadd.f32 %v4468, -1.4531521
        %v4501 = vadd.f32 %v4469, -1.4531521
        %v4502 = vadd.f32 %v4470, -1.4531521
        %v4503 = vadd.f32 %v4471, -1.4531521
        %v4504 = vadd.f32 %v4472, -1.4531521
        %v4505 = vadd.f32 %v4473, -1.4531521
        %v4506 = vadd.f32 %v4474, -1.4531521
        %v4507 = vadd.f32 %v4475, -1.4531521
        %v4508 = vadd.f32 %v4476, -1.4531521
        %v4509 = vadd.f32 %v4477, -1.4531521
        %v4510 = vadd.f32 %v4478, -1.4531521
        %v4511 = vadd.f32 %v4479, -1.4531521
        %v4512 = vadd.f32 %v4480, -1.4531521
        %v4513 = vadd.f32 %v4481, -1.4531521
        %v4514 = vadd.f32 %v4482, -1.4531521
        %v4515 = vadd.f32 %v4483, -1.4531521
        %v4516 = vadd.f32 %v4484, -1.4531521
        %v4517 = vadd.f32 %v4485, -1.4531521
        %v4518 = vadd.f32 %v4486, -1.4531521
        %v4519 = vadd.f32 %v4487, -1.4531521
        %v4520 = vadd.f32 %v4488, -1.4531521
        %v4521 = vadd.f32 %v4489, -1.4531521
        %v4522 = vadd.f32 %v4490, -1.4531521
        %v4523 = vadd.f32 %v4491, -1.4531521
        %v4524 = vadd.f32 %v4492, -1.4531521
        %v4525 = vadd.f32 %v4493, -1.4531521
        %v4526 = vadd.f32 %v4494, -1.4531521
        %v4527 = vadd.f32 %v4495, -1.4531521
        %v4528 = vmul.f32 %v4496, %v4401
        %v4529 = vmul.f32 %v4497, %v4403
        %v4530 = vmul.f32 %v4498, %v4405
        %v4531 = vmul.f32 %v4499, %v4407
        %v4532 = vmul.f32 %v4500, %v4409
        %v4533 = vmul.f32 %v4501, %v4411
        %v4534 = vmul.f32 %v4502, %v4413
        %v4535 = vmul.f32 %v4503, %v4415
        %v4536 = vmul.f32 %v4504, %v4417
        %v4537 = vmul.f32 %v4505, %v4419
        %v4538 = vmul.f32 %v4506, %v4421
        %v4539 = vmul.f32 %v4507, %v4423
        %v4540 = vmul.f32 %v4508, %v4425
        %v4541 = vmul.f32 %v4509, %v4427
        %v4542 = vmul.f32 %v4510, %v4429
        %v4543 = vmul.f32 %v4511, %v4431
        %v4544 = vmul.f32 %v4512, %v4433
        %v4545 = vmul.f32 %v4513, %v4435
        %v4546 = vmul.f32 %v4514, %v4437
        %v4547 = vmul.f32 %v4515, %v4439
        %v4548 = vmul.f32 %v4516, %v4441
        %v4549 = vmul.f32 %v4517, %v4443
        %v4550 = vmul.f32 %v4518, %v4445
        %v4551 = vmul.f32 %v4519, %v4447
        %v4552 = vmul.f32 %v4520, %v4449
        %v4553 = vmul.f32 %v4521, %v4451
        %v4554 = vmul.f32 %v4522, %v4453
        %v4555 = vmul.f32 %v4523, %v4455
        %v4556 = vmul.f32 %v4524, %v4457
        %v4557 = vmul.f32 %v4525, %v4459
        %v4558 = vmul.f32 %v4526, %v4461
        %v4559 = vmul.f32 %v4527, %v4463
        %v4560 = vadd.f32 %v4528, 1.4214138
        %v4561 = vadd.f32 %v4529, 1.4214138
        %v4562 = vadd.f32 %v4530, 1.4214138
        %v4563 = vadd.f32 %v4531, 1.4214138
        %v4564 = vadd.f32 %v4532, 1.4214138
        %v4565 = vadd.f32 %v4533, 1.4214138
        %v4566 = vadd.f32 %v4534, 1.4214138
        %v4567 = vadd.f32 %v4535, 1.4214138
        %v4568 = vadd.f32 %v4536, 1.4214138
        %v4569 = vadd.f32 %v4537, 1.4214138
        %v4570 = vadd.f32 %v4538, 1.4214138
        %v4571 = vadd.f32 %v4539, 1.4214138
        %v4572 = vadd.f32 %v4540, 1.4214138
        %v4573 = vadd.f32 %v4541, 1.4214138
        %v4574 = vadd.f32 %v4542, 1.4214138
        %v4575 = vadd.f32 %v4543, 1.4214138
        %v4576 = vadd.f32 %v4544, 1.4214138
        %v4577 = vadd.f32 %v4545, 1.4214138
        %v4578 = vadd.f32 %v4546, 1.4214138
        %v4579 = vadd.f32 %v4547, 1.4214138
        %v4580 = vadd.f32 %v4548, 1.4214138
        %v4581 = vadd.f32 %v4549, 1.4214138
        %v4582 = vadd.f32 %v4550, 1.4214138
        %v4583 = vadd.f32 %v4551, 1.4214138
        %v4584 = vadd.f32 %v4552, 1.4214138
        %v4585 = vadd.f32 %v4553, 1.4214138
        %v4586 = vadd.f32 %v4554, 1.4214138
        %v4587 = vadd.f32 %v4555, 1.4214138
        %v4588 = vadd.f32 %v4556, 1.4214138
        %v4589 = vadd.f32 %v4557, 1.4214138
        %v4590 = vadd.f32 %v4558, 1.4214138
        %v4591 = vadd.f32 %v4559, 1.4214138
        %v4592 = vmul.f32 %v4560, %v4401
        %v4593 = vmul.f32 %v4561, %v4403
        %v4594 = vmul.f32 %v4562, %v4405
        %v4595 = vmul.f32 %v4563, %v4407
        %v4596 = vmul.f32 %v4564, %v4409
        %v4597 = vmul.f32 %v4565, %v4411
        %v4598 = vmul.f32 %v4566, %v4413
        %v4599 = vmul.f32 %v4567, %v4415
        %v4600 = vmul.f32 %v4568, %v4417
        %v4601 = vmul.f32 %v4569, %v4419
        %v4602 = vmul.f32 %v4570, %v4421
        %v4603 = vmul.f32 %v4571, %v4423
        %v4604 = vmul.f32 %v4572, %v4425
        %v4605 = vmul.f32 %v4573, %v4427
        %v4606 = vmul.f32 %v4574, %v4429
        %v4607 = vmul.f32 %v4575, %v4431
        %v4608 = vmul.f32 %v4576, %v4433
        %v4609 = vmul.f32 %v4577, %v4435
        %v4610 = vmul.f32 %v4578, %v4437
        %v4611 = vmul.f32 %v4579, %v4439
        %v4612 = vmul.f32 %v4580, %v4441
        %v4613 = vmul.f32 %v4581, %v4443
        %v4614 = vmul.f32 %v4582, %v4445
        %v4615 = vmul.f32 %v4583, %v4447
        %v4616 = vmul.f32 %v4584, %v4449
        %v4617 = vmul.f32 %v4585, %v4451
        %v4618 = vmul.f32 %v4586, %v4453
        %v4619 = vmul.f32 %v4587, %v4455
        %v4620 = vmul.f32 %v4588, %v4457
        %v4621 = vmul.f32 %v4589, %v4459
        %v4622 = vmul.f32 %v4590, %v4461
        %v4623 = vmul.f32 %v4591, %v4463
        %v4624 = vadd.f32 %v4592, -0.28449672
        %v4625 = vadd.f32 %v4593, -0.28449672
        %v4626 = vadd.f32 %v4594, -0.28449672
        %v4627 = vadd.f32 %v4595, -0.28449672
        %v4628 = vadd.f32 %v4596, -0.28449672
        %v4629 = vadd.f32 %v4597, -0.28449672
        %v4630 = vadd.f32 %v4598, -0.28449672
        %v4631 = vadd.f32 %v4599, -0.28449672
        %v4632 = vadd.f32 %v4600, -0.28449672
        %v4633 = vadd.f32 %v4601, -0.28449672
        %v4634 = vadd.f32 %v4602, -0.28449672
        %v4635 = vadd.f32 %v4603, -0.28449672
        %v4636 = vadd.f32 %v4604, -0.28449672
        %v4637 = vadd.f32 %v4605, -0.28449672
        %v4638 = vadd.f32 %v4606, -0.28449672
        %v4639 = vadd.f32 %v4607, -0.28449672
        %v4640 = vadd.f32 %v4608, -0.28449672
        %v4641 = vadd.f32 %v4609, -0.28449672
        %v4642 = vadd.f32 %v4610, -0.28449672
        %v4643 = vadd.f32 %v4611, -0.28449672
        %v4644 = vadd.f32 %v4612, -0.28449672
        %v4645 = vadd.f32 %v4613, -0.28449672
        %v4646 = vadd.f32 %v4614, -0.28449672
        %v4647 = vadd.f32 %v4615, -0.28449672
        %v4648 = vadd.f32 %v4616, -0.28449672
        %v4649 = vadd.f32 %v4617, -0.28449672
        %v4650 = vadd.f32 %v4618, -0.28449672
        %v4651 = vadd.f32 %v4619, -0.28449672
        %v4652 = vadd.f32 %v4620, -0.28449672
        %v4653 = vadd.f32 %v4621, -0.28449672
        %v4654 = vadd.f32 %v4622, -0.28449672
        %v4655 = vadd.f32 %v4623, -0.28449672
        %v4656 = vmul.f32 %v4624, %v4401
        %v4657 = vmul.f32 %v4625, %v4403
        %v4658 = vmul.f32 %v4626, %v4405
        %v4659 = vmul.f32 %v4627, %v4407
        %v4660 = vmul.f32 %v4628, %v4409
        %v4661 = vmul.f32 %v4629, %v4411
        %v4662 = vmul.f32 %v4630, %v4413
        %v4663 = vmul.f32 %v4631, %v4415
        %v4664 = vmul.f32 %v4632, %v4417
        %v4665 = vmul.f32 %v4633, %v4419
        %v4666 = vmul.f32 %v4634, %v4421
        %v4667 = vmul.f32 %v4635, %v4423
        %v4668 = vmul.f32 %v4636, %v4425
        %v4669 = vmul.f32 %v4637, %v4427
        %v4670 = vmul.f32 %v4638, %v4429
        %v4671 = vmul.f32 %v4639, %v4431
        %v4672 = vmul.f32 %v4640, %v4433
        %v4673 = vmul.f32 %v4641, %v4435
        %v4674 = vmul.f32 %v4642, %v4437
        %v4675 = vmul.f32 %v4643, %v4439
        %v4676 = vmul.f32 %v4644, %v4441
        %v4677 = vmul.f32 %v4645, %v4443
        %v4678 = vmul.f32 %v4646, %v4445
        %v4679 = vmul.f32 %v4647, %v4447
        %v4680 = vmul.f32 %v4648, %v4449
        %v4681 = vmul.f32 %v4649, %v4451
        %v4682 = vmul.f32 %v4650, %v4453
        %v4683 = vmul.f32 %v4651, %v4455
        %v4684 = vmul.f32 %v4652, %v4457
        %v4685 = vmul.f32 %v4653, %v4459
        %v4686 = vmul.f32 %v4654, %v4461
        %v4687 = vmul.f32 %v4655, %v4463
        %v4688 = vadd.f32 %v4656, 0.2548296
        %v4689 = vadd.f32 %v4657, 0.2548296
        %v4690 = vadd.f32 %v4658, 0.2548296
        %v4691 = vadd.f32 %v4659, 0.2548296
        %v4692 = vadd.f32 %v4660, 0.2548296
        %v4693 = vadd.f32 %v4661, 0.2548296
        %v4694 = vadd.f32 %v4662, 0.2548296
        %v4695 = vadd.f32 %v4663, 0.2548296
        %v4696 = vadd.f32 %v4664, 0.2548296
        %v4697 = vadd.f32 %v4665, 0.2548296
        %v4698 = vadd.f32 %v4666, 0.2548296
        %v4699 = vadd.f32 %v4667, 0.2548296
        %v4700 = vadd.f32 %v4668, 0.2548296
        %v4701 = vadd.f32 %v4669, 0.2548296
        %v4702 = vadd.f32 %v4670, 0.2548296
        %v4703 = vadd.f32 %v4671, 0.2548296
        %v4704 = vadd.f32 %v4672, 0.2548296
        %v4705 = vadd.f32 %v4673, 0.2548296
        %v4706 = vadd.f32 %v4674, 0.2548296
        %v4707 = vadd.f32 %v4675, 0.2548296
        %v4708 = vadd.f32 %v4676, 0.2548296
        %v4709 = vadd.f32 %v4677, 0.2548296
        %v4710 = vadd.f32 %v4678, 0.2548296
        %v4711 = vadd.f32 %v4679, 0.2548296
        %v4712 = vadd.f32 %v4680, 0.2548296
        %v4713 = vadd.f32 %v4681, 0.2548296
        %v4714 = vadd.f32 %v4682, 0.2548296
        %v4715 = vadd.f32 %v4683, 0.2548296
        %v4716 = vadd.f32 %v4684, 0.2548296
        %v4717 = vadd.f32 %v4685, 0.2548296
        %v4718 = vadd.f32 %v4686, 0.2548296
        %v4719 = vadd.f32 %v4687, 0.2548296
        %v4720 = vmul.f32 %v4688, %v4401
        %v4721 = vmul.f32 %v4689, %v4403
        %v4722 = vmul.f32 %v4690, %v4405
        %v4723 = vmul.f32 %v4691, %v4407
        %v4724 = vmul.f32 %v4692, %v4409
        %v4725 = vmul.f32 %v4693, %v4411
        %v4726 = vmul.f32 %v4694, %v4413
        %v4727 = vmul.f32 %v4695, %v4415
        %v4728 = vmul.f32 %v4696, %v4417
        %v4729 = vmul.f32 %v4697, %v4419
        %v4730 = vmul.f32 %v4698, %v4421
        %v4731 = vmul.f32 %v4699, %v4423
        %v4732 = vmul.f32 %v4700, %v4425
        %v4733 = vmul.f32 %v4701, %v4427
        %v4734 = vmul.f32 %v4702, %v4429
        %v4735 = vmul.f32 %v4703, %v4431
        %v4736 = vmul.f32 %v4704, %v4433
        %v4737 = vmul.f32 %v4705, %v4435
        %v4738 = vmul.f32 %v4706, %v4437
        %v4739 = vmul.f32 %v4707, %v4439
        %v4740 = vmul.f32 %v4708, %v4441
        %v4741 = vmul.f32 %v4709, %v4443
        %v4742 = vmul.f32 %v4710, %v4445
        %v4743 = vmul.f32 %v4711, %v4447
        %v4744 = vmul.f32 %v4712, %v4449
        %v4745 = vmul.f32 %v4713, %v4451
        %v4746 = vmul.f32 %v4714, %v4453
        %v4747 = vmul.f32 %v4715, %v4455
        %v4748 = vmul.f32 %v4716, %v4457
        %v4749 = vmul.f32 %v4717, %v4459
        %v4750 = vmul.f32 %v4718, %v4461
        %v4751 = vmul.f32 %v4719, %v4463
        %v4752 = vsub.f32 0.0, %v4304
        %v4753 = vsub.f32 0.0, %v4305
        %v4754 = vsub.f32 0.0, %v4306
        %v4755 = vsub.f32 0.0, %v4307
        %v4756 = vsub.f32 0.0, %v4308
        %v4757 = vsub.f32 0.0, %v4309
        %v4758 = vsub.f32 0.0, %v4310
        %v4759 = vsub.f32 0.0, %v4311
        %v4760 = vsub.f32 0.0, %v4312
        %v4761 = vsub.f32 0.0, %v4313
        %v4762 = vsub.f32 0.0, %v4314
        %v4763 = vsub.f32 0.0, %v4315
        %v4764 = vsub.f32 0.0, %v4316
        %v4765 = vsub.f32 0.0, %v4317
        %v4766 = vsub.f32 0.0, %v4318
        %v4767 = vsub.f32 0.0, %v4319
        %v4768 = vsub.f32 0.0, %v4320
        %v4769 = vsub.f32 0.0, %v4321
        %v4770 = vsub.f32 0.0, %v4322
        %v4771 = vsub.f32 0.0, %v4323
        %v4772 = vsub.f32 0.0, %v4324
        %v4773 = vsub.f32 0.0, %v4325
        %v4774 = vsub.f32 0.0, %v4326
        %v4775 = vsub.f32 0.0, %v4327
        %v4776 = vsub.f32 0.0, %v4328
        %v4777 = vsub.f32 0.0, %v4329
        %v4778 = vsub.f32 0.0, %v4330
        %v4779 = vsub.f32 0.0, %v4331
        %v4780 = vsub.f32 0.0, %v4332
        %v4781 = vsub.f32 0.0, %v4333
        %v4782 = vsub.f32 0.0, %v4334
        %v4783 = vsub.f32 0.0, %v4335
        %v4784 = vmul.f32 %v4752, %v4304
        %v4785 = vmul.f32 %v4753, %v4305
        %v4786 = vmul.f32 %v4754, %v4306
        %v4787 = vmul.f32 %v4755, %v4307
        %v4788 = vmul.f32 %v4756, %v4308
        %v4789 = vmul.f32 %v4757, %v4309
        %v4790 = vmul.f32 %v4758, %v4310
        %v4791 = vmul.f32 %v4759, %v4311
        %v4792 = vmul.f32 %v4760, %v4312
        %v4793 = vmul.f32 %v4761, %v4313
        %v4794 = vmul.f32 %v4762, %v4314
        %v4795 = vmul.f32 %v4763, %v4315
        %v4796 = vmul.f32 %v4764, %v4316
        %v4797 = vmul.f32 %v4765, %v4317
        %v4798 = vmul.f32 %v4766, %v4318
        %v4799 = vmul.f32 %v4767, %v4319
        %v4800 = vmul.f32 %v4768, %v4320
        %v4801 = vmul.f32 %v4769, %v4321
        %v4802 = vmul.f32 %v4770, %v4322
        %v4803 = vmul.f32 %v4771, %v4323
        %v4804 = vmul.f32 %v4772, %v4324
        %v4805 = vmul.f32 %v4773, %v4325
        %v4806 = vmul.f32 %v4774, %v4326
        %v4807 = vmul.f32 %v4775, %v4327
        %v4808 = vmul.f32 %v4776, %v4328
        %v4809 = vmul.f32 %v4777, %v4329
        %v4810 = vmul.f32 %v4778, %v4330
        %v4811 = vmul.f32 %v4779, %v4331
        %v4812 = vmul.f32 %v4780, %v4332
        %v4813 = vmul.f32 %v4781, %v4333
        %v4814 = vmul.f32 %v4782, %v4334
        %v4815 = vmul.f32 %v4783, %v4335
        %v4816 = vmul.f32 %v4784, 1.442695
        %v4817 = vpow.pop %v4816
        %v4818 = vmul.f32 %v4785, 1.442695
        %v4819 = vpow.pop %v4818
        %v4820 = vmul.f32 %v4786, 1.442695
        %v4821 = vpow.pop %v4820
        %v4822 = vmul.f32 %v4787, 1.442695
        %v4823 = vpow.pop %v4822
        %v4824 = vmul.f32 %v4788, 1.442695
        %v4825 = vpow.pop %v4824
        %v4826 = vmul.f32 %v4789, 1.442695
        %v4827 = vpow.pop %v4826
        %v4828 = vmul.f32 %v4790, 1.442695
        %v4829 = vpow.pop %v4828
        %v4830 = vmul.f32 %v4791, 1.442695
        %v4831 = vpow.pop %v4830
        %v4832 = vmul.f32 %v4792, 1.442695
        %v4833 = vpow.pop %v4832
        %v4834 = vmul.f32 %v4793, 1.442695
        %v4835 = vpow.pop %v4834
        %v4836 = vmul.f32 %v4794, 1.442695
        %v4837 = vpow.pop %v4836
        %v4838 = vmul.f32 %v4795, 1.442695
        %v4839 = vpow.pop %v4838
        %v4840 = vmul.f32 %v4796, 1.442695
        %v4841 = vpow.pop %v4840
        %v4842 = vmul.f32 %v4797, 1.442695
        %v4843 = vpow.pop %v4842
        %v4844 = vmul.f32 %v4798, 1.442695
        %v4845 = vpow.pop %v4844
        %v4846 = vmul.f32 %v4799, 1.442695
        %v4847 = vpow.pop %v4846
        %v4848 = vmul.f32 %v4800, 1.442695
        %v4849 = vpow.pop %v4848
        %v4850 = vmul.f32 %v4801, 1.442695
        %v4851 = vpow.pop %v4850
        %v4852 = vmul.f32 %v4802, 1.442695
        %v4853 = vpow.pop %v4852
        %v4854 = vmul.f32 %v4803, 1.442695
        %v4855 = vpow.pop %v4854
        %v4856 = vmul.f32 %v4804, 1.442695
        %v4857 = vpow.pop %v4856
        %v4858 = vmul.f32 %v4805, 1.442695
        %v4859 = vpow.pop %v4858
        %v4860 = vmul.f32 %v4806, 1.442695
        %v4861 = vpow.pop %v4860
        %v4862 = vmul.f32 %v4807, 1.442695
        %v4863 = vpow.pop %v4862
        %v4864 = vmul.f32 %v4808, 1.442695
        %v4865 = vpow.pop %v4864
        %v4866 = vmul.f32 %v4809, 1.442695
        %v4867 = vpow.pop %v4866
        %v4868 = vmul.f32 %v4810, 1.442695
        %v4869 = vpow.pop %v4868
        %v4870 = vmul.f32 %v4811, 1.442695
        %v4871 = vpow.pop %v4870
        %v4872 = vmul.f32 %v4812, 1.442695
        %v4873 = vpow.pop %v4872
        %v4874 = vmul.f32 %v4813, 1.442695
        %v4875 = vpow.pop %v4874
        %v4876 = vmul.f32 %v4814, 1.442695
        %v4877 = vpow.pop %v4876
        %v4878 = vmul.f32 %v4815, 1.442695
        %v4879 = vpow.pop %v4878
        %v4880 = vmul.f32 %v4720, %v4817
        %v4881 = vmul.f32 %v4721, %v4819
        %v4882 = vmul.f32 %v4722, %v4821
        %v4883 = vmul.f32 %v4723, %v4823
        %v4884 = vmul.f32 %v4724, %v4825
        %v4885 = vmul.f32 %v4725, %v4827
        %v4886 = vmul.f32 %v4726, %v4829
        %v4887 = vmul.f32 %v4727, %v4831
        %v4888 = vmul.f32 %v4728, %v4833
        %v4889 = vmul.f32 %v4729, %v4835
        %v4890 = vmul.f32 %v4730, %v4837
        %v4891 = vmul.f32 %v4731, %v4839
        %v4892 = vmul.f32 %v4732, %v4841
        %v4893 = vmul.f32 %v4733, %v4843
        %v4894 = vmul.f32 %v4734, %v4845
        %v4895 = vmul.f32 %v4735, %v4847
        %v4896 = vmul.f32 %v4736, %v4849
        %v4897 = vmul.f32 %v4737, %v4851
        %v4898 = vmul.f32 %v4738, %v4853
        %v4899 = vmul.f32 %v4739, %v4855
        %v4900 = vmul.f32 %v4740, %v4857
        %v4901 = vmul.f32 %v4741, %v4859
        %v4902 = vmul.f32 %v4742, %v4861
        %v4903 = vmul.f32 %v4743, %v4863
        %v4904 = vmul.f32 %v4744, %v4865
        %v4905 = vmul.f32 %v4745, %v4867
        %v4906 = vmul.f32 %v4746, %v4869
        %v4907 = vmul.f32 %v4747, %v4871
        %v4908 = vmul.f32 %v4748, %v4873
        %v4909 = vmul.f32 %v4749, %v4875
        %v4910 = vmul.f32 %v4750, %v4877
        %v4911 = vmul.f32 %v4751, %v4879
        %v4912 = vsub.f32 1.0, %v4880
        %v4913 = vsub.f32 1.0, %v4881
        %v4914 = vsub.f32 1.0, %v4882
        %v4915 = vsub.f32 1.0, %v4883
        %v4916 = vsub.f32 1.0, %v4884
        %v4917 = vsub.f32 1.0, %v4885
        %v4918 = vsub.f32 1.0, %v4886
        %v4919 = vsub.f32 1.0, %v4887
        %v4920 = vsub.f32 1.0, %v4888
        %v4921 = vsub.f32 1.0, %v4889
        %v4922 = vsub.f32 1.0, %v4890
        %v4923 = vsub.f32 1.0, %v4891
        %v4924 = vsub.f32 1.0, %v4892
        %v4925 = vsub.f32 1.0, %v4893
        %v4926 = vsub.f32 1.0, %v4894
        %v4927 = vsub.f32 1.0, %v4895
        %v4928 = vsub.f32 1.0, %v4896
        %v4929 = vsub.f32 1.0, %v4897
        %v4930 = vsub.f32 1.0, %v4898
        %v4931 = vsub.f32 1.0, %v4899
        %v4932 = vsub.f32 1.0, %v4900
        %v4933 = vsub.f32 1.0, %v4901
        %v4934 = vsub.f32 1.0, %v4902
        %v4935 = vsub.f32 1.0, %v4903
        %v4936 = vsub.f32 1.0, %v4904
        %v4937 = vsub.f32 1.0, %v4905
        %v4938 = vsub.f32 1.0, %v4906
        %v4939 = vsub.f32 1.0, %v4907
        %v4940 = vsub.f32 1.0, %v4908
        %v4941 = vsub.f32 1.0, %v4909
        %v4942 = vsub.f32 1.0, %v4910
        %v4943 = vsub.f32 1.0, %v4911
        %v4944 = vmul.f32 %v4272, %v4912
        %v4945 = vmul.f32 %v4273, %v4913
        %v4946 = vmul.f32 %v4274, %v4914
        %v4947 = vmul.f32 %v4275, %v4915
        %v4948 = vmul.f32 %v4276, %v4916
        %v4949 = vmul.f32 %v4277, %v4917
        %v4950 = vmul.f32 %v4278, %v4918
        %v4951 = vmul.f32 %v4279, %v4919
        %v4952 = vmul.f32 %v4280, %v4920
        %v4953 = vmul.f32 %v4281, %v4921
        %v4954 = vmul.f32 %v4282, %v4922
        %v4955 = vmul.f32 %v4283, %v4923
        %v4956 = vmul.f32 %v4284, %v4924
        %v4957 = vmul.f32 %v4285, %v4925
        %v4958 = vmul.f32 %v4286, %v4926
        %v4959 = vmul.f32 %v4287, %v4927
        %v4960 = vmul.f32 %v4288, %v4928
        %v4961 = vmul.f32 %v4289, %v4929
        %v4962 = vmul.f32 %v4290, %v4930
        %v4963 = vmul.f32 %v4291, %v4931
        %v4964 = vmul.f32 %v4292, %v4932
        %v4965 = vmul.f32 %v4293, %v4933
        %v4966 = vmul.f32 %v4294, %v4934
        %v4967 = vmul.f32 %v4295, %v4935
        %v4968 = vmul.f32 %v4296, %v4936
        %v4969 = vmul.f32 %v4297, %v4937
        %v4970 = vmul.f32 %v4298, %v4938
        %v4971 = vmul.f32 %v4299, %v4939
        %v4972 = vmul.f32 %v4300, %v4940
        %v4973 = vmul.f32 %v4301, %v4941
        %v4974 = vmul.f32 %v4302, %v4942
        %v4975 = vmul.f32 %v4303, %v4943
        %v4976 = vadd.f32 %v4944, 1.0
        %v4977 = vadd.f32 %v4945, 1.0
        %v4978 = vadd.f32 %v4946, 1.0
        %v4979 = vadd.f32 %v4947, 1.0
        %v4980 = vadd.f32 %v4948, 1.0
        %v4981 = vadd.f32 %v4949, 1.0
        %v4982 = vadd.f32 %v4950, 1.0
        %v4983 = vadd.f32 %v4951, 1.0
        %v4984 = vadd.f32 %v4952, 1.0
        %v4985 = vadd.f32 %v4953, 1.0
        %v4986 = vadd.f32 %v4954, 1.0
        %v4987 = vadd.f32 %v4955, 1.0
        %v4988 = vadd.f32 %v4956, 1.0
        %v4989 = vadd.f32 %v4957, 1.0
        %v4990 = vadd.f32 %v4958, 1.0
        %v4991 = vadd.f32 %v4959, 1.0
        %v4992 = vadd.f32 %v4960, 1.0
        %v4993 = vadd.f32 %v4961, 1.0
        %v4994 = vadd.f32 %v4962, 1.0
        %v4995 = vadd.f32 %v4963, 1.0
        %v4996 = vadd.f32 %v4964, 1.0
        %v4997 = vadd.f32 %v4965, 1.0
        %v4998 = vadd.f32 %v4966, 1.0
        %v4999 = vadd.f32 %v4967, 1.0
        %v5000 = vadd.f32 %v4968, 1.0
        %v5001 = vadd.f32 %v4969, 1.0
        %v5002 = vadd.f32 %v4970, 1.0
        %v5003 = vadd.f32 %v4971, 1.0
        %v5004 = vadd.f32 %v4972, 1.0
        %v5005 = vadd.f32 %v4973, 1.0
        %v5006 = vadd.f32 %v4974, 1.0
        %v5007 = vadd.f32 %v4975, 1.0
        %v5008 = vmul.f32 %v4176, %v4976
        %v5009 = vmul.f32 %v4177, %v4977
        %v5010 = vmul.f32 %v4178, %v4978
        %v5011 = vmul.f32 %v4179, %v4979
        %v5012 = vmul.f32 %v4180, %v4980
        %v5013 = vmul.f32 %v4181, %v4981
        %v5014 = vmul.f32 %v4182, %v4982
        %v5015 = vmul.f32 %v4183, %v4983
        %v5016 = vmul.f32 %v4184, %v4984
        %v5017 = vmul.f32 %v4185, %v4985
        %v5018 = vmul.f32 %v4186, %v4986
        %v5019 = vmul.f32 %v4187, %v4987
        %v5020 = vmul.f32 %v4188, %v4988
        %v5021 = vmul.f32 %v4189, %v4989
        %v5022 = vmul.f32 %v4190, %v4990
        %v5023 = vmul.f32 %v4191, %v4991
        %v5024 = vmul.f32 %v4192, %v4992
        %v5025 = vmul.f32 %v4193, %v4993
        %v5026 = vmul.f32 %v4194, %v4994
        %v5027 = vmul.f32 %v4195, %v4995
        %v5028 = vmul.f32 %v4196, %v4996
        %v5029 = vmul.f32 %v4197, %v4997
        %v5030 = vmul.f32 %v4198, %v4998
        %v5031 = vmul.f32 %v4199, %v4999
        %v5032 = vmul.f32 %v4200, %v5000
        %v5033 = vmul.f32 %v4201, %v5001
        %v5034 = vmul.f32 %v4202, %v5002
        %v5035 = vmul.f32 %v4203, %v5003
        %v5036 = vmul.f32 %v4204, %v5004
        %v5037 = vmul.f32 %v4205, %v5005
        %v5038 = vmul.f32 %v4206, %v5006
        %v5039 = vmul.f32 %v4207, %v5007
        %v5040 = vld [vmem:[%s11] sm:$0xff]
        %v5041 = vld [vmem:[%s11 + $0x8] sm:$0xff]
        %v5042 = vld [vmem:[%s11 + $0x10] sm:$0xff]
        %v5043 = vld [vmem:[%s11 + $0x18] sm:$0xff]
        %v5044 = vld [vmem:[%s12] sm:$0x1]
        %v5046 = vlaneseq
        %v5047 = vshrl.u32 %v5046, 7
        %v5048 = vsub.s32 0, %v5047
        %v5049 = vrot.slane %v5044, %v5048
        %vm5051 = vcmask 261120
        %v5053 = vsel %vm5051, %v5008, 0
        %v5056 = vsel %vm5051, %v5009, 0
        %v5059 = vsel %vm5051, %v5010, 0
        %v5062 = vsel %vm5051, %v5011, 0
        %v5065 = vsel %vm5051, %v5012, 0
        %v5068 = vsel %vm5051, %v5013, 0
        %v5071 = vsel %vm5051, %v5014, 0
        %v5074 = vsel %vm5051, %v5015, 0
        %v5077 = vsel %vm5051, %v5016, 0
        %v5080 = vsel %vm5051, %v5017, 0
        %v5083 = vsel %vm5051, %v5018, 0
        %v5086 = vsel %vm5051, %v5019, 0
        %v5089 = vsel %vm5051, %v5020, 0
        %v5092 = vsel %vm5051, %v5021, 0
        %v5095 = vsel %vm5051, %v5022, 0
        %v5098 = vsel %vm5051, %v5023, 0
        %v5101 = vsel %vm5051, %v5024, 0
        %v5104 = vsel %vm5051, %v5025, 0
        %v5107 = vsel %vm5051, %v5026, 0
        %v5110 = vsel %vm5051, %v5027, 0
        %v5113 = vsel %vm5051, %v5028, 0
        %v5116 = vsel %vm5051, %v5029, 0
        %v5119 = vsel %vm5051, %v5030, 0
        %v5122 = vsel %vm5051, %v5031, 0
        %v5125 = vsel %vm5051, %v5032, 0
        %v5128 = vsel %vm5051, %v5033, 0
        %v5131 = vsel %vm5051, %v5034, 0
        %v5134 = vsel %vm5051, %v5035, 0
        %v5137 = vsel %vm5051, %v5036, 0
        %v5140 = vsel %vm5051, %v5037, 0
        %v5143 = vsel %vm5051, %v5038, 0
        %v5146 = vsel %vm5051, %v5039, 0
        %5148 = vmatprep.subr.mxu0 0.0
        %5149 = vmatpush1.msra.mxu0 %v5040
        %5150 = vmatprep.subr.mxu0 0.0
        %5151 = vmatpush1.msra.mxu0 %v5041
        %5152 = vmatprep.subr.mxu0 0.0
        %5153 = vmatpush1.msra.mxu0 %v5042
        %5154 = vmatprep.subr.mxu0 0.0
        %5155 = vmatpush1.msra.mxu0 %v5043
        %5156 = vmatprep.subr.mxu0 0.0
        %5157 = vmatpush1.msra.mxu0 0.0
        %5158 = vmatprep.subr.mxu0 0.0
        %5159 = vmatpush1.msra.mxu0 0.0
        %5160 = vmatprep.subr.mxu0 0.0
        %5161 = vmatpush1.msra.mxu0 0.0
        %5162 = vmatprep.subr.mxu0 0.0
        %5163 = vmatpush1.msra.mxu0 0.0
        %5164 = vmatprep.subr.mxu0 0.0
        %5165 = vmatpush1.msra.mxu0 0.0
        %5166 = vmatprep.subr.mxu0 0.0
        %5167 = vmatpush1.msra.mxu0 0.0
        %5168 = vmatprep.subr.mxu0 0.0
        %5169 = vmatpush1.msra.mxu0 0.0
        %5170 = vmatprep.subr.mxu0 0.0
        %5171 = vmatpush1.msra.mxu0 0.0
        %5172 = vmatprep.subr.mxu0 0.0
        %5173 = vmatpush1.msra.mxu0 0.0
        %5174 = vmatprep.subr.mxu0 0.0
        %5175 = vmatpush1.msra.mxu0 0.0
        %5176 = vmatprep.subr.mxu0 0.0
        %5177 = vmatpush1.msra.mxu0 0.0
        %5178 = vmatprep.subr.mxu0 0.0
        %5179 = vmatpush1.msra.mxu0 0.0
        %5180 = vmatprep.subr.mxu0 0.0
        %5181 = vmatpush1.msra.mxu0 0.0
        %5182 = vmatprep.subr.mxu0 0.0
        %5183 = vmatpush1.msra.mxu0 0.0
        %5184 = vmatprep.subr.mxu0 0.0
        %5185 = vmatpush1.msra.mxu0 0.0
        %5186 = vmatprep.subr.mxu0 0.0
        %5187 = vmatpush1.msra.mxu0 0.0
        %5188 = vmatprep.subr.mxu0 0.0
        %5189 = vmatpush1.msra.mxu0 0.0
        %5190 = vmatprep.subr.mxu0 0.0
        %5191 = vmatpush1.msra.mxu0 0.0
        %5192 = vmatprep.subr.mxu0 0.0
        %5193 = vmatpush1.msra.mxu0 0.0
        %5194 = vmatprep.subr.mxu0 0.0
        %5195 = vmatpush1.msra.mxu0 0.0
        %5196 = vmatprep.subr.mxu0 0.0
        %5197 = vmatpush1.msra.mxu0 0.0
        %5198 = vmatprep.subr.mxu0 0.0
        %5199 = vmatpush1.msra.mxu0 0.0
        %5200 = vmatprep.subr.mxu0 0.0
        %5201 = vmatpush1.msra.mxu0 0.0
        %5202 = vmatprep.subr.mxu0 0.0
        %5203 = vmatpush1.msra.mxu0 0.0
        %5204 = vmatprep.subr.mxu0 0.0
        %5205 = vmatpush1.msra.mxu0 0.0
        %5206 = vmatprep.subr.mxu0 0.0
        %5207 = vmatpush1.msra.mxu0 0.0
        %5208 = vmatprep.subr.mxu0 0.0
        %5209 = vmatpush1.msra.mxu0 0.0
        %5210 = vmatprep.subr.mxu0 0.0
        %5211 = vmatpush1.msra.mxu0 0.0
        %5212 = vmatprep.mubr.f32.mxu0 0.0
        %5213 = vmatmul.mubr.f32.gmra.mrb[0].mxu0 %v5053
        %v5214 = vpop.f32.mrb[0].mxu0
        %v5215 = vadd.f32 %v5049, %v5214
        %v5216 = vpop.f32.mrb[0].mxu0
        %5217 = vmatprep.mubr.f32.mxu0 0.0
        %5218 = vmatmul.mubr.f32.gmra.mrb[0].mxu0 %v5056
        %v5219 = vpop.f32.mrb[0].mxu0
        %v5220 = vadd.f32 %v5049, %v5219
        %v5221 = vpop.f32.mrb[0].mxu0
        %5222 = vmatprep.mubr.f32.mxu0 0.0
        %5223 = vmatmul.mubr.f32.gmra.mrb[0].mxu0 %v5059
        %v5224 = vpop.f32.mrb[0].mxu0
        %v5225 = vadd.f32 %v5049, %v5224
        %v5226 = vpop.f32.mrb[0].mxu0
        %5227 = vmatprep.mubr.f32.mxu0 0.0
        %5228 = vmatmul.mubr.f32.gmra.mrb[0].mxu0 %v5062
        %v5229 = vpop.f32.mrb[0].mxu0
        %v5230 = vadd.f32 %v5049, %v5229
        %v5231 = vpop.f32.mrb[0].mxu0
        %5232 = vmatprep.mubr.f32.mxu0 0.0
        %5233 = vmatmul.mubr.f32.gmra.mrb[0].mxu0 %v5065
        %v5234 = vpop.f32.mrb[0].mxu0
        %v5235 = vadd.f32 %v5049, %v5234
        %v5236 = vpop.f32.mrb[0].mxu0
        %5237 = vmatprep.mubr.f32.mxu0 0.0
        %5238 = vmatmul.mubr.f32.gmra.mrb[0].mxu0 %v5068
        %v5239 = vpop.f32.mrb[0].mxu0
        %v5240 = vadd.f32 %v5049, %v5239
        %v5241 = vpop.f32.mrb[0].mxu0
        %5242 = vmatprep.mubr.f32.mxu0 0.0
        %5243 = vmatmul.mubr.f32.gmra.mrb[0].mxu0 %v5071
        %v5244 = vpop.f32.mrb[0].mxu0
        %v5245 = vadd.f32 %v5049, %v5244
        %v5246 = vpop.f32.mrb[0].mxu0
        %5247 = vmatprep.mubr.f32.mxu0 0.0
        %5248 = vmatmul.mubr.f32.gmra.mrb[0].mxu0 %v5074
        %v5249 = vpop.f32.mrb[0].mxu0
        %v5250 = vadd.f32 %v5049, %v5249
        %v5251 = vpop.f32.mrb[0].mxu0
        %5252 = vmatprep.mubr.f32.mxu0 0.0
        %5253 = vmatmul.mubr.f32.gmra.mrb[0].mxu0 %v5077
        %v5254 = vpop.f32.mrb[0].mxu0
        %v5255 = vadd.f32 %v5049, %v5254
        %v5256 = vpop.f32.mrb[0].mxu0
        %5257 = vmatprep.mubr.f32.mxu0 0.0
        %5258 = vmatmul.mubr.f32.gmra.mrb[0].mxu0 %v5080
        %v5259 = vpop.f32.mrb[0].mxu0
        %v5260 = vadd.f32 %v5049, %v5259
        %v5261 = vpop.f32.mrb[0].mxu0
        %5262 = vmatprep.mubr.f32.mxu0 0.0
        %5263 = vmatmul.mubr.f32.gmra.mrb[0].mxu0 %v5083
        %v5264 = vpop.f32.mrb[0].mxu0
        %v5265 = vadd.f32 %v5049, %v5264
        %v5266 = vpop.f32.mrb[0].mxu0
        %5267 = vmatprep.mubr.f32.mxu0 0.0
        %5268 = vmatmul.mubr.f32.gmra.mrb[0].mxu0 %v5086
        %v5269 = vpop.f32.mrb[0].mxu0
        %v5270 = vadd.f32 %v5049, %v5269
        %v5271 = vpop.f32.mrb[0].mxu0
        %5272 = vmatprep.mubr.f32.mxu0 0.0
        %5273 = vmatmul.mubr.f32.gmra.mrb[0].mxu0 %v5089
        %v5274 = vpop.f32.mrb[0].mxu0
        %v5275 = vadd.f32 %v5049, %v5274
        %v5276 = vpop.f32.mrb[0].mxu0
        %5277 = vmatprep.mubr.f32.mxu0 0.0
        %5278 = vmatmul.mubr.f32.gmra.mrb[0].mxu0 %v5092
        %v5279 = vpop.f32.mrb[0].mxu0
        %v5280 = vadd.f32 %v5049, %v5279
        %v5281 = vpop.f32.mrb[0].mxu0
        %5282 = vmatprep.mubr.f32.mxu0 0.0
        %5283 = vmatmul.mubr.f32.gmra.mrb[0].mxu0 %v5095
        %v5284 = vpop.f32.mrb[0].mxu0
        %v5285 = vadd.f32 %v5049, %v5284
        %v5286 = vpop.f32.mrb[0].mxu0
        %5287 = vmatprep.mubr.f32.mxu0 0.0
        %5288 = vmatmul.mubr.f32.gmra.mrb[0].mxu0 %v5098
        %v5289 = vpop.f32.mrb[0].mxu0
        %v5290 = vadd.f32 %v5049, %v5289
        %v5291 = vpop.f32.mrb[0].mxu0
        %5292 = vmatprep.mubr.f32.mxu0 0.0
        %5293 = vmatmul.mubr.f32.gmra.mrb[0].mxu0 %v5101
        %v5294 = vpop.f32.mrb[0].mxu0
        %v5295 = vadd.f32 %v5049, %v5294
        %v5296 = vpop.f32.mrb[0].mxu0
        %5297 = vmatprep.mubr.f32.mxu0 0.0
        %5298 = vmatmul.mubr.f32.gmra.mrb[0].mxu0 %v5104
        %v5299 = vpop.f32.mrb[0].mxu0
        %v5300 = vadd.f32 %v5049, %v5299
        %v5301 = vpop.f32.mrb[0].mxu0
        %5302 = vmatprep.mubr.f32.mxu0 0.0
        %5303 = vmatmul.mubr.f32.gmra.mrb[0].mxu0 %v5107
        %v5304 = vpop.f32.mrb[0].mxu0
        %v5305 = vadd.f32 %v5049, %v5304
        %v5306 = vpop.f32.mrb[0].mxu0
        %5307 = vmatprep.mubr.f32.mxu0 0.0
        %5308 = vmatmul.mubr.f32.gmra.mrb[0].mxu0 %v5110
        %v5309 = vpop.f32.mrb[0].mxu0
        %v5310 = vadd.f32 %v5049, %v5309
        %v5311 = vpop.f32.mrb[0].mxu0
        %5312 = vmatprep.mubr.f32.mxu0 0.0
        %5313 = vmatmul.mubr.f32.gmra.mrb[0].mxu0 %v5113
        %v5314 = vpop.f32.mrb[0].mxu0
        %v5315 = vadd.f32 %v5049, %v5314
        %v5316 = vpop.f32.mrb[0].mxu0
        %5317 = vmatprep.mubr.f32.mxu0 0.0
        %5318 = vmatmul.mubr.f32.gmra.mrb[0].mxu0 %v5116
        %v5319 = vpop.f32.mrb[0].mxu0
        %v5320 = vadd.f32 %v5049, %v5319
        %v5321 = vpop.f32.mrb[0].mxu0
        %5322 = vmatprep.mubr.f32.mxu0 0.0
        %5323 = vmatmul.mubr.f32.gmra.mrb[0].mxu0 %v5119
        %v5324 = vpop.f32.mrb[0].mxu0
        %v5325 = vadd.f32 %v5049, %v5324
        %v5326 = vpop.f32.mrb[0].mxu0
        %5327 = vmatprep.mubr.f32.mxu0 0.0
        %5328 = vmatmul.mubr.f32.gmra.mrb[0].mxu0 %v5122
        %v5329 = vpop.f32.mrb[0].mxu0
        %v5330 = vadd.f32 %v5049, %v5329
        %v5331 = vpop.f32.mrb[0].mxu0
        %5332 = vmatprep.mubr.f32.mxu0 0.0
        %5333 = vmatmul.mubr.f32.gmra.mrb[0].mxu0 %v5125
        %v5334 = vpop.f32.mrb[0].mxu0
        %v5335 = vadd.f32 %v5049, %v5334
        %v5336 = vpop.f32.mrb[0].mxu0
        %5337 = vmatprep.mubr.f32.mxu0 0.0
        %5338 = vmatmul.mubr.f32.gmra.mrb[0].mxu0 %v5128
        %v5339 = vpop.f32.mrb[0].mxu0
        %v5340 = vadd.f32 %v5049, %v5339
        %v5341 = vpop.f32.mrb[0].mxu0
        %5342 = vmatprep.mubr.f32.mxu0 0.0
        %5343 = vmatmul.mubr.f32.gmra.mrb[0].mxu0 %v5131
        %v5344 = vpop.f32.mrb[0].mxu0
        %v5345 = vadd.f32 %v5049, %v5344
        %v5346 = vpop.f32.mrb[0].mxu0
        %5347 = vmatprep.mubr.f32.mxu0 0.0
        %5348 = vmatmul.mubr.f32.gmra.mrb[0].mxu0 %v5134
        %v5349 = vpop.f32.mrb[0].mxu0
        %v5350 = vadd.f32 %v5049, %v5349
        %v5351 = vpop.f32.mrb[0].mxu0
        %5352 = vmatprep.mubr.f32.mxu0 0.0
        %5353 = vmatmul.mubr.f32.gmra.mrb[0].mxu0 %v5137
        %v5354 = vpop.f32.mrb[0].mxu0
        %v5355 = vadd.f32 %v5049, %v5354
        %v5356 = vpop.f32.mrb[0].mxu0
        %5357 = vmatprep.mubr.f32.mxu0 0.0
        %5358 = vmatmul.mubr.f32.gmra.mrb[0].mxu0 %v5140
        %v5359 = vpop.f32.mrb[0].mxu0
        %v5360 = vadd.f32 %v5049, %v5359
        %v5361 = vpop.f32.mrb[0].mxu0
        %5362 = vmatprep.mubr.f32.mxu0 0.0
        %5363 = vmatmul.mubr.f32.gmra.mrb[0].mxu0 %v5143
        %v5364 = vpop.f32.mrb[0].mxu0
        %v5365 = vadd.f32 %v5049, %v5364
        %v5366 = vpop.f32.mrb[0].mxu0
        %5367 = vmatprep.mubr.f32.mxu0 0.0
        %5368 = vmatmul.mubr.f32.gmra.mrb[0].mxu0 %v5146
        %v5369 = vpop.f32.mrb[0].mxu0
        %v5370 = vadd.f32 %v5049, %v5369
        %v5371 = vpop.f32.mrb[0].mxu0
        %5372 = vdwg.mxu0
        %5373 = vst.msk [vmem:[%s436] sm:$0xff] %vm5051, %v5215
        %5374 = vst.msk [vmem:[%s436 + $0x8] sm:$0xff] %vm5051, %v5220
        %5375 = vst.msk [vmem:[%s436 + $0x10] sm:$0xff] %vm5051, %v5225
        %5376 = vst.msk [vmem:[%s436 + $0x18] sm:$0xff] %vm5051, %v5230
        %5377 = vst.msk [vmem:[%s436 + $0x20] sm:$0xff] %vm5051, %v5235
        %5378 = vst.msk [vmem:[%s436 + $0x28] sm:$0xff] %vm5051, %v5240
        %5379 = vst.msk [vmem:[%s436 + $0x30] sm:$0xff] %vm5051, %v5245
        %5380 = vst.msk [vmem:[%s436 + $0x38] sm:$0xff] %vm5051, %v5250
        %5381 = vst.msk [vmem:[%s436 + $0x40] sm:$0xff] %vm5051, %v5255
        %5382 = vst.msk [vmem:[%s436 + $0x48] sm:$0xff] %vm5051, %v5260
        %5383 = vst.msk [vmem:[%s436 + $0x50] sm:$0xff] %vm5051, %v5265
        %5384 = vst.msk [vmem:[%s436 + $0x58] sm:$0xff] %vm5051, %v5270
        %5385 = vst.msk [vmem:[%s436 + $0x60] sm:$0xff] %vm5051, %v5275
        %5386 = vst.msk [vmem:[%s436 + $0x68] sm:$0xff] %vm5051, %v5280
        %5387 = vst.msk [vmem:[%s436 + $0x70] sm:$0xff] %vm5051, %v5285
        %5388 = vst.msk [vmem:[%s436 + $0x78] sm:$0xff] %vm5051, %v5290
        %5389 = vst.msk [vmem:[%s436 + $0x80] sm:$0xff] %vm5051, %v5295
        %5390 = vst.msk [vmem:[%s436 + $0x88] sm:$0xff] %vm5051, %v5300
        %5391 = vst.msk [vmem:[%s436 + $0x90] sm:$0xff] %vm5051, %v5305
        %5392 = vst.msk [vmem:[%s436 + $0x98] sm:$0xff] %vm5051, %v5310
        %5393 = vst.msk [vmem:[%s436 + $0xa0] sm:$0xff] %vm5051, %v5315
        %5394 = vst.msk [vmem:[%s436 + $0xa8] sm:$0xff] %vm5051, %v5320
        %5395 = vst.msk [vmem:[%s436 + $0xb0] sm:$0xff] %vm5051, %v5325
        %5396 = vst.msk [vmem:[%s436 + $0xb8] sm:$0xff] %vm5051, %v5330
        %5397 = vst.msk [vmem:[%s436 + $0xc0] sm:$0xff] %vm5051, %v5335
        %5398 = vst.msk [vmem:[%s436 + $0xc8] sm:$0xff] %vm5051, %v5340
        %5399 = vst.msk [vmem:[%s436 + $0xd0] sm:$0xff] %vm5051, %v5345
        %5400 = vst.msk [vmem:[%s436 + $0xd8] sm:$0xff] %vm5051, %v5350
        %5401 = vst.msk [vmem:[%s436 + $0xe0] sm:$0xff] %vm5051, %v5355
        %5402 = vst.msk [vmem:[%s436 + $0xe8] sm:$0xff] %vm5051, %v5360
        %5403 = vst.msk [vmem:[%s436 + $0xf0] sm:$0xff] %vm5051, %v5365
        %5404 = vst.msk [vmem:[%s436 + $0xf8] sm:$0xff] %vm5051, %v5370
        %s5405 = sand.u32 %s313, 1
        %s5406 = scalar_lea.sflag [#allocation3], %s5405
        %s5407 = sand.u32 %s313, 1
        %s5408 = smul.addr %s5407, 256
        %s5409 = scalar_lea.vmem [#allocation2], %s5408
        // Predicated region
        $region73: #{global_attention_repvit_block.1} parent=71 // pred_check
          %p5410 = pneg %p323
        $region74: #{global_attention_repvit_block.1} parent=71 // pred_check_branch
          %5412 = sbr.rel (%p5410) target = $region76
        $region75: #{global_attention_repvit_block.1} parent=71 // pred_region
          %s5413 = smul.u32 4, %s27
          %s5415 = ssub.s32 4096, 4096
          %5416 = vsyncadd %s5406, %s5415
          %s5417 = smul.addr %s5413, 8
          %s5418 = smul.addr %s5417, 128
          %s5419 = scalar_lea.hbm %s13, %s5418
          %s5420 = sshll.u32 %s5409, 4
          %s5421 = int_to_ptr.vmem [resolvable:$true] %s5420
          %5426 = dma.vmem_to_hbm [thread:$0]  %s5421, 4096, %s5419, %s5406, 128, 128, 8
        $region76: #{global_attention_repvit_block.1} parent=71 // pred_fallthru
          _
      $region72: #{global_attention_repvit_block.1} parent=5 // pred_fallthru
        _
      %p5427 = scmp.le.s32.totalorder 2, %s22
      // Predicated region
      $region77: #{global_attention_repvit_block.1} parent=5 // pred_check
        %p5428 = pneg %p5427
      $region78: #{global_attention_repvit_block.1} parent=5 // pred_check_branch
        %5430 = sbr.rel (%p5428) target = $region80
      $region79: #{global_attention_repvit_block.1} parent=5 // pred_region
        %s5431 = ssub.s32 %s22, 2
        // Predicated region
        $region81: #{global_attention_repvit_block.1} parent=79 // pred_check
          %p5432 = pneg %p329
        $region82: #{global_attention_repvit_block.1} parent=79 // pred_check_branch
          %5434 = sbr.rel (%p5432) target = $region84
        $region83: #{global_attention_repvit_block.1} parent=79 // pred_region
          %s5435 = sand.u32 %s314, 1
          %s5436 = scalar_lea.sflag [#allocation3], %s5435
          %s5437 = sand.u32 %s314, 1
          %s5438 = smul.addr %s5437, 256
          %s5439 = scalar_lea.vmem [#allocation2], %s5438
          %5440 = dma.done %s5436, 4096
        $region84: #{global_attention_repvit_block.1} parent=79 // pred_fallthru
          _
      $region80: #{global_attention_repvit_block.1} parent=5 // pred_fallthru
        _
    $region6: #{global_attention_repvit_block.1} parent=1 // loop_footer
      %s26 = sadd.s32 1, %s22
    $region7: #{global_attention_repvit_block.1} parent=1 // loop_footer_branch
      %21 = sbr.rel target = $region3
    $region8: #{global_attention_repvit_block.1} parent=1 // loop_exit
      _
    %5441 = vsyncpa [#allocation3], 1
    %s5442 = scalar_lea.sflag [#allocation3], 1
    %5443 = vsyncpa %s5442, 1

</llo_original>
